<compile_context>
chip_gen: v7x
topology: tpu7x:2x2x1
jax: 0.10.0
libtpu: 0.0.40
codegen_flags: <defaults>
</compile_context>

<pallas_src>
import functools

import jax
import jax.numpy as jnp
from jax import lax
from jax.experimental import pallas as pl
from jax.experimental.pallas import tpu as pltpu


def _convgru_kernel(x_ref, wx_ref, whzr_ref, whh_ref, b_ref, o_ref, h_ref, *,
                    C, t_block):
    # x_ref:    (t_block, C, R)  frames of this row tile (rows on lanes)
    # wx_ref:   (3C, C)          fused x-side weights  [Wzx ; Wrx ; Whx]
    # whzr_ref: (2C, C)          fused h-side weights  [Wzh ; Wrh]
    # whh_ref:  (C, C)           h-side weight of the candidate (applied to r*h)
    # b_ref:    (3C, 1)          fused biases [bz ; br ; bh]
    # o_ref:    (t_block, C, R)  output frames
    # h_ref:    (C, R) f32       hidden-state carry (VMEM scratch, persists over t)
    tb = pl.program_id(1)

    @pl.when(tb == 0)
    def _():
        h_ref[...] = jnp.zeros_like(h_ref)

    R = h_ref.shape[1]
    # Hoist weight loads and the bias broadcast out of the per-frame loop.
    wx = wx_ref[...]
    whzr = whzr_ref[...]
    whh = whh_ref[...]
    bias = jnp.broadcast_to(b_ref[...], (3 * C, R))

    def step(t, h):
        x = x_ref[t].astype(jnp.float32)                                # (C, R)
        gx = jnp.dot(wx, x, preferred_element_type=jnp.float32) + bias  # (3C, R)
        gh = jnp.dot(whzr, h, preferred_element_type=jnp.float32)       # (2C, R)
        z = jax.nn.sigmoid(gx[:C] + gh[:C])                  # update gate
        r = jax.nn.sigmoid(gx[C:2 * C] + gh[C:])             # reset gate
        hh = jnp.dot(whh, r * h, preferred_element_type=jnp.float32)
        h_new = (1.0 - z) * h + z * jnp.tanh(gx[2 * C:] + hh)
        o_ref[t] = h_new.astype(o_ref.dtype)
        return h_new

    h_final = lax.fori_loop(0, t_block, step, h_ref[...], unroll=True)
    h_ref[...] = h_final


def _pick_row_tile(total, target):
    """Largest multiple of 128 dividing `total` and <= target, else the full dim."""
    best = None
    cand = 128
    while cand <= min(total, target):
        if total % cand == 0:
            best = cand
        cand += 128
    return best if best is not None else total


def _pick_time_block(total, target):
    t = max(1, min(target, total))
    for d in range(t, 0, -1):
        if total % d == 0:
            return d
    return 1


def conv_gru(video, wz, bz, wr, br, wh, bh, *, row_tile=512, t_block=4):
    """ConvGRU forward.

    video: (B, T, C, H, W) float32.
    wz/wr/wh: (C, 2C) torch Conv2d(2C, C, k=1) weights (1x1 taps squeezed).
    bz/br/bh: (C,) biases.
    Returns (B, T, C, H, W): stacked hidden states, matching the torch loop.
    """
    B, T, C, H, W = video.shape
    BN = B * H * W
    row_tile = _pick_row_tile(BN, row_tile)
    t_block = _pick_time_block(T, t_block)

    # (B,T,C,H,W) -> (T, C, B*H*W): only leading dims permute, H*W stays
    # contiguous innermost, rows land on the lane axis inside the kernel.
    x_seq = jnp.transpose(video, (1, 2, 0, 3, 4)).reshape(T, C, BN)

    # Fuse the three 1x1 convs; split each (C, 2C) weight into x / h halves.
    wx = jnp.concatenate([wz[:, :C], wr[:, :C], wh[:, :C]], axis=0)   # (3C, C)
    whzr = jnp.concatenate([wz[:, C:], wr[:, C:]], axis=0)            # (2C, C)
    whh = wh[:, C:]                                                   # (C, C)
    b = jnp.concatenate([bz, br, bh]).reshape(3 * C, 1)               # (3C, 1)

    kernel = functools.partial(_convgru_kernel, C=C, t_block=t_block)

    out_seq = pl.pallas_call(
        kernel,
        out_shape=jax.ShapeDtypeStruct((T, C, BN), video.dtype),
        grid_spec=pltpu.PrefetchScalarGridSpec(
            num_scalar_prefetch=0,
            grid=(BN // row_tile, T // t_block),   # rows parallel, time sequential (innermost)
            in_specs=[
                pl.BlockSpec((t_block, C, row_tile), lambda i, t: (t, 0, i)),
                pl.BlockSpec((3 * C, C), lambda i, t: (0, 0)),
                pl.BlockSpec((2 * C, C), lambda i, t: (0, 0)),
                pl.BlockSpec((C, C), lambda i, t: (0, 0)),
                pl.BlockSpec((3 * C, 1), lambda i, t: (0, 0)),
            ],
            out_specs=pl.BlockSpec((t_block, C, row_tile), lambda i, t: (t, 0, i)),
            scratch_shapes=[pltpu.VMEM((C, row_tile), jnp.float32)],
        ),
        compiler_params=pltpu.CompilerParams(
            dimension_semantics=("parallel", "arbitrary")),
    )(x_seq, wx, whzr, whh, b)

    # (T, C, BN) -> (B, T, C, H, W): again only leading dims permute.
    out = out_seq.reshape(T, C, B, H, W)
    return jnp.transpose(out, (2, 0, 1, 3, 4))


def _reference(video, wz, bz, wr, br, wh, bh):
    """Pure-JAX transcription of the PyTorch ConvGRU.forward, for verification."""
    B, T, C, H, W = video.shape

    def conv1x1(x, w, bias):  # x: (B, 2C, H, W), w: (C, 2C)
        return jnp.einsum('bchw,oc->bohw', x, w) + bias[None, :, None, None]

    h = jnp.zeros((B, C, H, W), video.dtype)
    outs = []
    for i in range(T):
        x = video[:, i]
        xh = jnp.concatenate([x, h], axis=1)
        z = jax.nn.sigmoid(conv1x1(xh, wz, bz))
        r = jax.nn.sigmoid(conv1x1(xh, wr, br))
        xh2 = jnp.concatenate([x, r * h], axis=1)
        h = (1 - z) * h + z * jnp.tanh(conv1x1(xh2, wh, bh))
        outs.append(h)
    return jnp.stack(outs, axis=1)


if __name__ == "__main__":
    B, T, C, H, W = 2, 8, 32, 16, 32   # B*H*W = 1024 -> two 512-row tiles

    key = jax.random.PRNGKey(0)
    kx, kz, kr, kh, kbz, kbr, kbh = jax.random.split(key, 7)
    video = jax.random.normal(kx, (B, T, C, H, W), jnp.float32)
    wz = 0.3 * jax.random.normal(kz, (C, 2 * C), jnp.float32)   # Conv2d(2C,C,1) weight
    wr = 0.3 * jax.random.normal(kr, (C, 2 * C), jnp.float32)
    wh = 0.3 * jax.random.normal(kh, (C, 2 * C), jnp.float32)
    bz = 0.1 * jax.random.normal(kbz, (C,), jnp.float32)
    br = 0.1 * jax.random.normal(kbr, (C,), jnp.float32)
    bh = 0.1 * jax.random.normal(kbh, (C,), jnp.float32)

    out = conv_gru(video, wz, bz, wr, br, wh, bh, row_tile=512, t_block=4)
    out = jax.block_until_ready(out)

    ref = _reference(video, wz, bz, wr, br, wh, bh)
    assert out.shape == (B, T, C, H, W)
    err = jnp.abs(out - ref).max()
    assert jnp.allclose(out, ref, atol=1e-3, rtol=1e-3), f"max err {err}"
    print("KERNEL_OK")
</pallas_src>

<mosaic_0001>
module attributes {stable_mosaic.version = 11 : i64} {
  func.func @_convgru_kernel(%arg0: i32, %arg1: i32, %arg2: memref<4x32x512xf32, #tpu.memory_space<vmem>>, %arg3: memref<96x32xf32, #tpu.memory_space<vmem>>, %arg4: memref<64x32xf32, #tpu.memory_space<vmem>>, %arg5: memref<32x32xf32, #tpu.memory_space<vmem>>, %arg6: memref<96x1xf32, #tpu.memory_space<vmem>>, %arg7: memref<4x32x512xf32, #tpu.memory_space<vmem>>, %arg8: memref<32x512xf32, #tpu.memory_space<vmem>>) attributes {dimension_semantics = [#tpu.dimension_semantics<parallel>, #tpu.dimension_semantics<arbitrary>], iteration_bounds = array<i64: 2, 2>, scalar_prefetch = 0 : i64, scratch_operands = 1 : i64, tpu.core_type = #tpu.core_type<tc>, window_params = [{transform_indices = @transform_0, window_bounds = array<i64: 4, 32, 512>}, {pipeline_mode = #tpu.pipeline_mode<synchronous>, transform_indices = @transform_1, window_bounds = array<i64: 96, 32>}, {pipeline_mode = #tpu.pipeline_mode<synchronous>, transform_indices = @transform_2, window_bounds = array<i64: 64, 32>}, {pipeline_mode = #tpu.pipeline_mode<synchronous>, transform_indices = @transform_3, window_bounds = array<i64: 32, 32>}, {pipeline_mode = #tpu.pipeline_mode<synchronous>, transform_indices = @transform_4, window_bounds = array<i64: 96, 1>}, {transform_indices = @transform_5, window_bounds = array<i64: 4, 32, 512>}]} {
    %c0_i32 = arith.constant 0 : i32
    %0 = arith.cmpi eq, %arg1, %c0_i32 : i32
    %1 = arith.extui %0 : i1 to i32
    %c0_i32_0 = arith.constant 0 : i32
    %2 = arith.cmpi ne, %1, %c0_i32_0 : i32
    scf.if %2 {
      %cst_52 = arith.constant 0.000000e+00 : f32
      %155 = vector.broadcast %cst_52 : f32 to vector<32x512xf32>
      %c0_53 = arith.constant 0 : index
      %c0_54 = arith.constant 0 : index
      %156 = vector.load %arg8[%c0_53, %c0_54] : memref<32x512xf32, #tpu.memory_space<vmem>>, vector<32x512xf32>
      tpu.vector_store %arg8[%c0_53, %c0_54], %155 {strides = array<i32>} : memref<32x512xf32, #tpu.memory_space<vmem>>, vector<32x512xf32>,
    } else {
    }
    %c0 = arith.constant 0 : index
    %c0_1 = arith.constant 0 : index
    %3 = vector.load %arg3[%c0, %c0_1] : memref<96x32xf32, #tpu.memory_space<vmem>>, vector<96x32xf32>
    %c0_2 = arith.constant 0 : index
    %c0_3 = arith.constant 0 : index
    %4 = vector.load %arg4[%c0_2, %c0_3] : memref<64x32xf32, #tpu.memory_space<vmem>>, vector<64x32xf32>
    %c0_4 = arith.constant 0 : index
    %c0_5 = arith.constant 0 : index
    %5 = vector.load %arg5[%c0_4, %c0_5] : memref<32x32xf32, #tpu.memory_space<vmem>>, vector<32x32xf32>
    %c0_6 = arith.constant 0 : index
    %c0_7 = arith.constant 0 : index
    %6 = vector.load %arg6[%c0_6, %c0_7] : memref<96x1xf32, #tpu.memory_space<vmem>>, vector<96x1xf32>
    %7 = vector.shape_cast %6 : vector<96x1xf32> to vector<96x1xf32>
    %8 = vector.broadcast %7 : vector<96x1xf32> to vector<96x512xf32>
    %c0_8 = arith.constant 0 : index
    %c0_9 = arith.constant 0 : index
    %9 = vector.load %arg8[%c0_8, %c0_9] : memref<32x512xf32, #tpu.memory_space<vmem>>, vector<32x512xf32>
    %c0_i32_10 = arith.constant 0 : i32
    %10 = arith.index_cast %c0_i32_10 : i32 to index
    %c0_11 = arith.constant 0 : index
    %c0_12 = arith.constant 0 : index
    %11 = vector.load %arg2[%10, %c0_11, %c0_12] : memref<4x32x512xf32, #tpu.memory_space<vmem>>, vector<1x32x512xf32>
    %12 = vector.shape_cast %11 : vector<1x32x512xf32> to vector<32x512xf32>
    %cst = arith.constant dense<0.000000e+00> : vector<96x512xf32>
    %13 = tpu.matmul %3, %12, %cst {dimension_numbers = #tpu.dot_dimension_numbers<[1], [0], [0], [1], [0, 0, 1, 1], [], []>} : vector<96x32xf32>, vector<32x512xf32>, vector<96x512xf32> -> vector<96x512xf32>
    %14 = arith.addf %13, %8 : vector<96x512xf32>
    %cst_13 = arith.constant dense<0.000000e+00> : vector<64x512xf32>
    %15 = tpu.matmul %4, %9, %cst_13 {dimension_numbers = #tpu.dot_dimension_numbers<[1], [0], [0], [1], [0, 0, 1, 1], [], []>} : vector<64x32xf32>, vector<32x512xf32>, vector<64x512xf32> -> vector<64x512xf32>
    %16 = vector.extract_strided_slice %14 {offsets = [0, 0], sizes = [32, 512], strides = [1, 1]} : vector<96x512xf32> to vector<32x512xf32>
    %17 = vector.extract_strided_slice %15 {offsets = [0, 0], sizes = [32, 512], strides = [1, 1]} : vector<64x512xf32> to vector<32x512xf32>
    %18 = arith.addf %16, %17 : vector<32x512xf32>
    %19 = arith.negf %18 : vector<32x512xf32>
    %20 = math.exp %19 : vector<32x512xf32>
    %cst_14 = arith.constant 1.000000e+00 : f32
    %21 = vector.broadcast %cst_14 : f32 to vector<32x512xf32>
    %22 = arith.addf %21, %20 : vector<32x512xf32>
    %23 = arith.divf %21, %22 : vector<32x512xf32>
    %24 = vector.extract_strided_slice %14 {offsets = [32, 0], sizes = [32, 512], strides = [1, 1]} : vector<96x512xf32> to vector<32x512xf32>
    %25 = vector.extract_strided_slice %15 {offsets = [32, 0], sizes = [32, 512], strides = [1, 1]} : vector<64x512xf32> to vector<32x512xf32>
    %26 = arith.addf %24, %25 : vector<32x512xf32>
    %27 = arith.negf %26 : vector<32x512xf32>
    %28 = math.exp %27 : vector<32x512xf32>
    %cst_15 = arith.constant 1.000000e+00 : f32
    %29 = vector.broadcast %cst_15 : f32 to vector<32x512xf32>
    %30 = arith.addf %29, %28 : vector<32x512xf32>
    %31 = arith.divf %29, %30 : vector<32x512xf32>
    %32 = arith.mulf %31, %9 : vector<32x512xf32>
    %cst_16 = arith.constant dense<0.000000e+00> : vector<32x512xf32>
    %33 = tpu.matmul %5, %32, %cst_16 {dimension_numbers = #tpu.dot_dimension_numbers<[1], [0], [0], [1], [0, 0, 1, 1], [], []>} : vector<32x32xf32>, vector<32x512xf32>, vector<32x512xf32> -> vector<32x512xf32>
    %cst_17 = arith.constant 1.000000e+00 : f32
    %34 = vector.broadcast %cst_17 : f32 to vector<32x512xf32>
    %35 = arith.subf %34, %23 : vector<32x512xf32>
    %36 = arith.mulf %35, %9 : vector<32x512xf32>
    %37 = vector.extract_strided_slice %14 {offsets = [64, 0], sizes = [32, 512], strides = [1, 1]} : vector<96x512xf32> to vector<32x512xf32>
    %38 = arith.addf %37, %33 : vector<32x512xf32>
    %39 = math.tanh %38 : vector<32x512xf32>
    %40 = arith.mulf %23, %39 : vector<32x512xf32>
    %41 = arith.addf %36, %40 : vector<32x512xf32>
    %42 = arith.index_cast %c0_i32_10 : i32 to index
    %c0_18 = arith.constant 0 : index
    %c0_19 = arith.constant 0 : index
    %43 = vector.load %arg7[%42, %c0_18, %c0_19] : memref<4x32x512xf32, #tpu.memory_space<vmem>>, vector<1x32x512xf32>
    %44 = vector.shape_cast %43 : vector<1x32x512xf32> to vector<32x512xf32>
    %45 = vector.shape_cast %41 : vector<32x512xf32> to vector<1x32x512xf32>
    tpu.vector_store %arg7[%42, %c0_18, %c0_19], %45 {strides = array<i32>} : memref<4x32x512xf32, #tpu.memory_space<vmem>>, vector<1x32x512xf32>,
    %c1_i32 = arith.constant 1 : i32
    %46 = arith.index_cast %c1_i32 : i32 to index
    %c0_20 = arith.constant 0 : index
    %c0_21 = arith.constant 0 : index
    %47 = vector.load %arg2[%46, %c0_20, %c0_21] : memref<4x32x512xf32, #tpu.memory_space<vmem>>, vector<1x32x512xf32>
    %48 = vector.shape_cast %47 : vector<1x32x512xf32> to vector<32x512xf32>
    %cst_22 = arith.constant dense<0.000000e+00> : vector<96x512xf32>
    %49 = tpu.matmul %3, %48, %cst_22 {dimension_numbers = #tpu.dot_dimension_numbers<[1], [0], [0], [1], [0, 0, 1, 1], [], []>} : vector<96x32xf32>, vector<32x512xf32>, vector<96x512xf32> -> vector<96x512xf32>
    %50 = arith.addf %49, %8 : vector<96x512xf32>
    %cst_23 = arith.constant dense<0.000000e+00> : vector<64x512xf32>
    %51 = tpu.matmul %4, %41, %cst_23 {dimension_numbers = #tpu.dot_dimension_numbers<[1], [0], [0], [1], [0, 0, 1, 1], [], []>} : vector<64x32xf32>, vector<32x512xf32>, vector<64x512xf32> -> vector<64x512xf32>
    %52 = vector.extract_strided_slice %50 {offsets = [0, 0], sizes = [32, 512], strides = [1, 1]} : vector<96x512xf32> to vector<32x512xf32>
    %53 = vector.extract_strided_slice %51 {offsets = [0, 0], sizes = [32, 512], strides = [1, 1]} : vector<64x512xf32> to vector<32x512xf32>
    %54 = arith.addf %52, %53 : vector<32x512xf32>
    %55 = arith.negf %54 : vector<32x512xf32>
    %56 = math.exp %55 : vector<32x512xf32>
    %cst_24 = arith.constant 1.000000e+00 : f32
    %57 = vector.broadcast %cst_24 : f32 to vector<32x512xf32>
    %58 = arith.addf %57, %56 : vector<32x512xf32>
    %59 = arith.divf %57, %58 : vector<32x512xf32>
    %60 = vector.extract_strided_slice %50 {offsets = [32, 0], sizes = [32, 512], strides = [1, 1]} : vector<96x512xf32> to vector<32x512xf32>
    %61 = vector.extract_strided_slice %51 {offsets = [32, 0], sizes = [32, 512], strides = [1, 1]} : vector<64x512xf32> to vector<32x512xf32>
    %62 = arith.addf %60, %61 : vector<32x512xf32>
    %63 = arith.negf %62 : vector<32x512xf32>
    %64 = math.exp %63 : vector<32x512xf32>
    %cst_25 = arith.constant 1.000000e+00 : f32
    %65 = vector.broadcast %cst_25 : f32 to vector<32x512xf32>
    %66 = arith.addf %65, %64 : vector<32x512xf32>
    %67 = arith.divf %65, %66 : vector<32x512xf32>
    %68 = arith.mulf %67, %41 : vector<32x512xf32>
    %cst_26 = arith.constant dense<0.000000e+00> : vector<32x512xf32>
    %69 = tpu.matmul %5, %68, %cst_26 {dimension_numbers = #tpu.dot_dimension_numbers<[1], [0], [0], [1], [0, 0, 1, 1], [], []>} : vector<32x32xf32>, vector<32x512xf32>, vector<32x512xf32> -> vector<32x512xf32>
    %cst_27 = arith.constant 1.000000e+00 : f32
    %70 = vector.broadcast %cst_27 : f32 to vector<32x512xf32>
    %71 = arith.subf %70, %59 : vector<32x512xf32>
    %72 = arith.mulf %71, %41 : vector<32x512xf32>
    %73 = vector.extract_strided_slice %50 {offsets = [64, 0], sizes = [32, 512], strides = [1, 1]} : vector<96x512xf32> to vector<32x512xf32>
    %74 = arith.addf %73, %69 : vector<32x512xf32>
    %75 = math.tanh %74 : vector<32x512xf32>
    %76 = arith.mulf %59, %75 : vector<32x512xf32>
    %77 = arith.addf %72, %76 : vector<32x512xf32>
    %78 = arith.index_cast %c1_i32 : i32 to index
    %c0_28 = arith.constant 0 : index
    %c0_29 = arith.constant 0 : index
    %79 = vector.load %arg7[%78, %c0_28, %c0_29] : memref<4x32x512xf32, #tpu.memory_space<vmem>>, vector<1x32x512xf32>
    %80 = vector.shape_cast %79 : vector<1x32x512xf32> to vector<32x512xf32>
    %81 = vector.shape_cast %77 : vector<32x512xf32> to vector<1x32x512xf32>
    tpu.vector_store %arg7[%78, %c0_28, %c0_29], %81 {strides = array<i32>} : memref<4x32x512xf32, #tpu.memory_space<vmem>>, vector<1x32x512xf32>,
    %c2_i32 = arith.constant 2 : i32
    %82 = arith.index_cast %c2_i32 : i32 to index
    %c0_30 = arith.constant 0 : index
    %c0_31 = arith.constant 0 : index
    %83 = vector.load %arg2[%82, %c0_30, %c0_31] : memref<4x32x512xf32, #tpu.memory_space<vmem>>, vector<1x32x512xf32>
    %84 = vector.shape_cast %83 : vector<1x32x512xf32> to vector<32x512xf32>
    %cst_32 = arith.constant dense<0.000000e+00> : vector<96x512xf32>
    %85 = tpu.matmul %3, %84, %cst_32 {dimension_numbers = #tpu.dot_dimension_numbers<[1], [0], [0], [1], [0, 0, 1, 1], [], []>} : vector<96x32xf32>, vector<32x512xf32>, vector<96x512xf32> -> vector<96x512xf32>
    %86 = arith.addf %85, %8 : vector<96x512xf32>
    %cst_33 = arith.constant dense<0.000000e+00> : vector<64x512xf32>
    %87 = tpu.matmul %4, %77, %cst_33 {dimension_numbers = #tpu.dot_dimension_numbers<[1], [0], [0], [1], [0, 0, 1, 1], [], []>} : vector<64x32xf32>, vector<32x512xf32>, vector<64x512xf32> -> vector<64x512xf32>
    %88 = vector.extract_strided_slice %86 {offsets = [0, 0], sizes = [32, 512], strides = [1, 1]} : vector<96x512xf32> to vector<32x512xf32>
    %89 = vector.extract_strided_slice %87 {offsets = [0, 0], sizes = [32, 512], strides = [1, 1]} : vector<64x512xf32> to vector<32x512xf32>
    %90 = arith.addf %88, %89 : vector<32x512xf32>
    %91 = arith.negf %90 : vector<32x512xf32>
    %92 = math.exp %91 : vector<32x512xf32>
    %cst_34 = arith.constant 1.000000e+00 : f32
    %93 = vector.broadcast %cst_34 : f32 to vector<32x512xf32>
    %94 = arith.addf %93, %92 : vector<32x512xf32>
    %95 = arith.divf %93, %94 : vector<32x512xf32>
    %96 = vector.extract_strided_slice %86 {offsets = [32, 0], sizes = [32, 512], strides = [1, 1]} : vector<96x512xf32> to vector<32x512xf32>
    %97 = vector.extract_strided_slice %87 {offsets = [32, 0], sizes = [32, 512], strides = [1, 1]} : vector<64x512xf32> to vector<32x512xf32>
    %98 = arith.addf %96, %97 : vector<32x512xf32>
    %99 = arith.negf %98 : vector<32x512xf32>
    %100 = math.exp %99 : vector<32x512xf32>
    %cst_35 = arith.constant 1.000000e+00 : f32
    %101 = vector.broadcast %cst_35 : f32 to vector<32x512xf32>
    %102 = arith.addf %101, %100 : vector<32x512xf32>
    %103 = arith.divf %101, %102 : vector<32x512xf32>
    %104 = arith.mulf %103, %77 : vector<32x512xf32>
    %cst_36 = arith.constant dense<0.000000e+00> : vector<32x512xf32>
    %105 = tpu.matmul %5, %104, %cst_36 {dimension_numbers = #tpu.dot_dimension_numbers<[1], [0], [0], [1], [0, 0, 1, 1], [], []>} : vector<32x32xf32>, vector<32x512xf32>, vector<32x512xf32> -> vector<32x512xf32>
    %cst_37 = arith.constant 1.000000e+00 : f32
    %106 = vector.broadcast %cst_37 : f32 to vector<32x512xf32>
    %107 = arith.subf %106, %95 : vector<32x512xf32>
    %108 = arith.mulf %107, %77 : vector<32x512xf32>
    %109 = vector.extract_strided_slice %86 {offsets = [64, 0], sizes = [32, 512], strides = [1, 1]} : vector<96x512xf32> to vector<32x512xf32>
    %110 = arith.addf %109, %105 : vector<32x512xf32>
    %111 = math.tanh %110 : vector<32x512xf32>
    %112 = arith.mulf %95, %111 : vector<32x512xf32>
    %113 = arith.addf %108, %112 : vector<32x512xf32>
    %114 = arith.index_cast %c2_i32 : i32 to index
    %c0_38 = arith.constant 0 : index
    %c0_39 = arith.constant 0 : index
    %115 = vector.load %arg7[%114, %c0_38, %c0_39] : memref<4x32x512xf32, #tpu.memory_space<vmem>>, vector<1x32x512xf32>
    %116 = vector.shape_cast %115 : vector<1x32x512xf32> to vector<32x512xf32>
    %117 = vector.shape_cast %113 : vector<32x512xf32> to vector<1x32x512xf32>
    tpu.vector_store %arg7[%114, %c0_38, %c0_39], %117 {strides = array<i32>} : memref<4x32x512xf32, #tpu.memory_space<vmem>>, vector<1x32x512xf32>,
    %c3_i32 = arith.constant 3 : i32
    %118 = arith.index_cast %c3_i32 : i32 to index
    %c0_40 = arith.constant 0 : index
    %c0_41 = arith.constant 0 : index
    %119 = vector.load %arg2[%118, %c0_40, %c0_41] : memref<4x32x512xf32, #tpu.memory_space<vmem>>, vector<1x32x512xf32>
    %120 = vector.shape_cast %119 : vector<1x32x512xf32> to vector<32x512xf32>
    %cst_42 = arith.constant dense<0.000000e+00> : vector<96x512xf32>
    %121 = tpu.matmul %3, %120, %cst_42 {dimension_numbers = #tpu.dot_dimension_numbers<[1], [0], [0], [1], [0, 0, 1, 1], [], []>} : vector<96x32xf32>, vector<32x512xf32>, vector<96x512xf32> -> vector<96x512xf32>
    %122 = arith.addf %121, %8 : vector<96x512xf32>
    %cst_43 = arith.constant dense<0.000000e+00> : vector<64x512xf32>
    %123 = tpu.matmul %4, %113, %cst_43 {dimension_numbers = #tpu.dot_dimension_numbers<[1], [0], [0], [1], [0, 0, 1, 1], [], []>} : vector<64x32xf32>, vector<32x512xf32>, vector<64x512xf32> -> vector<64x512xf32>
    %124 = vector.extract_strided_slice %122 {offsets = [0, 0], sizes = [32, 512], strides = [1, 1]} : vector<96x512xf32> to vector<32x512xf32>
    %125 = vector.extract_strided_slice %123 {offsets = [0, 0], sizes = [32, 512], strides = [1, 1]} : vector<64x512xf32> to vector<32x512xf32>
    %126 = arith.addf %124, %125 : vector<32x512xf32>
    %127 = arith.negf %126 : vector<32x512xf32>
    %128 = math.exp %127 : vector<32x512xf32>
    %cst_44 = arith.constant 1.000000e+00 : f32
    %129 = vector.broadcast %cst_44 : f32 to vector<32x512xf32>
    %130 = arith.addf %129, %128 : vector<32x512xf32>
    %131 = arith.divf %129, %130 : vector<32x512xf32>
    %132 = vector.extract_strided_slice %122 {offsets = [32, 0], sizes = [32, 512], strides = [1, 1]} : vector<96x512xf32> to vector<32x512xf32>
    %133 = vector.extract_strided_slice %123 {offsets = [32, 0], sizes = [32, 512], strides = [1, 1]} : vector<64x512xf32> to vector<32x512xf32>
    %134 = arith.addf %132, %133 : vector<32x512xf32>
    %135 = arith.negf %134 : vector<32x512xf32>
    %136 = math.exp %135 : vector<32x512xf32>
    %cst_45 = arith.constant 1.000000e+00 : f32
    %137 = vector.broadcast %cst_45 : f32 to vector<32x512xf32>
    %138 = arith.addf %137, %136 : vector<32x512xf32>
    %139 = arith.divf %137, %138 : vector<32x512xf32>
    %140 = arith.mulf %139, %113 : vector<32x512xf32>
    %cst_46 = arith.constant dense<0.000000e+00> : vector<32x512xf32>
    %141 = tpu.matmul %5, %140, %cst_46 {dimension_numbers = #tpu.dot_dimension_numbers<[1], [0], [0], [1], [0, 0, 1, 1], [], []>} : vector<32x32xf32>, vector<32x512xf32>, vector<32x512xf32> -> vector<32x512xf32>
    %cst_47 = arith.constant 1.000000e+00 : f32
    %142 = vector.broadcast %cst_47 : f32 to vector<32x512xf32>
    %143 = arith.subf %142, %131 : vector<32x512xf32>
    %144 = arith.mulf %143, %113 : vector<32x512xf32>
    %145 = vector.extract_strided_slice %122 {offsets = [64, 0], sizes = [32, 512], strides = [1, 1]} : vector<96x512xf32> to vector<32x512xf32>
    %146 = arith.addf %145, %141 : vector<32x512xf32>
    %147 = math.tanh %146 : vector<32x512xf32>
    %148 = arith.mulf %131, %147 : vector<32x512xf32>
    %149 = arith.addf %144, %148 : vector<32x512xf32>
    %150 = arith.index_cast %c3_i32 : i32 to index
    %c0_48 = arith.constant 0 : index
    %c0_49 = arith.constant 0 : index
    %151 = vector.load %arg7[%150, %c0_48, %c0_49] : memref<4x32x512xf32, #tpu.memory_space<vmem>>, vector<1x32x512xf32>
    %152 = vector.shape_cast %151 : vector<1x32x512xf32> to vector<32x512xf32>
    %153 = vector.shape_cast %149 : vector<32x512xf32> to vector<1x32x512xf32>
    tpu.vector_store %arg7[%150, %c0_48, %c0_49], %153 {strides = array<i32>} : memref<4x32x512xf32, #tpu.memory_space<vmem>>, vector<1x32x512xf32>,
    %c4_i32 = arith.constant 4 : i32
    %c0_50 = arith.constant 0 : index
    %c0_51 = arith.constant 0 : index
    %154 = vector.load %arg8[%c0_50, %c0_51] : memref<32x512xf32, #tpu.memory_space<vmem>>, vector<32x512xf32>
    tpu.vector_store %arg8[%c0_50, %c0_51], %149 {strides = array<i32>} : memref<32x512xf32, #tpu.memory_space<vmem>>, vector<32x512xf32>,
    return
  }
  func.func @transform_0(%arg0: i32, %arg1: i32) -> (i32, i32, i32) {
    %c0_i32 = arith.constant 0 : i32
    %c0_i32_0 = arith.constant 0 : i32
    return %arg1, %c0_i32, %arg0 : i32, i32, i32
  }
  func.func @transform_1(%arg0: i32, %arg1: i32) -> (i32, i32) {
    %c0_i32 = arith.constant 0 : i32
    %c0_i32_0 = arith.constant 0 : i32
    %c0_i32_1 = arith.constant 0 : i32
    return %c0_i32, %c0_i32_0 : i32, i32
  }
  func.func @transform_2(%arg0: i32, %arg1: i32) -> (i32, i32) {
    %c0_i32 = arith.constant 0 : i32
    %c0_i32_0 = arith.constant 0 : i32
    %c0_i32_1 = arith.constant 0 : i32
    return %c0_i32, %c0_i32_0 : i32, i32
  }
  func.func @transform_3(%arg0: i32, %arg1: i32) -> (i32, i32) {
    %c0_i32 = arith.constant 0 : i32
    %c0_i32_0 = arith.constant 0 : i32
    %c0_i32_1 = arith.constant 0 : i32
    return %c0_i32, %c0_i32_0 : i32, i32
  }
  func.func @transform_4(%arg0: i32, %arg1: i32) -> (i32, i32) {
    %c0_i32 = arith.constant 0 : i32
    %c0_i32_0 = arith.constant 0 : i32
    %c0_i32_1 = arith.constant 0 : i32
    return %c0_i32, %c0_i32_0 : i32, i32
  }
  func.func @transform_5(%arg0: i32, %arg1: i32) -> (i32, i32, i32) {
    %c0_i32 = arith.constant 0 : i32
    %c0_i32_0 = arith.constant 0 : i32
    return %arg1, %c0_i32, %arg0 : i32, i32, i32
  }
}

</mosaic_0001>

<llo_original>
// kernel: tpu_custom_call.1
$region0: #{tpu_custom_call.1}
  #allocation0 [shape = 'u32[]', space=smem, size = 0x4, offset = 0x4, fixed_abs, tag = 'smem constant byte address 0x4 - core index']
  #allocation1 [shape = 'u32[144,128]{1,0:T(1,128)}', space=vmem, size = 0x12000, scoped, tag = 'internal scratch']
  #allocation2 [shape = 'f32[32,512]{1,0:T(8,128)}', space=vmem, size = 0x10000, scoped, tag = 'scratch operand']
  %s0 = inlined_call_operand.hbm [shape: f32[8,32,1024], index: 0, kind: input, shape index: {}]
  %s1 = inlined_call_operand.vmem [shape: f32[96,32], index: 1, kind: input, shape index: {}]
  %s2 = inlined_call_operand.vmem [shape: f32[64,32], index: 2, kind: input, shape index: {}]
  %s3 = inlined_call_operand.vmem [shape: f32[32,32], index: 3, kind: input, shape index: {}]
  %s4 = inlined_call_operand.vmem [shape: f32[96,1], index: 4, kind: input, shape index: {}]
  %s5 = inlined_call_operand.hbm [shape: f32[8,32,1024], index: 5, kind: output, shape index: {}]
  %s6 = sld [smem:[#allocation0]]
  $region61: #{tpu_custom_call.1} parent=0
    _
  %s8 = ssub.s32 1, %s6
  %s9 = scalar_select 0, %s8, %s6
  $region1: #{tpu_custom_call.1} parent=0
    #allocation3 [shape = 'u8[524288]{0}', space=vmem, size = 0x80000, scoped, tag = 'input window, operand 0']
    #allocation4 [shape = 's32[2]{0}', space=sflag, size = 0x8, scoped, tag = 'scoped memory for tpu_custom_call.1']
    #allocation5 [shape = 's32[2]{0}', space=sflag, size = 0x8, scoped, tag = 'scoped memory for tpu_custom_call.1']
    #allocation6 [shape = 'u8[524288]{0}', space=vmem, size = 0x80000, scoped, tag = 'output window, operand 0']
    %10 = vsyncpa [#allocation4], 0
    %s11 = scalar_lea.sflag [#allocation4], 1
    %12 = vsyncpa %s11, 0
    %13 = vsyncpa [#allocation5], 0
    %s14 = scalar_lea.sflag [#allocation5], 1
    %15 = vsyncpa %s14, 0
    loop: start=0, step=1, limit=6
    $region2: #{tpu_custom_call.1} parent=1 // loop_pre_header
      _
    $region3: #{tpu_custom_call.1} parent=1 // loop_header
      %s17 = sphi 0, %s21
      %p18 = scmp.ge.s32.totalorder %s17, 6
      %s24 = sphi 0, %s36
      %s25 = sphi 0, %s32
      %s26 = sphi 0, %s24
      %s27 = sphi 0, %s25
      %s28 = sphi 0, %s26
      %s29 = sphi 0, %s27
      %s41 = sphi 0, %s43
      %s44 = sphi 0, %s41
      %s45 = sphi 0, %s44
      %s61 = sphi 0, %s45
      %s65 = sphi 0, %s65
      %s67 = sphi 0, %s65
      %s68 = sphi 0, %s67
      %s82 = sphi 0, %s68
      %s86 = sphi 0, %s86
      %s88 = sphi 0, %s86
      %s89 = sphi 0, %s88
      %s103 = sphi 0, %s89
      %s107 = sphi 0, %s107
      %s109 = sphi 0, %s107
      %s110 = sphi 0, %s109
      %s124 = sphi 0, %s110
      %s128 = sphi 0, %s128
      %s130 = sphi 0, %s128
      %s131 = sphi 0, %s130
      %s145 = sphi 0, %s131
      %s153 = sphi 0, %s155
      %s156 = sphi 0, %s153
      %s157 = sphi 0, %s156
      %s173 = sphi 0, %s157
    $region4: #{tpu_custom_call.1} parent=1 // loop_header_branch
      %20 = sbr.rel (%p18) target = $region8
    $region5: #{tpu_custom_call.1} parent=1 // loop_body
      %s22 = ssub.s32 %s17, 1
      %s23 = ssub.s32 %s17, 2
      %s30 = sadd.s32 1, %s25
      %p31 = scmp.ge.s32.totalorder %s30, 2
      %s32 = scalar_select %p31, 0, %s30
      %s33 = sadd.s32 1, %s24
      %s34 = scalar_select %p31, %s33, %s24
      %p35 = scmp.ge.s32.totalorder %s34, 2
      %s36 = scalar_select %p35, 0, %s34
      %s37 = ssub.s32 %s25, %s32
      %s38 = ssub.s32 %s24, %s36
      %s39 = sor.u32 %s37, %s38
      %p40 = scmp.eq.s32.totalorder %s39, 0
      %s42 = sadd.s32 %s41, 1
      %s43 = scalar_select %p40, %s41, %s42
      %p46 = pneg %p40
      %p47 = scmp.eq.s32.totalorder %s17, 3
      %p48 = por %p46, %p47
      %p49 = scmp.ne.s32.totalorder %s41, %s44
      %p50 = scmp.eq.s32.totalorder %s17, 0
      %p51 = por %p49, %p50
      %p52 = scmp.ne.s32.totalorder %s41, %s44
      %p53 = scmp.eq.s32.totalorder %s22, 3
      %p54 = por %p52, %p53
      %p55 = scmp.ne.s32.totalorder %s44, %s45
      %p56 = scmp.eq.s32.totalorder %s22, 0
      %p57 = por %p55, %p56
      %p58 = scmp.ne.s32.totalorder %s44, %s45
      %p59 = scmp.eq.s32.totalorder %s23, 3
      %p60 = por %p58, %p59
      %p62 = scmp.ne.s32.totalorder %s45, %s61
      %p63 = scmp.eq.s32.totalorder %s23, 0
      %p64 = por %p62, %p63
      %s66 = sadd.s32 %s65, 1
      %p69 = scmp.eq.s32.totalorder %s17, 3
      %p70 = scmp.ne.s32.totalorder %s65, %s67
      %p71 = scmp.eq.s32.totalorder %s17, 0
      %p72 = por %p70, %p71
      %p73 = scmp.ne.s32.totalorder %s65, %s67
      %p74 = scmp.eq.s32.totalorder %s22, 3
      %p75 = por %p73, %p74
      %p76 = scmp.ne.s32.totalorder %s67, %s68
      %p77 = scmp.eq.s32.totalorder %s22, 0
      %p78 = por %p76, %p77
      %p79 = scmp.ne.s32.totalorder %s67, %s68
      %p80 = scmp.eq.s32.totalorder %s23, 3
      %p81 = por %p79, %p80
      %p83 = scmp.ne.s32.totalorder %s68, %s82
      %p84 = scmp.eq.s32.totalorder %s23, 0
      %p85 = por %p83, %p84
      %s87 = sadd.s32 %s86, 1
      %p90 = scmp.eq.s32.totalorder %s17, 3
      %p91 = scmp.ne.s32.totalorder %s86, %s88
      %p92 = scmp.eq.s32.totalorder %s17, 0
      %p93 = por %p91, %p92
      %p94 = scmp.ne.s32.totalorder %s86, %s88
      %p95 = scmp.eq.s32.totalorder %s22, 3
      %p96 = por %p94, %p95
      %p97 = scmp.ne.s32.totalorder %s88, %s89
      %p98 = scmp.eq.s32.totalorder %s22, 0
      %p99 = por %p97, %p98
      %p100 = scmp.ne.s32.totalorder %s88, %s89
      %p101 = scmp.eq.s32.totalorder %s23, 3
      %p102 = por %p100, %p101
      %p104 = scmp.ne.s32.totalorder %s89, %s103
      %p105 = scmp.eq.s32.totalorder %s23, 0
      %p106 = por %p104, %p105
      %s108 = sadd.s32 %s107, 1
      %p111 = scmp.eq.s32.totalorder %s17, 3
      %p112 = scmp.ne.s32.totalorder %s107, %s109
      %p113 = scmp.eq.s32.totalorder %s17, 0
      %p114 = por %p112, %p113
      %p115 = scmp.ne.s32.totalorder %s107, %s109
      %p116 = scmp.eq.s32.totalorder %s22, 3
      %p117 = por %p115, %p116
      %p118 = scmp.ne.s32.totalorder %s109, %s110
      %p119 = scmp.eq.s32.totalorder %s22, 0
      %p120 = por %p118, %p119
      %p121 = scmp.ne.s32.totalorder %s109, %s110
      %p122 = scmp.eq.s32.totalorder %s23, 3
      %p123 = por %p121, %p122
      %p125 = scmp.ne.s32.totalorder %s110, %s124
      %p126 = scmp.eq.s32.totalorder %s23, 0
      %p127 = por %p125, %p126
      %s129 = sadd.s32 %s128, 1
      %p132 = scmp.eq.s32.totalorder %s17, 3
      %p133 = scmp.ne.s32.totalorder %s128, %s130
      %p134 = scmp.eq.s32.totalorder %s17, 0
      %p135 = por %p133, %p134
      %p136 = scmp.ne.s32.totalorder %s128, %s130
      %p137 = scmp.eq.s32.totalorder %s22, 3
      %p138 = por %p136, %p137
      %p139 = scmp.ne.s32.totalorder %s130, %s131
      %p140 = scmp.eq.s32.totalorder %s22, 0
      %p141 = por %p139, %p140
      %p142 = scmp.ne.s32.totalorder %s130, %s131
      %p143 = scmp.eq.s32.totalorder %s23, 3
      %p144 = por %p142, %p143
      %p146 = scmp.ne.s32.totalorder %s131, %s145
      %p147 = scmp.eq.s32.totalorder %s23, 0
      %p148 = por %p146, %p147
      %s149 = ssub.s32 %s25, %s32
      %s150 = ssub.s32 %s24, %s36
      %s151 = sor.u32 %s149, %s150
      %p152 = scmp.eq.s32.totalorder %s151, 0
      %s154 = sadd.s32 %s153, 1
      %s155 = scalar_select %p152, %s153, %s154
      %p158 = pneg %p152
      %p159 = scmp.eq.s32.totalorder %s17, 3
      %p160 = por %p158, %p159
      %p161 = scmp.ne.s32.totalorder %s153, %s156
      %p162 = scmp.eq.s32.totalorder %s17, 0
      %p163 = por %p161, %p162
      %p164 = scmp.ne.s32.totalorder %s153, %s156
      %p165 = scmp.eq.s32.totalorder %s22, 3
      %p166 = por %p164, %p165
      %p167 = scmp.ne.s32.totalorder %s156, %s157
      %p168 = scmp.eq.s32.totalorder %s22, 0
      %p169 = por %p167, %p168
      %p170 = scmp.ne.s32.totalorder %s156, %s157
      %p171 = scmp.eq.s32.totalorder %s23, 3
      %p172 = por %p170, %p171
      %p174 = scmp.ne.s32.totalorder %s157, %s173
      %p175 = scmp.eq.s32.totalorder %s23, 0
      %p176 = por %p174, %p175
      %p177 = scmp.le.s32.totalorder 1, %s17
      %p178 = scmp.lt.s32.totalorder %s17, 5
      %p179 = pnand %p177, %p178
      %p180 = pneg %p179
      // Predicated region
      $region9: #{tpu_custom_call.1} parent=5 // pred_check
        _
      $region10: #{tpu_custom_call.1} parent=5 // pred_check_branch
        %182 = sbr.rel (%p179) target = $region12
      $region11: #{tpu_custom_call.1} parent=5 // pred_region
        %s183 = ssub.s32 %s17, 1
        // Predicated region
        $region13: #{tpu_custom_call.1} parent=11 // pred_check
          %p184 = pneg %p78
        $region14: #{tpu_custom_call.1} parent=11 // pred_check_branch
          %186 = sbr.rel (%p184) target = $region16
        $region15: #{tpu_custom_call.1} parent=11 // pred_region
          _
        $region16: #{tpu_custom_call.1} parent=11 // pred_fallthru
          _
        // Predicated region
        $region17: #{tpu_custom_call.1} parent=11 // pred_check
          %p187 = pneg %p99
        $region18: #{tpu_custom_call.1} parent=11 // pred_check_branch
          %189 = sbr.rel (%p187) target = $region20
        $region19: #{tpu_custom_call.1} parent=11 // pred_region
          _
        $region20: #{tpu_custom_call.1} parent=11 // pred_fallthru
          _
        // Predicated region
        $region21: #{tpu_custom_call.1} parent=11 // pred_check
          %p190 = pneg %p120
        $region22: #{tpu_custom_call.1} parent=11 // pred_check_branch
          %192 = sbr.rel (%p190) target = $region24
        $region23: #{tpu_custom_call.1} parent=11 // pred_region
          _
        $region24: #{tpu_custom_call.1} parent=11 // pred_fallthru
          _
        // Predicated region
        $region25: #{tpu_custom_call.1} parent=11 // pred_check
          %p193 = pneg %p141
        $region26: #{tpu_custom_call.1} parent=11 // pred_check_branch
          %195 = sbr.rel (%p193) target = $region28
        $region27: #{tpu_custom_call.1} parent=11 // pred_region
          _
        $region28: #{tpu_custom_call.1} parent=11 // pred_fallthru
          _
      $region12: #{tpu_custom_call.1} parent=5 // pred_fallthru
        _
      %p196 = scmp.lt.s32.totalorder %s17, 4
      // Predicated region
      $region29: #{tpu_custom_call.1} parent=5 // pred_check
        %p197 = pneg %p196
      $region30: #{tpu_custom_call.1} parent=5 // pred_check_branch
        %199 = sbr.rel (%p197) target = $region32
      $region31: #{tpu_custom_call.1} parent=5 // pred_region
        // Predicated region
        $region33: #{tpu_custom_call.1} parent=31 // pred_check
          %p200 = pneg %p51
        $region34: #{tpu_custom_call.1} parent=31 // pred_check_branch
          %202 = sbr.rel (%p200) target = $region36
        $region35: #{tpu_custom_call.1} parent=31 // pred_region
          %s203 = sand.u32 %s41, 1
          %s204 = scalar_lea.sflag [#allocation4], %s203
          %s205 = sand.u32 %s41, 1
          %s206 = smul.addr %s205, 512
          %s207 = scalar_lea.vmem [#allocation3], %s206
          %s208 = smul.u32 4, %s25
          %s209 = smul.u32 4, %s24
          %s211 = ssub.s32 8192, 8192
          %212 = vsyncadd %s204, %s211
          %s213 = smul.addr %s208, 32
          %s214 = sadd.s32 %s209, %s213
          %s215 = smul.addr %s214, 128
          %s216 = scalar_lea.hbm %s0, %s215
          %s217 = sshll.u32 %s207, 4
          %s218 = int_to_ptr.vmem [resolvable:$true] %s217
          %223 = dma.hbm_to_vmem [thread:$0]  %s216, 8192, %s218, %s204, 1024, 512, 32
        $region36: #{tpu_custom_call.1} parent=31 // pred_fallthru
          _
      $region32: #{tpu_custom_call.1} parent=5 // pred_fallthru
        _
      %p224 = scmp.le.s32.totalorder 1, %s17
      %p225 = scmp.lt.s32.totalorder %s17, 5
      %p226 = pnand %p224, %p225
      %p227 = pneg %p226
      // Predicated region
      $region37: #{tpu_custom_call.1} parent=5 // pred_check
        _
      $region38: #{tpu_custom_call.1} parent=5 // pred_check_branch
        %229 = sbr.rel (%p226) target = $region40
      $region39: #{tpu_custom_call.1} parent=5 // pred_region
        %s230 = ssub.s32 %s17, 1
        %s231 = sand.u32 %s44, 1
        %s232 = scalar_lea.sflag [#allocation4], %s231
        %s233 = sand.u32 %s44, 1
        %s234 = smul.addr %s233, 512
        %s235 = scalar_lea.vmem [#allocation3], %s234
        // Predicated region
        $region41: #{tpu_custom_call.1} parent=39 // pred_check
          %p236 = pneg %p57
        $region42: #{tpu_custom_call.1} parent=39 // pred_check_branch
          %238 = sbr.rel (%p236) target = $region44
        $region43: #{tpu_custom_call.1} parent=39 // pred_region
          %239 = dma.done %s232, 8192
        $region44: #{tpu_custom_call.1} parent=39 // pred_fallthru
          _
        %s240 = sand.u32 %s44, 1
        %s241 = scalar_lea.sflag [#allocation4], %s240
        %s242 = sand.u32 %s44, 1
        %s243 = smul.addr %s242, 512
        %s244 = scalar_lea.vmem [#allocation3], %s243
        %p245 = pneg %p57
        %p246 = pneg %p54
        %p247 = pneg %p78
        %p248 = pneg %p75
        %p249 = pneg %p99
        %p250 = pneg %p96
        %p251 = pneg %p120
        %p252 = pneg %p117
        %p253 = pneg %p141
        %p254 = pneg %p138
        %p255 = pneg %p169
        %p256 = pneg %p166
        %s257 = sand.u32 %s156, 1
        %s258 = scalar_lea.sflag [#allocation5], %s257
        %s259 = sand.u32 %s156, 1
        %s260 = smul.addr %s259, 512
        %s261 = scalar_lea.vmem [#allocation6], %s260
        %s262 = smul.u32 4, %s27
        %s263 = smul.u32 4, %s26
        %s264 = smul.u32 4, %s27
        %s265 = smul.u32 4, %s26
        %p266 = scmp.eq.s32.totalorder %s27, 0
        // Predicated region
        $region45: #{tpu_custom_call.1} parent=39 // pred_check
          %p267 = pneg %p266
        $region46: #{tpu_custom_call.1} parent=39 // pred_check_branch
          %269 = sbr.rel (%p267) target = $region48
        $region47: #{tpu_custom_call.1} parent=39 // pred_region
          %270 = vst [vmem:[#allocation2] sm:$0xff] 0.0
          %271 = vst [vmem:[#allocation2 + $0x8] sm:$0xff] 0.0
          %272 = vst [vmem:[#allocation2 + $0x10] sm:$0xff] 0.0
          %273 = vst [vmem:[#allocation2 + $0x18] sm:$0xff] 0.0
          %274 = vst [vmem:[#allocation2 + $0x20] sm:$0xff] 0.0
          %275 = vst [vmem:[#allocation2 + $0x28] sm:$0xff] 0.0
          %276 = vst [vmem:[#allocation2 + $0x30] sm:$0xff] 0.0
          %277 = vst [vmem:[#allocation2 + $0x38] sm:$0xff] 0.0
          %278 = vst [vmem:[#allocation2 + $0x40] sm:$0xff] 0.0
          %279 = vst [vmem:[#allocation2 + $0x48] sm:$0xff] 0.0
          %280 = vst [vmem:[#allocation2 + $0x50] sm:$0xff] 0.0
          %281 = vst [vmem:[#allocation2 + $0x58] sm:$0xff] 0.0
          %282 = vst [vmem:[#allocation2 + $0x60] sm:$0xff] 0.0
          %283 = vst [vmem:[#allocation2 + $0x68] sm:$0xff] 0.0
          %284 = vst [vmem:[#allocation2 + $0x70] sm:$0xff] 0.0
          %285 = vst [vmem:[#allocation2 + $0x78] sm:$0xff] 0.0
        $region48: #{tpu_custom_call.1} parent=39 // pred_fallthru
          _
        %v286 = vld [vmem:[%s1] sm:$0xff]
        %v287 = vld [vmem:[%s1 + $0x8] sm:$0xff]
        %v288 = vld [vmem:[%s1 + $0x10] sm:$0xff]
        %v289 = vld [vmem:[%s1 + $0x18] sm:$0xff]
        %v290 = vld [vmem:[%s1 + $0x20] sm:$0xff]
        %v291 = vld [vmem:[%s1 + $0x28] sm:$0xff]
        %v292 = vld [vmem:[%s1 + $0x30] sm:$0xff]
        %v293 = vld [vmem:[%s1 + $0x38] sm:$0xff]
        %v294 = vld [vmem:[%s1 + $0x40] sm:$0xff]
        %v295 = vld [vmem:[%s1 + $0x48] sm:$0xff]
        %v296 = vld [vmem:[%s1 + $0x50] sm:$0xff]
        %v297 = vld [vmem:[%s1 + $0x58] sm:$0xff]
        %v298 = vld [vmem:[%s2] sm:$0xff]
        %v299 = vld [vmem:[%s2 + $0x8] sm:$0xff]
        %v300 = vld [vmem:[%s2 + $0x10] sm:$0xff]
        %v301 = vld [vmem:[%s2 + $0x18] sm:$0xff]
        %v302 = vld [vmem:[%s2 + $0x20] sm:$0xff]
        %v303 = vld [vmem:[%s2 + $0x28] sm:$0xff]
        %v304 = vld [vmem:[%s2 + $0x30] sm:$0xff]
        %v305 = vld [vmem:[%s2 + $0x38] sm:$0xff]
        %v306 = vld [vmem:[%s3] sm:$0xff]
        %v307 = vld [vmem:[%s3 + $0x8] sm:$0xff]
        %v308 = vld [vmem:[%s3 + $0x10] sm:$0xff]
        %v309 = vld [vmem:[%s3 + $0x18] sm:$0xff]
        %v310 = vld [vmem:[%s4] sm:$0xff]
        %v311 = vld [vmem:[%s4 + $0x8] sm:$0xff]
        %v312 = vld [vmem:[%s4 + $0x10] sm:$0xff]
        %v313 = vld [vmem:[%s4 + $0x18] sm:$0xff]
        %v314 = vld [vmem:[%s4 + $0x20] sm:$0xff]
        %v315 = vld [vmem:[%s4 + $0x28] sm:$0xff]
        %v316 = vld [vmem:[%s4 + $0x30] sm:$0xff]
        %v317 = vld [vmem:[%s4 + $0x38] sm:$0xff]
        %v318 = vld [vmem:[%s4 + $0x40] sm:$0xff]
        %v319 = vld [vmem:[%s4 + $0x48] sm:$0xff]
        %v320 = vld [vmem:[%s4 + $0x50] sm:$0xff]
        %v321 = vld [vmem:[%s4 + $0x58] sm:$0xff]
        %323 = vset.pattern.permute.xlu0 0
        %324 = vperm.xlu0 %323, %v310
        %v325 = vpop.permute.xlu0 %324
        %328 = vset.pattern.permute.xlu0 0
        %329 = vperm.xlu0 %328, %v311
        %v330 = vpop.permute.xlu0 %329
        %333 = vset.pattern.permute.xlu0 0
        %334 = vperm.xlu0 %333, %v312
        %v335 = vpop.permute.xlu0 %334
        %338 = vset.pattern.permute.xlu0 0
        %339 = vperm.xlu0 %338, %v313
        %v340 = vpop.permute.xlu0 %339
        %343 = vset.pattern.permute.xlu0 0
        %344 = vperm.xlu0 %343, %v314
        %v345 = vpop.permute.xlu0 %344
        %348 = vset.pattern.permute.xlu0 0
        %349 = vperm.xlu0 %348, %v315
        %v350 = vpop.permute.xlu0 %349
        %353 = vset.pattern.permute.xlu0 0
        %354 = vperm.xlu0 %353, %v316
        %v355 = vpop.permute.xlu0 %354
        %358 = vset.pattern.permute.xlu0 0
        %359 = vperm.xlu0 %358, %v317
        %v360 = vpop.permute.xlu0 %359
        %363 = vset.pattern.permute.xlu0 0
        %364 = vperm.xlu0 %363, %v318
        %v365 = vpop.permute.xlu0 %364
        %368 = vset.pattern.permute.xlu0 0
        %369 = vperm.xlu0 %368, %v319
        %v370 = vpop.permute.xlu0 %369
        %373 = vset.pattern.permute.xlu0 0
        %374 = vperm.xlu0 %373, %v320
        %v375 = vpop.permute.xlu0 %374
        %378 = vset.pattern.permute.xlu0 0
        %379 = vperm.xlu0 %378, %v321
        %v380 = vpop.permute.xlu0 %379
        %v382 = vld [vmem:[#allocation2] sm:$0xff]
        %v383 = vld [vmem:[#allocation2 + $0x8] sm:$0xff]
        %v384 = vld [vmem:[#allocation2 + $0x10] sm:$0xff]
        %v385 = vld [vmem:[#allocation2 + $0x18] sm:$0xff]
        %v386 = vld [vmem:[#allocation2 + $0x20] sm:$0xff]
        %v387 = vld [vmem:[#allocation2 + $0x28] sm:$0xff]
        %v388 = vld [vmem:[#allocation2 + $0x30] sm:$0xff]
        %v389 = vld [vmem:[#allocation2 + $0x38] sm:$0xff]
        %v390 = vld [vmem:[#allocation2 + $0x40] sm:$0xff]
        %v391 = vld [vmem:[#allocation2 + $0x48] sm:$0xff]
        %v392 = vld [vmem:[#allocation2 + $0x50] sm:$0xff]
        %v393 = vld [vmem:[#allocation2 + $0x58] sm:$0xff]
        %v394 = vld [vmem:[#allocation2 + $0x60] sm:$0xff]
        %v395 = vld [vmem:[#allocation2 + $0x68] sm:$0xff]
        %v396 = vld [vmem:[#allocation2 + $0x70] sm:$0xff]
        %v397 = vld [vmem:[#allocation2 + $0x78] sm:$0xff]
        %v398 = vld [vmem:[%s235] sm:$0xff]
        %v399 = vld [vmem:[%s235 + $0x8] sm:$0xff]
        %v400 = vld [vmem:[%s235 + $0x10] sm:$0xff]
        %v401 = vld [vmem:[%s235 + $0x18] sm:$0xff]
        %v402 = vld [vmem:[%s235 + $0x20] sm:$0xff]
        %v403 = vld [vmem:[%s235 + $0x28] sm:$0xff]
        %v404 = vld [vmem:[%s235 + $0x30] sm:$0xff]
        %v405 = vld [vmem:[%s235 + $0x38] sm:$0xff]
        %v406 = vld [vmem:[%s235 + $0x40] sm:$0xff]
        %v407 = vld [vmem:[%s235 + $0x48] sm:$0xff]
        %v408 = vld [vmem:[%s235 + $0x50] sm:$0xff]
        %v409 = vld [vmem:[%s235 + $0x58] sm:$0xff]
        %v410 = vld [vmem:[%s235 + $0x60] sm:$0xff]
        %v411 = vld [vmem:[%s235 + $0x68] sm:$0xff]
        %v412 = vld [vmem:[%s235 + $0x70] sm:$0xff]
        %v413 = vld [vmem:[%s235 + $0x78] sm:$0xff]
        %vm414 = vcmask 261120
        %v416 = vsel %vm414, %v286, 0
        %v419 = vsel %vm414, %v287, 0
        %v422 = vsel %vm414, %v288, 0
        %v425 = vsel %vm414, %v289, 0
        %v428 = vsel %vm414, %v290, 0
        %v431 = vsel %vm414, %v291, 0
        %v434 = vsel %vm414, %v292, 0
        %v437 = vsel %vm414, %v293, 0
        %v440 = vsel %vm414, %v294, 0
        %v443 = vsel %vm414, %v295, 0
        %v446 = vsel %vm414, %v296, 0
        %v449 = vsel %vm414, %v297, 0
        %451 = vmatprep.subr.mxu0 %v399
        %452 = vmatpush1.msra.mxu0 %v398
        %453 = vmatprep.subr.mxu0 %v403
        %454 = vmatpush1.msra.mxu0 %v402
        %455 = vmatprep.subr.mxu0 %v407
        %456 = vmatpush1.msra.mxu0 %v406
        %457 = vmatprep.subr.mxu0 %v411
        %458 = vmatpush1.msra.mxu0 %v410
        %459 = vmatprep.subr.mxu0 0.0
        %460 = vmatpush1.msra.mxu0 0.0
        %461 = vmatprep.subr.mxu0 0.0
        %462 = vmatpush1.msra.mxu0 0.0
        %463 = vmatprep.subr.mxu0 0.0
        %464 = vmatpush1.msra.mxu0 0.0
        %465 = vmatprep.subr.mxu0 0.0
        %466 = vmatpush1.msra.mxu0 0.0
        %467 = vmatprep.subr.mxu0 0.0
        %468 = vmatpush1.msra.mxu0 0.0
        %469 = vmatprep.subr.mxu0 0.0
        %470 = vmatpush1.msra.mxu0 0.0
        %471 = vmatprep.subr.mxu0 0.0
        %472 = vmatpush1.msra.mxu0 0.0
        %473 = vmatprep.subr.mxu0 0.0
        %474 = vmatpush1.msra.mxu0 0.0
        %475 = vmatprep.subr.mxu0 0.0
        %476 = vmatpush1.msra.mxu0 0.0
        %477 = vmatprep.subr.mxu0 0.0
        %478 = vmatpush1.msra.mxu0 0.0
        %479 = vmatprep.subr.mxu0 0.0
        %480 = vmatpush1.msra.mxu0 0.0
        %481 = vmatprep.subr.mxu0 0.0
        %482 = vmatpush1.msra.mxu0 0.0
        %483 = vmatprep.subr.mxu0 0.0
        %484 = vmatpush1.msra.mxu0 0.0
        %485 = vmatprep.subr.mxu0 0.0
        %486 = vmatpush1.msra.mxu0 0.0
        %487 = vmatprep.subr.mxu0 0.0
        %488 = vmatpush1.msra.mxu0 0.0
        %489 = vmatprep.subr.mxu0 0.0
        %490 = vmatpush1.msra.mxu0 0.0
        %491 = vmatprep.subr.mxu0 0.0
        %492 = vmatpush1.msra.mxu0 0.0
        %493 = vmatprep.subr.mxu0 0.0
        %494 = vmatpush1.msra.mxu0 0.0
        %495 = vmatprep.subr.mxu0 0.0
        %496 = vmatpush1.msra.mxu0 0.0
        %497 = vmatprep.subr.mxu0 0.0
        %498 = vmatpush1.msra.mxu0 0.0
        %499 = vmatprep.subr.mxu0 0.0
        %500 = vmatpush1.msra.mxu0 0.0
        %501 = vmatprep.subr.mxu0 0.0
        %502 = vmatpush1.msra.mxu0 0.0
        %503 = vmatprep.subr.mxu0 0.0
        %504 = vmatpush1.msra.mxu0 0.0
        %505 = vmatprep.subr.mxu0 0.0
        %506 = vmatpush1.msra.mxu0 0.0
        %507 = vmatprep.subr.mxu0 0.0
        %508 = vmatpush1.msra.mxu0 0.0
        %509 = vmatprep.subr.mxu0 0.0
        %510 = vmatpush1.msra.mxu0 0.0
        %511 = vmatprep.subr.mxu0 0.0
        %512 = vmatpush1.msra.mxu0 0.0
        %513 = vmatprep.subr.mxu0 0.0
        %514 = vmatpush1.msra.mxu0 0.0
        %515 = vmatprep.mubr.f32.mxu0 0.0
        %516 = vmatmul.mubr.f32.gmra.mrb[0].mxu0 %v416
        %v517 = vpop.f32.mrb[0].mxu0
        %v518 = vadd.f32 %v325, %v517
        %v519 = vpop.f32.mrb[0].mxu0
        %v520 = vadd.f32 %v325, %v519
        %521 = vmatprep.mubr.f32.mxu0 0.0
        %522 = vmatmul.mubr.f32.gmra.mrb[0].mxu0 %v419
        %v523 = vpop.f32.mrb[0].mxu0
        %v524 = vadd.f32 %v330, %v523
        %v525 = vpop.f32.mrb[0].mxu0
        %v526 = vadd.f32 %v330, %v525
        %527 = vmatprep.mubr.f32.mxu0 0.0
        %528 = vmatmul.mubr.f32.gmra.mrb[0].mxu0 %v422
        %v529 = vpop.f32.mrb[0].mxu0
        %v530 = vadd.f32 %v335, %v529
        %v531 = vpop.f32.mrb[0].mxu0
        %v532 = vadd.f32 %v335, %v531
        %533 = vmatprep.mubr.f32.mxu0 0.0
        %534 = vmatmul.mubr.f32.gmra.mrb[0].mxu0 %v425
        %v535 = vpop.f32.mrb[0].mxu0
        %v536 = vadd.f32 %v340, %v535
        %v537 = vpop.f32.mrb[0].mxu0
        %v538 = vadd.f32 %v340, %v537
        %539 = vmatprep.mubr.f32.mxu0 0.0
        %540 = vmatmul.mubr.f32.gmra.mrb[0].mxu0 %v428
        %v541 = vpop.f32.mrb[0].mxu0
        %v542 = vadd.f32 %v345, %v541
        %v543 = vpop.f32.mrb[0].mxu0
        %v544 = vadd.f32 %v345, %v543
        %545 = vmatprep.mubr.f32.mxu0 0.0
        %546 = vmatmul.mubr.f32.gmra.mrb[0].mxu0 %v431
        %v547 = vpop.f32.mrb[0].mxu0
        %v548 = vadd.f32 %v350, %v547
        %v549 = vpop.f32.mrb[0].mxu0
        %v550 = vadd.f32 %v350, %v549
        %551 = vmatprep.mubr.f32.mxu0 0.0
        %552 = vmatmul.mubr.f32.gmra.mrb[0].mxu0 %v434
        %v553 = vpop.f32.mrb[0].mxu0
        %v554 = vadd.f32 %v355, %v553
        %v555 = vpop.f32.mrb[0].mxu0
        %v556 = vadd.f32 %v355, %v555
        %557 = vmatprep.mubr.f32.mxu0 0.0
        %558 = vmatmul.mubr.f32.gmra.mrb[0].mxu0 %v437
        %v559 = vpop.f32.mrb[0].mxu0
        %v560 = vadd.f32 %v360, %v559
        %v561 = vpop.f32.mrb[0].mxu0
        %v562 = vadd.f32 %v360, %v561
        %563 = vmatprep.mubr.f32.mxu0 0.0
        %564 = vmatmul.mubr.f32.gmra.mrb[0].mxu0 %v440
        %v565 = vpop.f32.mrb[0].mxu0
        %v566 = vadd.f32 %v365, %v565
        %v567 = vpop.f32.mrb[0].mxu0
        %v568 = vadd.f32 %v365, %v567
        %569 = vmatprep.mubr.f32.mxu0 0.0
        %570 = vmatmul.mubr.f32.gmra.mrb[0].mxu0 %v443
        %v571 = vpop.f32.mrb[0].mxu0
        %v572 = vadd.f32 %v370, %v571
        %v573 = vpop.f32.mrb[0].mxu0
        %v574 = vadd.f32 %v370, %v573
        %575 = vmatprep.mubr.f32.mxu0 0.0
        %576 = vmatmul.mubr.f32.gmra.mrb[0].mxu0 %v446
        %v577 = vpop.f32.mrb[0].mxu0
        %v578 = vadd.f32 %v375, %v577
        %v579 = vpop.f32.mrb[0].mxu0
        %v580 = vadd.f32 %v375, %v579
        %581 = vmatprep.mubr.f32.mxu0 0.0
        %582 = vmatmul.mubr.f32.gmra.mrb[0].mxu0 %v449
        %v583 = vpop.f32.mrb[0].mxu0
        %v584 = vadd.f32 %v380, %v583
        %v585 = vpop.f32.mrb[0].mxu0
        %v586 = vadd.f32 %v380, %v585
        %587 = vdwg.mxu0
        %588 = vmatprep.subr.mxu0 %v401
        %589 = vmatpush1.msra.mxu0 %v400
        %590 = vmatprep.subr.mxu0 %v405
        %591 = vmatpush1.msra.mxu0 %v404
        %592 = vmatprep.subr.mxu0 %v409
        %593 = vmatpush1.msra.mxu0 %v408
        %594 = vmatprep.subr.mxu0 %v413
        %595 = vmatpush1.msra.mxu0 %v412
        %596 = vmatprep.subr.mxu0 0.0
        %597 = vmatpush1.msra.mxu0 0.0
        %598 = vmatprep.subr.mxu0 0.0
        %599 = vmatpush1.msra.mxu0 0.0
        %600 = vmatprep.subr.mxu0 0.0
        %601 = vmatpush1.msra.mxu0 0.0
        %602 = vmatprep.subr.mxu0 0.0
        %603 = vmatpush1.msra.mxu0 0.0
        %604 = vmatprep.subr.mxu0 0.0
        %605 = vmatpush1.msra.mxu0 0.0
        %606 = vmatprep.subr.mxu0 0.0
        %607 = vmatpush1.msra.mxu0 0.0
        %608 = vmatprep.subr.mxu0 0.0
        %609 = vmatpush1.msra.mxu0 0.0
        %610 = vmatprep.subr.mxu0 0.0
        %611 = vmatpush1.msra.mxu0 0.0
        %612 = vmatprep.subr.mxu0 0.0
        %613 = vmatpush1.msra.mxu0 0.0
        %614 = vmatprep.subr.mxu0 0.0
        %615 = vmatpush1.msra.mxu0 0.0
        %616 = vmatprep.subr.mxu0 0.0
        %617 = vmatpush1.msra.mxu0 0.0
        %618 = vmatprep.subr.mxu0 0.0
        %619 = vmatpush1.msra.mxu0 0.0
        %620 = vmatprep.subr.mxu0 0.0
        %621 = vmatpush1.msra.mxu0 0.0
        %622 = vmatprep.subr.mxu0 0.0
        %623 = vmatpush1.msra.mxu0 0.0
        %624 = vmatprep.subr.mxu0 0.0
        %625 = vmatpush1.msra.mxu0 0.0
        %626 = vmatprep.subr.mxu0 0.0
        %627 = vmatpush1.msra.mxu0 0.0
        %628 = vmatprep.subr.mxu0 0.0
        %629 = vmatpush1.msra.mxu0 0.0
        %630 = vmatprep.subr.mxu0 0.0
        %631 = vmatpush1.msra.mxu0 0.0
        %632 = vmatprep.subr.mxu0 0.0
        %633 = vmatpush1.msra.mxu0 0.0
        %634 = vmatprep.subr.mxu0 0.0
        %635 = vmatpush1.msra.mxu0 0.0
        %636 = vmatprep.subr.mxu0 0.0
        %637 = vmatpush1.msra.mxu0 0.0
        %638 = vmatprep.subr.mxu0 0.0
        %639 = vmatpush1.msra.mxu0 0.0
        %640 = vmatprep.subr.mxu0 0.0
        %641 = vmatpush1.msra.mxu0 0.0
        %642 = vmatprep.subr.mxu0 0.0
        %643 = vmatpush1.msra.mxu0 0.0
        %644 = vmatprep.subr.mxu0 0.0
        %645 = vmatpush1.msra.mxu0 0.0
        %646 = vmatprep.subr.mxu0 0.0
        %647 = vmatpush1.msra.mxu0 0.0
        %648 = vmatprep.subr.mxu0 0.0
        %649 = vmatpush1.msra.mxu0 0.0
        %650 = vmatprep.subr.mxu0 0.0
        %651 = vmatpush1.msra.mxu0 0.0
        %652 = vmatprep.mubr.f32.mxu0 0.0
        %653 = vmatmul.mubr.f32.gmra.mrb[0].mxu0 %v416
        %v654 = vpop.f32.mrb[0].mxu0
        %v655 = vadd.f32 %v325, %v654
        %v656 = vpop.f32.mrb[0].mxu0
        %v657 = vadd.f32 %v325, %v656
        %658 = vmatprep.mubr.f32.mxu0 0.0
        %659 = vmatmul.mubr.f32.gmra.mrb[0].mxu0 %v419
        %v660 = vpop.f32.mrb[0].mxu0
        %v661 = vadd.f32 %v330, %v660
        %v662 = vpop.f32.mrb[0].mxu0
        %v663 = vadd.f32 %v330, %v662
        %664 = vmatprep.mubr.f32.mxu0 0.0
        %665 = vmatmul.mubr.f32.gmra.mrb[0].mxu0 %v422
        %v666 = vpop.f32.mrb[0].mxu0
        %v667 = vadd.f32 %v335, %v666
        %v668 = vpop.f32.mrb[0].mxu0
        %v669 = vadd.f32 %v335, %v668
        %670 = vmatprep.mubr.f32.mxu0 0.0
        %671 = vmatmul.mubr.f32.gmra.mrb[0].mxu0 %v425
        %v672 = vpop.f32.mrb[0].mxu0
        %v673 = vadd.f32 %v340, %v672
        %v674 = vpop.f32.mrb[0].mxu0
        %v675 = vadd.f32 %v340, %v674
        %676 = vmatprep.mubr.f32.mxu0 0.0
        %677 = vmatmul.mubr.f32.gmra.mrb[0].mxu0 %v428
        %v678 = vpop.f32.mrb[0].mxu0
        %v679 = vadd.f32 %v345, %v678
        %v680 = vpop.f32.mrb[0].mxu0
        %v681 = vadd.f32 %v345, %v680
        %682 = vmatprep.mubr.f32.mxu0 0.0
        %683 = vmatmul.mubr.f32.gmra.mrb[0].mxu0 %v431
        %v684 = vpop.f32.mrb[0].mxu0
        %v685 = vadd.f32 %v350, %v684
        %v686 = vpop.f32.mrb[0].mxu0
        %v687 = vadd.f32 %v350, %v686
        %688 = vmatprep.mubr.f32.mxu0 0.0
        %689 = vmatmul.mubr.f32.gmra.mrb[0].mxu0 %v434
        %v690 = vpop.f32.mrb[0].mxu0
        %v691 = vadd.f32 %v355, %v690
        %v692 = vpop.f32.mrb[0].mxu0
        %v693 = vadd.f32 %v355, %v692
        %694 = vmatprep.mubr.f32.mxu0 0.0
        %695 = vmatmul.mubr.f32.gmra.mrb[0].mxu0 %v437
        %v696 = vpop.f32.mrb[0].mxu0
        %v697 = vadd.f32 %v360, %v696
        %v698 = vpop.f32.mrb[0].mxu0
        %v699 = vadd.f32 %v360, %v698
        %700 = vmatprep.mubr.f32.mxu0 0.0
        %701 = vmatmul.mubr.f32.gmra.mrb[0].mxu0 %v440
        %v702 = vpop.f32.mrb[0].mxu0
        %v703 = vadd.f32 %v365, %v702
        %v704 = vpop.f32.mrb[0].mxu0
        %v705 = vadd.f32 %v365, %v704
        %706 = vmatprep.mubr.f32.mxu0 0.0
        %707 = vmatmul.mubr.f32.gmra.mrb[0].mxu0 %v443
        %v708 = vpop.f32.mrb[0].mxu0
        %v709 = vadd.f32 %v370, %v708
        %v710 = vpop.f32.mrb[0].mxu0
        %v711 = vadd.f32 %v370, %v710
        %712 = vmatprep.mubr.f32.mxu0 0.0
        %713 = vmatmul.mubr.f32.gmra.mrb[0].mxu0 %v446
        %v714 = vpop.f32.mrb[0].mxu0
        %v715 = vadd.f32 %v375, %v714
        %v716 = vpop.f32.mrb[0].mxu0
        %v717 = vadd.f32 %v375, %v716
        %718 = vmatprep.mubr.f32.mxu0 0.0
        %719 = vmatmul.mubr.f32.gmra.mrb[0].mxu0 %v449
        %v720 = vpop.f32.mrb[0].mxu0
        %v721 = vadd.f32 %v380, %v720
        %v722 = vpop.f32.mrb[0].mxu0
        %v723 = vadd.f32 %v380, %v722
        %724 = vdwg.mxu0
        %v726 = vsel %vm414, %v298, 0
        %v729 = vsel %vm414, %v299, 0
        %v732 = vsel %vm414, %v300, 0
        %v735 = vsel %vm414, %v301, 0
        %v738 = vsel %vm414, %v302, 0
        %v741 = vsel %vm414, %v303, 0
        %v744 = vsel %vm414, %v304, 0
        %v747 = vsel %vm414, %v305, 0
        %749 = vmatprep.subr.mxu0 %v383
        %750 = vmatpush1.msra.mxu0 %v382
        %751 = vmatprep.subr.mxu0 %v387
        %752 = vmatpush1.msra.mxu0 %v386
        %753 = vmatprep.subr.mxu0 %v391
        %754 = vmatpush1.msra.mxu0 %v390
        %755 = vmatprep.subr.mxu0 %v395
        %756 = vmatpush1.msra.mxu0 %v394
        %757 = vmatprep.subr.mxu0 0.0
        %758 = vmatpush1.msra.mxu0 0.0
        %759 = vmatprep.subr.mxu0 0.0
        %760 = vmatpush1.msra.mxu0 0.0
        %761 = vmatprep.subr.mxu0 0.0
        %762 = vmatpush1.msra.mxu0 0.0
        %763 = vmatprep.subr.mxu0 0.0
        %764 = vmatpush1.msra.mxu0 0.0
        %765 = vmatprep.subr.mxu0 0.0
        %766 = vmatpush1.msra.mxu0 0.0
        %767 = vmatprep.subr.mxu0 0.0
        %768 = vmatpush1.msra.mxu0 0.0
        %769 = vmatprep.subr.mxu0 0.0
        %770 = vmatpush1.msra.mxu0 0.0
        %771 = vmatprep.subr.mxu0 0.0
        %772 = vmatpush1.msra.mxu0 0.0
        %773 = vmatprep.subr.mxu0 0.0
        %774 = vmatpush1.msra.mxu0 0.0
        %775 = vmatprep.subr.mxu0 0.0
        %776 = vmatpush1.msra.mxu0 0.0
        %777 = vmatprep.subr.mxu0 0.0
        %778 = vmatpush1.msra.mxu0 0.0
        %779 = vmatprep.subr.mxu0 0.0
        %780 = vmatpush1.msra.mxu0 0.0
        %781 = vmatprep.subr.mxu0 0.0
        %782 = vmatpush1.msra.mxu0 0.0
        %783 = vmatprep.subr.mxu0 0.0
        %784 = vmatpush1.msra.mxu0 0.0
        %785 = vmatprep.subr.mxu0 0.0
        %786 = vmatpush1.msra.mxu0 0.0
        %787 = vmatprep.subr.mxu0 0.0
        %788 = vmatpush1.msra.mxu0 0.0
        %789 = vmatprep.subr.mxu0 0.0
        %790 = vmatpush1.msra.mxu0 0.0
        %791 = vmatprep.subr.mxu0 0.0
        %792 = vmatpush1.msra.mxu0 0.0
        %793 = vmatprep.subr.mxu0 0.0
        %794 = vmatpush1.msra.mxu0 0.0
        %795 = vmatprep.subr.mxu0 0.0
        %796 = vmatpush1.msra.mxu0 0.0
        %797 = vmatprep.subr.mxu0 0.0
        %798 = vmatpush1.msra.mxu0 0.0
        %799 = vmatprep.subr.mxu0 0.0
        %800 = vmatpush1.msra.mxu0 0.0
        %801 = vmatprep.subr.mxu0 0.0
        %802 = vmatpush1.msra.mxu0 0.0
        %803 = vmatprep.subr.mxu0 0.0
        %804 = vmatpush1.msra.mxu0 0.0
        %805 = vmatprep.subr.mxu0 0.0
        %806 = vmatpush1.msra.mxu0 0.0
        %807 = vmatprep.subr.mxu0 0.0
        %808 = vmatpush1.msra.mxu0 0.0
        %809 = vmatprep.subr.mxu0 0.0
        %810 = vmatpush1.msra.mxu0 0.0
        %811 = vmatprep.subr.mxu0 0.0
        %812 = vmatpush1.msra.mxu0 0.0
        %813 = vmatprep.mubr.f32.mxu0 0.0
        %814 = vmatmul.mubr.f32.gmra.mrb[0].mxu0 %v726
        %v815 = vpop.f32.mrb[0].mxu0
        %v816 = vadd.f32 0.0, %v815
        %v817 = vpop.f32.mrb[0].mxu0
        %v818 = vadd.f32 0.0, %v817
        %819 = vmatprep.mubr.f32.mxu0 0.0
        %820 = vmatmul.mubr.f32.gmra.mrb[0].mxu0 %v729
        %v821 = vpop.f32.mrb[0].mxu0
        %v822 = vadd.f32 0.0, %v821
        %v823 = vpop.f32.mrb[0].mxu0
        %v824 = vadd.f32 0.0, %v823
        %825 = vmatprep.mubr.f32.mxu0 0.0
        %826 = vmatmul.mubr.f32.gmra.mrb[0].mxu0 %v732
        %v827 = vpop.f32.mrb[0].mxu0
        %v828 = vadd.f32 0.0, %v827
        %v829 = vpop.f32.mrb[0].mxu0
        %v830 = vadd.f32 0.0, %v829
        %831 = vmatprep.mubr.f32.mxu0 0.0
        %832 = vmatmul.mubr.f32.gmra.mrb[0].mxu0 %v735
        %v833 = vpop.f32.mrb[0].mxu0
        %v834 = vadd.f32 0.0, %v833
        %v835 = vpop.f32.mrb[0].mxu0
        %v836 = vadd.f32 0.0, %v835
        %837 = vmatprep.mubr.f32.mxu0 0.0
        %838 = vmatmul.mubr.f32.gmra.mrb[0].mxu0 %v738
        %v839 = vpop.f32.mrb[0].mxu0
        %v840 = vadd.f32 0.0, %v839
        %v841 = vpop.f32.mrb[0].mxu0
        %v842 = vadd.f32 0.0, %v841
        %843 = vmatprep.mubr.f32.mxu0 0.0
        %844 = vmatmul.mubr.f32.gmra.mrb[0].mxu0 %v741
        %v845 = vpop.f32.mrb[0].mxu0
        %v846 = vadd.f32 0.0, %v845
        %v847 = vpop.f32.mrb[0].mxu0
        %v848 = vadd.f32 0.0, %v847
        %849 = vmatprep.mubr.f32.mxu0 0.0
        %850 = vmatmul.mubr.f32.gmra.mrb[0].mxu0 %v744
        %v851 = vpop.f32.mrb[0].mxu0
        %v852 = vadd.f32 0.0, %v851
        %v853 = vpop.f32.mrb[0].mxu0
        %v854 = vadd.f32 0.0, %v853
        %855 = vmatprep.mubr.f32.mxu0 0.0
        %856 = vmatmul.mubr.f32.gmra.mrb[0].mxu0 %v747
        %v857 = vpop.f32.mrb[0].mxu0
        %v858 = vadd.f32 0.0, %v857
        %v859 = vpop.f32.mrb[0].mxu0
        %v860 = vadd.f32 0.0, %v859
        %861 = vdwg.mxu0
        %862 = vmatprep.subr.mxu0 %v385
        %863 = vmatpush1.msra.mxu0 %v384
        %864 = vmatprep.subr.mxu0 %v389
        %865 = vmatpush1.msra.mxu0 %v388
        %866 = vmatprep.subr.mxu0 %v393
        %867 = vmatpush1.msra.mxu0 %v392
        %868 = vmatprep.subr.mxu0 %v397
        %869 = vmatpush1.msra.mxu0 %v396
        %870 = vmatprep.subr.mxu0 0.0
        %871 = vmatpush1.msra.mxu0 0.0
        %872 = vmatprep.subr.mxu0 0.0
        %873 = vmatpush1.msra.mxu0 0.0
        %874 = vmatprep.subr.mxu0 0.0
        %875 = vmatpush1.msra.mxu0 0.0
        %876 = vmatprep.subr.mxu0 0.0
        %877 = vmatpush1.msra.mxu0 0.0
        %878 = vmatprep.subr.mxu0 0.0
        %879 = vmatpush1.msra.mxu0 0.0
        %880 = vmatprep.subr.mxu0 0.0
        %881 = vmatpush1.msra.mxu0 0.0
        %882 = vmatprep.subr.mxu0 0.0
        %883 = vmatpush1.msra.mxu0 0.0
        %884 = vmatprep.subr.mxu0 0.0
        %885 = vmatpush1.msra.mxu0 0.0
        %886 = vmatprep.subr.mxu0 0.0
        %887 = vmatpush1.msra.mxu0 0.0
        %888 = vmatprep.subr.mxu0 0.0
        %889 = vmatpush1.msra.mxu0 0.0
        %890 = vmatprep.subr.mxu0 0.0
        %891 = vmatpush1.msra.mxu0 0.0
        %892 = vmatprep.subr.mxu0 0.0
        %893 = vmatpush1.msra.mxu0 0.0
        %894 = vmatprep.subr.mxu0 0.0
        %895 = vmatpush1.msra.mxu0 0.0
        %896 = vmatprep.subr.mxu0 0.0
        %897 = vmatpush1.msra.mxu0 0.0
        %898 = vmatprep.subr.mxu0 0.0
        %899 = vmatpush1.msra.mxu0 0.0
        %900 = vmatprep.subr.mxu0 0.0
        %901 = vmatpush1.msra.mxu0 0.0
        %902 = vmatprep.subr.mxu0 0.0
        %903 = vmatpush1.msra.mxu0 0.0
        %904 = vmatprep.subr.mxu0 0.0
        %905 = vmatpush1.msra.mxu0 0.0
        %906 = vmatprep.subr.mxu0 0.0
        %907 = vmatpush1.msra.mxu0 0.0
        %908 = vmatprep.subr.mxu0 0.0
        %909 = vmatpush1.msra.mxu0 0.0
        %910 = vmatprep.subr.mxu0 0.0
        %911 = vmatpush1.msra.mxu0 0.0
        %912 = vmatprep.subr.mxu0 0.0
        %913 = vmatpush1.msra.mxu0 0.0
        %914 = vmatprep.subr.mxu0 0.0
        %915 = vmatpush1.msra.mxu0 0.0
        %916 = vmatprep.subr.mxu0 0.0
        %917 = vmatpush1.msra.mxu0 0.0
        %918 = vmatprep.subr.mxu0 0.0
        %919 = vmatpush1.msra.mxu0 0.0
        %920 = vmatprep.subr.mxu0 0.0
        %921 = vmatpush1.msra.mxu0 0.0
        %922 = vmatprep.subr.mxu0 0.0
        %923 = vmatpush1.msra.mxu0 0.0
        %924 = vmatprep.subr.mxu0 0.0
        %925 = vmatpush1.msra.mxu0 0.0
        %926 = vmatprep.mubr.f32.mxu0 0.0
        %927 = vmatmul.mubr.f32.gmra.mrb[0].mxu0 %v726
        %v928 = vpop.f32.mrb[0].mxu0
        %v929 = vadd.f32 0.0, %v928
        %v930 = vpop.f32.mrb[0].mxu0
        %v931 = vadd.f32 0.0, %v930
        %932 = vmatprep.mubr.f32.mxu0 0.0
        %933 = vmatmul.mubr.f32.gmra.mrb[0].mxu0 %v729
        %v934 = vpop.f32.mrb[0].mxu0
        %v935 = vadd.f32 0.0, %v934
        %v936 = vpop.f32.mrb[0].mxu0
        %v937 = vadd.f32 0.0, %v936
        %938 = vmatprep.mubr.f32.mxu0 0.0
        %939 = vmatmul.mubr.f32.gmra.mrb[0].mxu0 %v732
        %v940 = vpop.f32.mrb[0].mxu0
        %v941 = vadd.f32 0.0, %v940
        %v942 = vpop.f32.mrb[0].mxu0
        %v943 = vadd.f32 0.0, %v942
        %944 = vmatprep.mubr.f32.mxu0 0.0
        %945 = vmatmul.mubr.f32.gmra.mrb[0].mxu0 %v735
        %v946 = vpop.f32.mrb[0].mxu0
        %v947 = vadd.f32 0.0, %v946
        %v948 = vpop.f32.mrb[0].mxu0
        %v949 = vadd.f32 0.0, %v948
        %950 = vmatprep.mubr.f32.mxu0 0.0
        %951 = vmatmul.mubr.f32.gmra.mrb[0].mxu0 %v738
        %v952 = vpop.f32.mrb[0].mxu0
        %v953 = vadd.f32 0.0, %v952
        %v954 = vpop.f32.mrb[0].mxu0
        %v955 = vadd.f32 0.0, %v954
        %956 = vmatprep.mubr.f32.mxu0 0.0
        %957 = vmatmul.mubr.f32.gmra.mrb[0].mxu0 %v741
        %v958 = vpop.f32.mrb[0].mxu0
        %v959 = vadd.f32 0.0, %v958
        %v960 = vpop.f32.mrb[0].mxu0
        %v961 = vadd.f32 0.0, %v960
        %962 = vmatprep.mubr.f32.mxu0 0.0
        %963 = vmatmul.mubr.f32.gmra.mrb[0].mxu0 %v744
        %v964 = vpop.f32.mrb[0].mxu0
        %v965 = vadd.f32 0.0, %v964
        %v966 = vpop.f32.mrb[0].mxu0
        %v967 = vadd.f32 0.0, %v966
        %968 = vmatprep.mubr.f32.mxu0 0.0
        %969 = vmatmul.mubr.f32.gmra.mrb[0].mxu0 %v747
        %v970 = vpop.f32.mrb[0].mxu0
        %v971 = vadd.f32 0.0, %v970
        %v972 = vpop.f32.mrb[0].mxu0
        %v973 = vadd.f32 0.0, %v972
        %974 = vdwg.mxu0
        %v975 = vadd.f32 %v518, %v816
        %v976 = vadd.f32 %v520, %v818
        %v977 = vadd.f32 %v655, %v929
        %v978 = vadd.f32 %v657, %v931
        %v979 = vadd.f32 %v524, %v822
        %v980 = vadd.f32 %v526, %v824
        %v981 = vadd.f32 %v661, %v935
        %v982 = vadd.f32 %v663, %v937
        %v983 = vadd.f32 %v530, %v828
        %v984 = vadd.f32 %v532, %v830
        %v985 = vadd.f32 %v667, %v941
        %v986 = vadd.f32 %v669, %v943
        %v987 = vadd.f32 %v536, %v834
        %v988 = vadd.f32 %v538, %v836
        %v989 = vadd.f32 %v673, %v947
        %v990 = vadd.f32 %v675, %v949
        %v991 = vxor.u32 %v975, 2147483648
        %v992 = vxor.u32 %v976, 2147483648
        %v993 = vxor.u32 %v977, 2147483648
        %v994 = vxor.u32 %v978, 2147483648
        %v995 = vxor.u32 %v979, 2147483648
        %v996 = vxor.u32 %v980, 2147483648
        %v997 = vxor.u32 %v981, 2147483648
        %v998 = vxor.u32 %v982, 2147483648
        %v999 = vxor.u32 %v983, 2147483648
        %v1000 = vxor.u32 %v984, 2147483648
        %v1001 = vxor.u32 %v985, 2147483648
        %v1002 = vxor.u32 %v986, 2147483648
        %v1003 = vxor.u32 %v987, 2147483648
        %v1004 = vxor.u32 %v988, 2147483648
        %v1005 = vxor.u32 %v989, 2147483648
        %v1006 = vxor.u32 %v990, 2147483648
        %v1007 = vmul.f32 %v991, 1.442695
        %v1008 = vpow.pop %v1007
        %v1009 = vmul.f32 %v992, 1.442695
        %v1010 = vpow.pop %v1009
        %v1011 = vmul.f32 %v993, 1.442695
        %v1012 = vpow.pop %v1011
        %v1013 = vmul.f32 %v994, 1.442695
        %v1014 = vpow.pop %v1013
        %v1015 = vmul.f32 %v995, 1.442695
        %v1016 = vpow.pop %v1015
        %v1017 = vmul.f32 %v996, 1.442695
        %v1018 = vpow.pop %v1017
        %v1019 = vmul.f32 %v997, 1.442695
        %v1020 = vpow.pop %v1019
        %v1021 = vmul.f32 %v998, 1.442695
        %v1022 = vpow.pop %v1021
        %v1023 = vmul.f32 %v999, 1.442695
        %v1024 = vpow.pop %v1023
        %v1025 = vmul.f32 %v1000, 1.442695
        %v1026 = vpow.pop %v1025
        %v1027 = vmul.f32 %v1001, 1.442695
        %v1028 = vpow.pop %v1027
        %v1029 = vmul.f32 %v1002, 1.442695
        %v1030 = vpow.pop %v1029
        %v1031 = vmul.f32 %v1003, 1.442695
        %v1032 = vpow.pop %v1031
        %v1033 = vmul.f32 %v1004, 1.442695
        %v1034 = vpow.pop %v1033
        %v1035 = vmul.f32 %v1005, 1.442695
        %v1036 = vpow.pop %v1035
        %v1037 = vmul.f32 %v1006, 1.442695
        %v1038 = vpow.pop %v1037
        %v1039 = vadd.f32 %v1008, 1.0
        %v1040 = vadd.f32 %v1010, 1.0
        %v1041 = vadd.f32 %v1012, 1.0
        %v1042 = vadd.f32 %v1014, 1.0
        %v1043 = vadd.f32 %v1016, 1.0
        %v1044 = vadd.f32 %v1018, 1.0
        %v1045 = vadd.f32 %v1020, 1.0
        %v1046 = vadd.f32 %v1022, 1.0
        %v1047 = vadd.f32 %v1024, 1.0
        %v1048 = vadd.f32 %v1026, 1.0
        %v1049 = vadd.f32 %v1028, 1.0
        %v1050 = vadd.f32 %v1030, 1.0
        %v1051 = vadd.f32 %v1032, 1.0
        %v1052 = vadd.f32 %v1034, 1.0
        %v1053 = vadd.f32 %v1036, 1.0
        %v1054 = vadd.f32 %v1038, 1.0
        %v1055 = vrcp.pop %v1039
        %v1056 = vmul.f32 1.0, %v1055
        %v1057 = vrcp.pop %v1040
        %v1058 = vmul.f32 1.0, %v1057
        %v1059 = vrcp.pop %v1041
        %v1060 = vmul.f32 1.0, %v1059
        %v1061 = vrcp.pop %v1042
        %v1062 = vmul.f32 1.0, %v1061
        %v1063 = vrcp.pop %v1043
        %v1064 = vmul.f32 1.0, %v1063
        %v1065 = vrcp.pop %v1044
        %v1066 = vmul.f32 1.0, %v1065
        %v1067 = vrcp.pop %v1045
        %v1068 = vmul.f32 1.0, %v1067
        %v1069 = vrcp.pop %v1046
        %v1070 = vmul.f32 1.0, %v1069
        %v1071 = vrcp.pop %v1047
        %v1072 = vmul.f32 1.0, %v1071
        %v1073 = vrcp.pop %v1048
        %v1074 = vmul.f32 1.0, %v1073
        %v1075 = vrcp.pop %v1049
        %v1076 = vmul.f32 1.0, %v1075
        %v1077 = vrcp.pop %v1050
        %v1078 = vmul.f32 1.0, %v1077
        %v1079 = vrcp.pop %v1051
        %v1080 = vmul.f32 1.0, %v1079
        %v1081 = vrcp.pop %v1052
        %v1082 = vmul.f32 1.0, %v1081
        %v1083 = vrcp.pop %v1053
        %v1084 = vmul.f32 1.0, %v1083
        %v1085 = vrcp.pop %v1054
        %v1086 = vmul.f32 1.0, %v1085
        %v1087 = vadd.f32 %v542, %v840
        %v1088 = vadd.f32 %v544, %v842
        %v1089 = vadd.f32 %v679, %v953
        %v1090 = vadd.f32 %v681, %v955
        %v1091 = vadd.f32 %v548, %v846
        %v1092 = vadd.f32 %v550, %v848
        %v1093 = vadd.f32 %v685, %v959
        %v1094 = vadd.f32 %v687, %v961
        %v1095 = vadd.f32 %v554, %v852
        %v1096 = vadd.f32 %v556, %v854
        %v1097 = vadd.f32 %v691, %v965
        %v1098 = vadd.f32 %v693, %v967
        %v1099 = vadd.f32 %v560, %v858
        %v1100 = vadd.f32 %v562, %v860
        %v1101 = vadd.f32 %v697, %v971
        %v1102 = vadd.f32 %v699, %v973
        %v1103 = vxor.u32 %v1087, 2147483648
        %v1104 = vxor.u32 %v1088, 2147483648
        %v1105 = vxor.u32 %v1089, 2147483648
        %v1106 = vxor.u32 %v1090, 2147483648
        %v1107 = vxor.u32 %v1091, 2147483648
        %v1108 = vxor.u32 %v1092, 2147483648
        %v1109 = vxor.u32 %v1093, 2147483648
        %v1110 = vxor.u32 %v1094, 2147483648
        %v1111 = vxor.u32 %v1095, 2147483648
        %v1112 = vxor.u32 %v1096, 2147483648
        %v1113 = vxor.u32 %v1097, 2147483648
        %v1114 = vxor.u32 %v1098, 2147483648
        %v1115 = vxor.u32 %v1099, 2147483648
        %v1116 = vxor.u32 %v1100, 2147483648
        %v1117 = vxor.u32 %v1101, 2147483648
        %v1118 = vxor.u32 %v1102, 2147483648
        %v1119 = vmul.f32 %v1103, 1.442695
        %v1120 = vpow.pop %v1119
        %v1121 = vmul.f32 %v1104, 1.442695
        %v1122 = vpow.pop %v1121
        %v1123 = vmul.f32 %v1105, 1.442695
        %v1124 = vpow.pop %v1123
        %v1125 = vmul.f32 %v1106, 1.442695
        %v1126 = vpow.pop %v1125
        %v1127 = vmul.f32 %v1107, 1.442695
        %v1128 = vpow.pop %v1127
        %v1129 = vmul.f32 %v1108, 1.442695
        %v1130 = vpow.pop %v1129
        %v1131 = vmul.f32 %v1109, 1.442695
        %v1132 = vpow.pop %v1131
        %v1133 = vmul.f32 %v1110, 1.442695
        %v1134 = vpow.pop %v1133
        %v1135 = vmul.f32 %v1111, 1.442695
        %v1136 = vpow.pop %v1135
        %v1137 = vmul.f32 %v1112, 1.442695
        %v1138 = vpow.pop %v1137
        %v1139 = vmul.f32 %v1113, 1.442695
        %v1140 = vpow.pop %v1139
        %v1141 = vmul.f32 %v1114, 1.442695
        %v1142 = vpow.pop %v1141
        %v1143 = vmul.f32 %v1115, 1.442695
        %v1144 = vpow.pop %v1143
        %v1145 = vmul.f32 %v1116, 1.442695
        %v1146 = vpow.pop %v1145
        %v1147 = vmul.f32 %v1117, 1.442695
        %v1148 = vpow.pop %v1147
        %v1149 = vmul.f32 %v1118, 1.442695
        %v1150 = vpow.pop %v1149
        %v1151 = vadd.f32 %v1120, 1.0
        %v1152 = vadd.f32 %v1122, 1.0
        %v1153 = vadd.f32 %v1124, 1.0
        %v1154 = vadd.f32 %v1126, 1.0
        %v1155 = vadd.f32 %v1128, 1.0
        %v1156 = vadd.f32 %v1130, 1.0
        %v1157 = vadd.f32 %v1132, 1.0
        %v1158 = vadd.f32 %v1134, 1.0
        %v1159 = vadd.f32 %v1136, 1.0
        %v1160 = vadd.f32 %v1138, 1.0
        %v1161 = vadd.f32 %v1140, 1.0
        %v1162 = vadd.f32 %v1142, 1.0
        %v1163 = vadd.f32 %v1144, 1.0
        %v1164 = vadd.f32 %v1146, 1.0
        %v1165 = vadd.f32 %v1148, 1.0
        %v1166 = vadd.f32 %v1150, 1.0
        %v1167 = vrcp.pop %v1151
        %v1168 = vmul.f32 1.0, %v1167
        %v1169 = vrcp.pop %v1152
        %v1170 = vmul.f32 1.0, %v1169
        %v1171 = vrcp.pop %v1153
        %v1172 = vmul.f32 1.0, %v1171
        %v1173 = vrcp.pop %v1154
        %v1174 = vmul.f32 1.0, %v1173
        %v1175 = vrcp.pop %v1155
        %v1176 = vmul.f32 1.0, %v1175
        %v1177 = vrcp.pop %v1156
        %v1178 = vmul.f32 1.0, %v1177
        %v1179 = vrcp.pop %v1157
        %v1180 = vmul.f32 1.0, %v1179
        %v1181 = vrcp.pop %v1158
        %v1182 = vmul.f32 1.0, %v1181
        %v1183 = vrcp.pop %v1159
        %v1184 = vmul.f32 1.0, %v1183
        %v1185 = vrcp.pop %v1160
        %v1186 = vmul.f32 1.0, %v1185
        %v1187 = vrcp.pop %v1161
        %v1188 = vmul.f32 1.0, %v1187
        %v1189 = vrcp.pop %v1162
        %v1190 = vmul.f32 1.0, %v1189
        %v1191 = vrcp.pop %v1163
        %v1192 = vmul.f32 1.0, %v1191
        %v1193 = vrcp.pop %v1164
        %v1194 = vmul.f32 1.0, %v1193
        %v1195 = vrcp.pop %v1165
        %v1196 = vmul.f32 1.0, %v1195
        %v1197 = vrcp.pop %v1166
        %v1198 = vmul.f32 1.0, %v1197
        %v1199 = vmul.f32 %v1168, %v382
        %v1200 = vmul.f32 %v1170, %v383
        %v1201 = vmul.f32 %v1172, %v384
        %v1202 = vmul.f32 %v1174, %v385
        %v1203 = vmul.f32 %v1176, %v386
        %v1204 = vmul.f32 %v1178, %v387
        %v1205 = vmul.f32 %v1180, %v388
        %v1206 = vmul.f32 %v1182, %v389
        %v1207 = vmul.f32 %v1184, %v390
        %v1208 = vmul.f32 %v1186, %v391
        %v1209 = vmul.f32 %v1188, %v392
        %v1210 = vmul.f32 %v1190, %v393
        %v1211 = vmul.f32 %v1192, %v394
        %v1212 = vmul.f32 %v1194, %v395
        %v1213 = vmul.f32 %v1196, %v396
        %v1214 = vmul.f32 %v1198, %v397
        %v1216 = vsel %vm414, %v306, 0
        %v1219 = vsel %vm414, %v307, 0
        %v1222 = vsel %vm414, %v308, 0
        %v1225 = vsel %vm414, %v309, 0
        %1227 = vmatprep.subr.mxu0 %v1200
        %1228 = vmatpush1.msra.mxu0 %v1199
        %1229 = vmatprep.subr.mxu0 %v1204
        %1230 = vmatpush1.msra.mxu0 %v1203
        %1231 = vmatprep.subr.mxu0 %v1208
        %1232 = vmatpush1.msra.mxu0 %v1207
        %1233 = vmatprep.subr.mxu0 %v1212
        %1234 = vmatpush1.msra.mxu0 %v1211
        %1235 = vmatprep.subr.mxu0 0.0
        %1236 = vmatpush1.msra.mxu0 0.0
        %1237 = vmatprep.subr.mxu0 0.0
        %1238 = vmatpush1.msra.mxu0 0.0
        %1239 = vmatprep.subr.mxu0 0.0
        %1240 = vmatpush1.msra.mxu0 0.0
        %1241 = vmatprep.subr.mxu0 0.0
        %1242 = vmatpush1.msra.mxu0 0.0
        %1243 = vmatprep.subr.mxu0 0.0
        %1244 = vmatpush1.msra.mxu0 0.0
        %1245 = vmatprep.subr.mxu0 0.0
        %1246 = vmatpush1.msra.mxu0 0.0
        %1247 = vmatprep.subr.mxu0 0.0
        %1248 = vmatpush1.msra.mxu0 0.0
        %1249 = vmatprep.subr.mxu0 0.0
        %1250 = vmatpush1.msra.mxu0 0.0
        %1251 = vmatprep.subr.mxu0 0.0
        %1252 = vmatpush1.msra.mxu0 0.0
        %1253 = vmatprep.subr.mxu0 0.0
        %1254 = vmatpush1.msra.mxu0 0.0
        %1255 = vmatprep.subr.mxu0 0.0
        %1256 = vmatpush1.msra.mxu0 0.0
        %1257 = vmatprep.subr.mxu0 0.0
        %1258 = vmatpush1.msra.mxu0 0.0
        %1259 = vmatprep.subr.mxu0 0.0
        %1260 = vmatpush1.msra.mxu0 0.0
        %1261 = vmatprep.subr.mxu0 0.0
        %1262 = vmatpush1.msra.mxu0 0.0
        %1263 = vmatprep.subr.mxu0 0.0
        %1264 = vmatpush1.msra.mxu0 0.0
        %1265 = vmatprep.subr.mxu0 0.0
        %1266 = vmatpush1.msra.mxu0 0.0
        %1267 = vmatprep.subr.mxu0 0.0
        %1268 = vmatpush1.msra.mxu0 0.0
        %1269 = vmatprep.subr.mxu0 0.0
        %1270 = vmatpush1.msra.mxu0 0.0
        %1271 = vmatprep.subr.mxu0 0.0
        %1272 = vmatpush1.msra.mxu0 0.0
        %1273 = vmatprep.subr.mxu0 0.0
        %1274 = vmatpush1.msra.mxu0 0.0
        %1275 = vmatprep.subr.mxu0 0.0
        %1276 = vmatpush1.msra.mxu0 0.0
        %1277 = vmatprep.subr.mxu0 0.0
        %1278 = vmatpush1.msra.mxu0 0.0
        %1279 = vmatprep.subr.mxu0 0.0
        %1280 = vmatpush1.msra.mxu0 0.0
        %1281 = vmatprep.subr.mxu0 0.0
        %1282 = vmatpush1.msra.mxu0 0.0
        %1283 = vmatprep.subr.mxu0 0.0
        %1284 = vmatpush1.msra.mxu0 0.0
        %1285 = vmatprep.subr.mxu0 0.0
        %1286 = vmatpush1.msra.mxu0 0.0
        %1287 = vmatprep.subr.mxu0 0.0
        %1288 = vmatpush1.msra.mxu0 0.0
        %1289 = vmatprep.subr.mxu0 0.0
        %1290 = vmatpush1.msra.mxu0 0.0
        %1291 = vmatprep.mubr.f32.mxu0 0.0
        %1292 = vmatmul.mubr.f32.gmra.mrb[0].mxu0 %v1216
        %v1293 = vpop.f32.mrb[0].mxu0
        %v1294 = vadd.f32 0.0, %v1293
        %v1295 = vpop.f32.mrb[0].mxu0
        %v1296 = vadd.f32 0.0, %v1295
        %1297 = vmatprep.mubr.f32.mxu0 0.0
        %1298 = vmatmul.mubr.f32.gmra.mrb[0].mxu0 %v1219
        %v1299 = vpop.f32.mrb[0].mxu0
        %v1300 = vadd.f32 0.0, %v1299
        %v1301 = vpop.f32.mrb[0].mxu0
        %v1302 = vadd.f32 0.0, %v1301
        %1303 = vmatprep.mubr.f32.mxu0 0.0
        %1304 = vmatmul.mubr.f32.gmra.mrb[0].mxu0 %v1222
        %v1305 = vpop.f32.mrb[0].mxu0
        %v1306 = vadd.f32 0.0, %v1305
        %v1307 = vpop.f32.mrb[0].mxu0
        %v1308 = vadd.f32 0.0, %v1307
        %1309 = vmatprep.mubr.f32.mxu0 0.0
        %1310 = vmatmul.mubr.f32.gmra.mrb[0].mxu0 %v1225
        %v1311 = vpop.f32.mrb[0].mxu0
        %v1312 = vadd.f32 0.0, %v1311
        %v1313 = vpop.f32.mrb[0].mxu0
        %v1314 = vadd.f32 0.0, %v1313
        %1315 = vdwg.mxu0
        %1316 = vmatprep.subr.mxu0 %v1202
        %1317 = vmatpush1.msra.mxu0 %v1201
        %1318 = vmatprep.subr.mxu0 %v1206
        %1319 = vmatpush1.msra.mxu0 %v1205
        %1320 = vmatprep.subr.mxu0 %v1210
        %1321 = vmatpush1.msra.mxu0 %v1209
        %1322 = vmatprep.subr.mxu0 %v1214
        %1323 = vmatpush1.msra.mxu0 %v1213
        %1324 = vmatprep.subr.mxu0 0.0
        %1325 = vmatpush1.msra.mxu0 0.0
        %1326 = vmatprep.subr.mxu0 0.0
        %1327 = vmatpush1.msra.mxu0 0.0
        %1328 = vmatprep.subr.mxu0 0.0
        %1329 = vmatpush1.msra.mxu0 0.0
        %1330 = vmatprep.subr.mxu0 0.0
        %1331 = vmatpush1.msra.mxu0 0.0
        %1332 = vmatprep.subr.mxu0 0.0
        %1333 = vmatpush1.msra.mxu0 0.0
        %1334 = vmatprep.subr.mxu0 0.0
        %1335 = vmatpush1.msra.mxu0 0.0
        %1336 = vmatprep.subr.mxu0 0.0
        %1337 = vmatpush1.msra.mxu0 0.0
        %1338 = vmatprep.subr.mxu0 0.0
        %1339 = vmatpush1.msra.mxu0 0.0
        %1340 = vmatprep.subr.mxu0 0.0
        %1341 = vmatpush1.msra.mxu0 0.0
        %1342 = vmatprep.subr.mxu0 0.0
        %1343 = vmatpush1.msra.mxu0 0.0
        %1344 = vmatprep.subr.mxu0 0.0
        %1345 = vmatpush1.msra.mxu0 0.0
        %1346 = vmatprep.subr.mxu0 0.0
        %1347 = vmatpush1.msra.mxu0 0.0
        %1348 = vmatprep.subr.mxu0 0.0
        %1349 = vmatpush1.msra.mxu0 0.0
        %1350 = vmatprep.subr.mxu0 0.0
        %1351 = vmatpush1.msra.mxu0 0.0
        %1352 = vmatprep.subr.mxu0 0.0
        %1353 = vmatpush1.msra.mxu0 0.0
        %1354 = vmatprep.subr.mxu0 0.0
        %1355 = vmatpush1.msra.mxu0 0.0
        %1356 = vmatprep.subr.mxu0 0.0
        %1357 = vmatpush1.msra.mxu0 0.0
        %1358 = vmatprep.subr.mxu0 0.0
        %1359 = vmatpush1.msra.mxu0 0.0
        %1360 = vmatprep.subr.mxu0 0.0
        %1361 = vmatpush1.msra.mxu0 0.0
        %1362 = vmatprep.subr.mxu0 0.0
        %1363 = vmatpush1.msra.mxu0 0.0
        %1364 = vmatprep.subr.mxu0 0.0
        %1365 = vmatpush1.msra.mxu0 0.0
        %1366 = vmatprep.subr.mxu0 0.0
        %1367 = vmatpush1.msra.mxu0 0.0
        %1368 = vmatprep.subr.mxu0 0.0
        %1369 = vmatpush1.msra.mxu0 0.0
        %1370 = vmatprep.subr.mxu0 0.0
        %1371 = vmatpush1.msra.mxu0 0.0
        %1372 = vmatprep.subr.mxu0 0.0
        %1373 = vmatpush1.msra.mxu0 0.0
        %1374 = vmatprep.subr.mxu0 0.0
        %1375 = vmatpush1.msra.mxu0 0.0
        %1376 = vmatprep.subr.mxu0 0.0
        %1377 = vmatpush1.msra.mxu0 0.0
        %1378 = vmatprep.subr.mxu0 0.0
        %1379 = vmatpush1.msra.mxu0 0.0
        %1380 = vmatprep.mubr.f32.mxu0 0.0
        %1381 = vmatmul.mubr.f32.gmra.mrb[0].mxu0 %v1216
        %v1382 = vpop.f32.mrb[0].mxu0
        %v1383 = vadd.f32 0.0, %v1382
        %v1384 = vpop.f32.mrb[0].mxu0
        %v1385 = vadd.f32 0.0, %v1384
        %1386 = vmatprep.mubr.f32.mxu0 0.0
        %1387 = vmatmul.mubr.f32.gmra.mrb[0].mxu0 %v1219
        %v1388 = vpop.f32.mrb[0].mxu0
        %v1389 = vadd.f32 0.0, %v1388
        %v1390 = vpop.f32.mrb[0].mxu0
        %v1391 = vadd.f32 0.0, %v1390
        %1392 = vmatprep.mubr.f32.mxu0 0.0
        %1393 = vmatmul.mubr.f32.gmra.mrb[0].mxu0 %v1222
        %v1394 = vpop.f32.mrb[0].mxu0
        %v1395 = vadd.f32 0.0, %v1394
        %v1396 = vpop.f32.mrb[0].mxu0
        %v1397 = vadd.f32 0.0, %v1396
        %1398 = vmatprep.mubr.f32.mxu0 0.0
        %1399 = vmatmul.mubr.f32.gmra.mrb[0].mxu0 %v1225
        %v1400 = vpop.f32.mrb[0].mxu0
        %v1401 = vadd.f32 0.0, %v1400
        %v1402 = vpop.f32.mrb[0].mxu0
        %v1403 = vadd.f32 0.0, %v1402
        %1404 = vdwg.mxu0
        %v1405 = vsub.f32 1.0, %v1056
        %v1406 = vsub.f32 1.0, %v1058
        %v1407 = vsub.f32 1.0, %v1060
        %v1408 = vsub.f32 1.0, %v1062
        %v1409 = vsub.f32 1.0, %v1064
        %v1410 = vsub.f32 1.0, %v1066
        %v1411 = vsub.f32 1.0, %v1068
        %v1412 = vsub.f32 1.0, %v1070
        %v1413 = vsub.f32 1.0, %v1072
        %v1414 = vsub.f32 1.0, %v1074
        %v1415 = vsub.f32 1.0, %v1076
        %v1416 = vsub.f32 1.0, %v1078
        %v1417 = vsub.f32 1.0, %v1080
        %v1418 = vsub.f32 1.0, %v1082
        %v1419 = vsub.f32 1.0, %v1084
        %v1420 = vsub.f32 1.0, %v1086
        %v1421 = vmul.f32 %v1405, %v382
        %v1422 = vmul.f32 %v1406, %v383
        %v1423 = vmul.f32 %v1407, %v384
        %v1424 = vmul.f32 %v1408, %v385
        %v1425 = vmul.f32 %v1409, %v386
        %v1426 = vmul.f32 %v1410, %v387
        %v1427 = vmul.f32 %v1411, %v388
        %v1428 = vmul.f32 %v1412, %v389
        %v1429 = vmul.f32 %v1413, %v390
        %v1430 = vmul.f32 %v1414, %v391
        %v1431 = vmul.f32 %v1415, %v392
        %v1432 = vmul.f32 %v1416, %v393
        %v1433 = vmul.f32 %v1417, %v394
        %v1434 = vmul.f32 %v1418, %v395
        %v1435 = vmul.f32 %v1419, %v396
        %v1436 = vmul.f32 %v1420, %v397
        %v1437 = vadd.f32 %v566, %v1294
        %v1438 = vadd.f32 %v568, %v1296
        %v1439 = vadd.f32 %v703, %v1383
        %v1440 = vadd.f32 %v705, %v1385
        %v1441 = vadd.f32 %v572, %v1300
        %v1442 = vadd.f32 %v574, %v1302
        %v1443 = vadd.f32 %v709, %v1389
        %v1444 = vadd.f32 %v711, %v1391
        %v1445 = vadd.f32 %v578, %v1306
        %v1446 = vadd.f32 %v580, %v1308
        %v1447 = vadd.f32 %v715, %v1395
        %v1448 = vadd.f32 %v717, %v1397
        %v1449 = vadd.f32 %v584, %v1312
        %v1450 = vadd.f32 %v586, %v1314
        %v1451 = vadd.f32 %v721, %v1401
        %v1452 = vadd.f32 %v723, %v1403
        %v1453 = vtanh.pop %v1437
        %v1454 = vtanh.pop %v1438
        %v1455 = vtanh.pop %v1439
        %v1456 = vtanh.pop %v1440
        %v1457 = vtanh.pop %v1441
        %v1458 = vtanh.pop %v1442
        %v1459 = vtanh.pop %v1443
        %v1460 = vtanh.pop %v1444
        %v1461 = vtanh.pop %v1445
        %v1462 = vtanh.pop %v1446
        %v1463 = vtanh.pop %v1447
        %v1464 = vtanh.pop %v1448
        %v1465 = vtanh.pop %v1449
        %v1466 = vtanh.pop %v1450
        %v1467 = vtanh.pop %v1451
        %v1468 = vtanh.pop %v1452
        %v1469 = vmul.f32 %v1056, %v1453
        %v1470 = vmul.f32 %v1058, %v1454
        %v1471 = vmul.f32 %v1060, %v1455
        %v1472 = vmul.f32 %v1062, %v1456
        %v1473 = vmul.f32 %v1064, %v1457
        %v1474 = vmul.f32 %v1066, %v1458
        %v1475 = vmul.f32 %v1068, %v1459
        %v1476 = vmul.f32 %v1070, %v1460
        %v1477 = vmul.f32 %v1072, %v1461
        %v1478 = vmul.f32 %v1074, %v1462
        %v1479 = vmul.f32 %v1076, %v1463
        %v1480 = vmul.f32 %v1078, %v1464
        %v1481 = vmul.f32 %v1080, %v1465
        %v1482 = vmul.f32 %v1082, %v1466
        %v1483 = vmul.f32 %v1084, %v1467
        %v1484 = vmul.f32 %v1086, %v1468
        %v1485 = vadd.f32 %v1421, %v1469
        %v1486 = vadd.f32 %v1422, %v1470
        %v1487 = vadd.f32 %v1423, %v1471
        %v1488 = vadd.f32 %v1424, %v1472
        %v1489 = vadd.f32 %v1425, %v1473
        %v1490 = vadd.f32 %v1426, %v1474
        %v1491 = vadd.f32 %v1427, %v1475
        %v1492 = vadd.f32 %v1428, %v1476
        %v1493 = vadd.f32 %v1429, %v1477
        %v1494 = vadd.f32 %v1430, %v1478
        %v1495 = vadd.f32 %v1431, %v1479
        %v1496 = vadd.f32 %v1432, %v1480
        %v1497 = vadd.f32 %v1433, %v1481
        %v1498 = vadd.f32 %v1434, %v1482
        %v1499 = vadd.f32 %v1435, %v1483
        %v1500 = vadd.f32 %v1436, %v1484
        %1501 = vst [vmem:[%s261] sm:$0xff] %v1485
        %1502 = vst [vmem:[%s261 + $0x8] sm:$0xff] %v1486
        %1503 = vst [vmem:[%s261 + $0x10] sm:$0xff] %v1487
        %1504 = vst [vmem:[%s261 + $0x18] sm:$0xff] %v1488
        %1505 = vst [vmem:[%s261 + $0x20] sm:$0xff] %v1489
        %1506 = vst [vmem:[%s261 + $0x28] sm:$0xff] %v1490
        %1507 = vst [vmem:[%s261 + $0x30] sm:$0xff] %v1491
        %1508 = vst [vmem:[%s261 + $0x38] sm:$0xff] %v1492
        %1509 = vst [vmem:[%s261 + $0x40] sm:$0xff] %v1493
        %1510 = vst [vmem:[%s261 + $0x48] sm:$0xff] %v1494
        %1511 = vst [vmem:[%s261 + $0x50] sm:$0xff] %v1495
        %1512 = vst [vmem:[%s261 + $0x58] sm:$0xff] %v1496
        %1513 = vst [vmem:[%s261 + $0x60] sm:$0xff] %v1497
        %1514 = vst [vmem:[%s261 + $0x68] sm:$0xff] %v1498
        %1515 = vst [vmem:[%s261 + $0x70] sm:$0xff] %v1499
        %1516 = vst [vmem:[%s261 + $0x78] sm:$0xff] %v1500
        %s1517 = scalar_lea.vmem %s235, 128 [#allocation3]
        %v1518 = vld [vmem:[%s1517] sm:$0xff]
        %v1519 = vld [vmem:[%s1517 + $0x8] sm:$0xff]
        %v1520 = vld [vmem:[%s1517 + $0x10] sm:$0xff]
        %v1521 = vld [vmem:[%s1517 + $0x18] sm:$0xff]
        %v1522 = vld [vmem:[%s1517 + $0x20] sm:$0xff]
        %v1523 = vld [vmem:[%s1517 + $0x28] sm:$0xff]
        %v1524 = vld [vmem:[%s1517 + $0x30] sm:$0xff]
        %v1525 = vld [vmem:[%s1517 + $0x38] sm:$0xff]
        %v1526 = vld [vmem:[%s1517 + $0x40] sm:$0xff]
        %v1527 = vld [vmem:[%s1517 + $0x48] sm:$0xff]
        %v1528 = vld [vmem:[%s1517 + $0x50] sm:$0xff]
        %v1529 = vld [vmem:[%s1517 + $0x58] sm:$0xff]
        %v1530 = vld [vmem:[%s1517 + $0x60] sm:$0xff]
        %v1531 = vld [vmem:[%s1517 + $0x68] sm:$0xff]
        %v1532 = vld [vmem:[%s1517 + $0x70] sm:$0xff]
        %v1533 = vld [vmem:[%s1517 + $0x78] sm:$0xff]
        %1534 = vmatprep.subr.mxu0 %v1519
        %1535 = vmatpush1.msra.mxu0 %v1518
        %1536 = vmatprep.subr.mxu0 %v1523
        %1537 = vmatpush1.msra.mxu0 %v1522
        %1538 = vmatprep.subr.mxu0 %v1527
        %1539 = vmatpush1.msra.mxu0 %v1526
        %1540 = vmatprep.subr.mxu0 %v1531
        %1541 = vmatpush1.msra.mxu0 %v1530
        %1542 = vmatprep.subr.mxu0 0.0
        %1543 = vmatpush1.msra.mxu0 0.0
        %1544 = vmatprep.subr.mxu0 0.0
        %1545 = vmatpush1.msra.mxu0 0.0
        %1546 = vmatprep.subr.mxu0 0.0
        %1547 = vmatpush1.msra.mxu0 0.0
        %1548 = vmatprep.subr.mxu0 0.0
        %1549 = vmatpush1.msra.mxu0 0.0
        %1550 = vmatprep.subr.mxu0 0.0
        %1551 = vmatpush1.msra.mxu0 0.0
        %1552 = vmatprep.subr.mxu0 0.0
        %1553 = vmatpush1.msra.mxu0 0.0
        %1554 = vmatprep.subr.mxu0 0.0
        %1555 = vmatpush1.msra.mxu0 0.0
        %1556 = vmatprep.subr.mxu0 0.0
        %1557 = vmatpush1.msra.mxu0 0.0
        %1558 = vmatprep.subr.mxu0 0.0
        %1559 = vmatpush1.msra.mxu0 0.0
        %1560 = vmatprep.subr.mxu0 0.0
        %1561 = vmatpush1.msra.mxu0 0.0
        %1562 = vmatprep.subr.mxu0 0.0
        %1563 = vmatpush1.msra.mxu0 0.0
        %1564 = vmatprep.subr.mxu0 0.0
        %1565 = vmatpush1.msra.mxu0 0.0
        %1566 = vmatprep.subr.mxu0 0.0
        %1567 = vmatpush1.msra.mxu0 0.0
        %1568 = vmatprep.subr.mxu0 0.0
        %1569 = vmatpush1.msra.mxu0 0.0
        %1570 = vmatprep.subr.mxu0 0.0
        %1571 = vmatpush1.msra.mxu0 0.0
        %1572 = vmatprep.subr.mxu0 0.0
        %1573 = vmatpush1.msra.mxu0 0.0
        %1574 = vmatprep.subr.mxu0 0.0
        %1575 = vmatpush1.msra.mxu0 0.0
        %1576 = vmatprep.subr.mxu0 0.0
        %1577 = vmatpush1.msra.mxu0 0.0
        %1578 = vmatprep.subr.mxu0 0.0
        %1579 = vmatpush1.msra.mxu0 0.0
        %1580 = vmatprep.subr.mxu0 0.0
        %1581 = vmatpush1.msra.mxu0 0.0
        %1582 = vmatprep.subr.mxu0 0.0
        %1583 = vmatpush1.msra.mxu0 0.0
        %1584 = vmatprep.subr.mxu0 0.0
        %1585 = vmatpush1.msra.mxu0 0.0
        %1586 = vmatprep.subr.mxu0 0.0
        %1587 = vmatpush1.msra.mxu0 0.0
        %1588 = vmatprep.subr.mxu0 0.0
        %1589 = vmatpush1.msra.mxu0 0.0
        %1590 = vmatprep.subr.mxu0 0.0
        %1591 = vmatpush1.msra.mxu0 0.0
        %1592 = vmatprep.subr.mxu0 0.0
        %1593 = vmatpush1.msra.mxu0 0.0
        %1594 = vmatprep.subr.mxu0 0.0
        %1595 = vmatpush1.msra.mxu0 0.0
        %1596 = vmatprep.subr.mxu0 0.0
        %1597 = vmatpush1.msra.mxu0 0.0
        %1598 = vmatprep.mubr.f32.mxu0 0.0
        %1599 = vmatmul.mubr.f32.gmra.mrb[0].mxu0 %v416
        %v1600 = vpop.f32.mrb[0].mxu0
        %v1601 = vadd.f32 %v325, %v1600
        %v1602 = vpop.f32.mrb[0].mxu0
        %v1603 = vadd.f32 %v325, %v1602
        %1604 = vmatprep.mubr.f32.mxu0 0.0
        %1605 = vmatmul.mubr.f32.gmra.mrb[0].mxu0 %v419
        %v1606 = vpop.f32.mrb[0].mxu0
        %v1607 = vadd.f32 %v330, %v1606
        %v1608 = vpop.f32.mrb[0].mxu0
        %v1609 = vadd.f32 %v330, %v1608
        %1610 = vmatprep.mubr.f32.mxu0 0.0
        %1611 = vmatmul.mubr.f32.gmra.mrb[0].mxu0 %v422
        %v1612 = vpop.f32.mrb[0].mxu0
        %v1613 = vadd.f32 %v335, %v1612
        %v1614 = vpop.f32.mrb[0].mxu0
        %v1615 = vadd.f32 %v335, %v1614
        %1616 = vmatprep.mubr.f32.mxu0 0.0
        %1617 = vmatmul.mubr.f32.gmra.mrb[0].mxu0 %v425
        %v1618 = vpop.f32.mrb[0].mxu0
        %v1619 = vadd.f32 %v340, %v1618
        %v1620 = vpop.f32.mrb[0].mxu0
        %v1621 = vadd.f32 %v340, %v1620
        %1622 = vmatprep.mubr.f32.mxu0 0.0
        %1623 = vmatmul.mubr.f32.gmra.mrb[0].mxu0 %v428
        %v1624 = vpop.f32.mrb[0].mxu0
        %v1625 = vadd.f32 %v345, %v1624
        %v1626 = vpop.f32.mrb[0].mxu0
        %v1627 = vadd.f32 %v345, %v1626
        %1628 = vmatprep.mubr.f32.mxu0 0.0
        %1629 = vmatmul.mubr.f32.gmra.mrb[0].mxu0 %v431
        %v1630 = vpop.f32.mrb[0].mxu0
        %v1631 = vadd.f32 %v350, %v1630
        %v1632 = vpop.f32.mrb[0].mxu0
        %v1633 = vadd.f32 %v350, %v1632
        %1634 = vmatprep.mubr.f32.mxu0 0.0
        %1635 = vmatmul.mubr.f32.gmra.mrb[0].mxu0 %v434
        %v1636 = vpop.f32.mrb[0].mxu0
        %v1637 = vadd.f32 %v355, %v1636
        %v1638 = vpop.f32.mrb[0].mxu0
        %v1639 = vadd.f32 %v355, %v1638
        %1640 = vmatprep.mubr.f32.mxu0 0.0
        %1641 = vmatmul.mubr.f32.gmra.mrb[0].mxu0 %v437
        %v1642 = vpop.f32.mrb[0].mxu0
        %v1643 = vadd.f32 %v360, %v1642
        %v1644 = vpop.f32.mrb[0].mxu0
        %v1645 = vadd.f32 %v360, %v1644
        %1646 = vmatprep.mubr.f32.mxu0 0.0
        %1647 = vmatmul.mubr.f32.gmra.mrb[0].mxu0 %v440
        %v1648 = vpop.f32.mrb[0].mxu0
        %v1649 = vadd.f32 %v365, %v1648
        %v1650 = vpop.f32.mrb[0].mxu0
        %v1651 = vadd.f32 %v365, %v1650
        %1652 = vmatprep.mubr.f32.mxu0 0.0
        %1653 = vmatmul.mubr.f32.gmra.mrb[0].mxu0 %v443
        %v1654 = vpop.f32.mrb[0].mxu0
        %v1655 = vadd.f32 %v370, %v1654
        %v1656 = vpop.f32.mrb[0].mxu0
        %v1657 = vadd.f32 %v370, %v1656
        %1658 = vmatprep.mubr.f32.mxu0 0.0
        %1659 = vmatmul.mubr.f32.gmra.mrb[0].mxu0 %v446
        %v1660 = vpop.f32.mrb[0].mxu0
        %v1661 = vadd.f32 %v375, %v1660
        %v1662 = vpop.f32.mrb[0].mxu0
        %v1663 = vadd.f32 %v375, %v1662
        %1664 = vmatprep.mubr.f32.mxu0 0.0
        %1665 = vmatmul.mubr.f32.gmra.mrb[0].mxu0 %v449
        %v1666 = vpop.f32.mrb[0].mxu0
        %v1667 = vadd.f32 %v380, %v1666
        %v1668 = vpop.f32.mrb[0].mxu0
        %v1669 = vadd.f32 %v380, %v1668
        %1670 = vdwg.mxu0
        %1671 = vmatprep.subr.mxu0 %v1521
        %1672 = vmatpush1.msra.mxu0 %v1520
        %1673 = vmatprep.subr.mxu0 %v1525
        %1674 = vmatpush1.msra.mxu0 %v1524
        %1675 = vmatprep.subr.mxu0 %v1529
        %1676 = vmatpush1.msra.mxu0 %v1528
        %1677 = vmatprep.subr.mxu0 %v1533
        %1678 = vmatpush1.msra.mxu0 %v1532
        %1679 = vmatprep.subr.mxu0 0.0
        %1680 = vmatpush1.msra.mxu0 0.0
        %1681 = vmatprep.subr.mxu0 0.0
        %1682 = vmatpush1.msra.mxu0 0.0
        %1683 = vmatprep.subr.mxu0 0.0
        %1684 = vmatpush1.msra.mxu0 0.0
        %1685 = vmatprep.subr.mxu0 0.0
        %1686 = vmatpush1.msra.mxu0 0.0
        %1687 = vmatprep.subr.mxu0 0.0
        %1688 = vmatpush1.msra.mxu0 0.0
        %1689 = vmatprep.subr.mxu0 0.0
        %1690 = vmatpush1.msra.mxu0 0.0
        %1691 = vmatprep.subr.mxu0 0.0
        %1692 = vmatpush1.msra.mxu0 0.0
        %1693 = vmatprep.subr.mxu0 0.0
        %1694 = vmatpush1.msra.mxu0 0.0
        %1695 = vmatprep.subr.mxu0 0.0
        %1696 = vmatpush1.msra.mxu0 0.0
        %1697 = vmatprep.subr.mxu0 0.0
        %1698 = vmatpush1.msra.mxu0 0.0
        %1699 = vmatprep.subr.mxu0 0.0
        %1700 = vmatpush1.msra.mxu0 0.0
        %1701 = vmatprep.subr.mxu0 0.0
        %1702 = vmatpush1.msra.mxu0 0.0
        %1703 = vmatprep.subr.mxu0 0.0
        %1704 = vmatpush1.msra.mxu0 0.0
        %1705 = vmatprep.subr.mxu0 0.0
        %1706 = vmatpush1.msra.mxu0 0.0
        %1707 = vmatprep.subr.mxu0 0.0
        %1708 = vmatpush1.msra.mxu0 0.0
        %1709 = vmatprep.subr.mxu0 0.0
        %1710 = vmatpush1.msra.mxu0 0.0
        %1711 = vmatprep.subr.mxu0 0.0
        %1712 = vmatpush1.msra.mxu0 0.0
        %1713 = vmatprep.subr.mxu0 0.0
        %1714 = vmatpush1.msra.mxu0 0.0
        %1715 = vmatprep.subr.mxu0 0.0
        %1716 = vmatpush1.msra.mxu0 0.0
        %1717 = vmatprep.subr.mxu0 0.0
        %1718 = vmatpush1.msra.mxu0 0.0
        %1719 = vmatprep.subr.mxu0 0.0
        %1720 = vmatpush1.msra.mxu0 0.0
        %1721 = vmatprep.subr.mxu0 0.0
        %1722 = vmatpush1.msra.mxu0 0.0
        %1723 = vmatprep.subr.mxu0 0.0
        %1724 = vmatpush1.msra.mxu0 0.0
        %1725 = vmatprep.subr.mxu0 0.0
        %1726 = vmatpush1.msra.mxu0 0.0
        %1727 = vmatprep.subr.mxu0 0.0
        %1728 = vmatpush1.msra.mxu0 0.0
        %1729 = vmatprep.subr.mxu0 0.0
        %1730 = vmatpush1.msra.mxu0 0.0
        %1731 = vmatprep.subr.mxu0 0.0
        %1732 = vmatpush1.msra.mxu0 0.0
        %1733 = vmatprep.subr.mxu0 0.0
        %1734 = vmatpush1.msra.mxu0 0.0
        %1735 = vmatprep.mubr.f32.mxu0 0.0
        %1736 = vmatmul.mubr.f32.gmra.mrb[0].mxu0 %v416
        %v1737 = vpop.f32.mrb[0].mxu0
        %v1738 = vadd.f32 %v325, %v1737
        %v1739 = vpop.f32.mrb[0].mxu0
        %v1740 = vadd.f32 %v325, %v1739
        %1741 = vmatprep.mubr.f32.mxu0 0.0
        %1742 = vmatmul.mubr.f32.gmra.mrb[0].mxu0 %v419
        %v1743 = vpop.f32.mrb[0].mxu0
        %v1744 = vadd.f32 %v330, %v1743
        %v1745 = vpop.f32.mrb[0].mxu0
        %v1746 = vadd.f32 %v330, %v1745
        %1747 = vmatprep.mubr.f32.mxu0 0.0
        %1748 = vmatmul.mubr.f32.gmra.mrb[0].mxu0 %v422
        %v1749 = vpop.f32.mrb[0].mxu0
        %v1750 = vadd.f32 %v335, %v1749
        %v1751 = vpop.f32.mrb[0].mxu0
        %v1752 = vadd.f32 %v335, %v1751
        %1753 = vmatprep.mubr.f32.mxu0 0.0
        %1754 = vmatmul.mubr.f32.gmra.mrb[0].mxu0 %v425
        %v1755 = vpop.f32.mrb[0].mxu0
        %v1756 = vadd.f32 %v340, %v1755
        %v1757 = vpop.f32.mrb[0].mxu0
        %v1758 = vadd.f32 %v340, %v1757
        %1759 = vmatprep.mubr.f32.mxu0 0.0
        %1760 = vmatmul.mubr.f32.gmra.mrb[0].mxu0 %v428
        %v1761 = vpop.f32.mrb[0].mxu0
        %v1762 = vadd.f32 %v345, %v1761
        %v1763 = vpop.f32.mrb[0].mxu0
        %v1764 = vadd.f32 %v345, %v1763
        %1765 = vmatprep.mubr.f32.mxu0 0.0
        %1766 = vmatmul.mubr.f32.gmra.mrb[0].mxu0 %v431
        %v1767 = vpop.f32.mrb[0].mxu0
        %v1768 = vadd.f32 %v350, %v1767
        %v1769 = vpop.f32.mrb[0].mxu0
        %v1770 = vadd.f32 %v350, %v1769
        %1771 = vmatprep.mubr.f32.mxu0 0.0
        %1772 = vmatmul.mubr.f32.gmra.mrb[0].mxu0 %v434
        %v1773 = vpop.f32.mrb[0].mxu0
        %v1774 = vadd.f32 %v355, %v1773
        %v1775 = vpop.f32.mrb[0].mxu0
        %v1776 = vadd.f32 %v355, %v1775
        %1777 = vmatprep.mubr.f32.mxu0 0.0
        %1778 = vmatmul.mubr.f32.gmra.mrb[0].mxu0 %v437
        %v1779 = vpop.f32.mrb[0].mxu0
        %v1780 = vadd.f32 %v360, %v1779
        %v1781 = vpop.f32.mrb[0].mxu0
        %v1782 = vadd.f32 %v360, %v1781
        %1783 = vmatprep.mubr.f32.mxu0 0.0
        %1784 = vmatmul.mubr.f32.gmra.mrb[0].mxu0 %v440
        %v1785 = vpop.f32.mrb[0].mxu0
        %v1786 = vadd.f32 %v365, %v1785
        %v1787 = vpop.f32.mrb[0].mxu0
        %v1788 = vadd.f32 %v365, %v1787
        %1789 = vmatprep.mubr.f32.mxu0 0.0
        %1790 = vmatmul.mubr.f32.gmra.mrb[0].mxu0 %v443
        %v1791 = vpop.f32.mrb[0].mxu0
        %v1792 = vadd.f32 %v370, %v1791
        %v1793 = vpop.f32.mrb[0].mxu0
        %v1794 = vadd.f32 %v370, %v1793
        %1795 = vmatprep.mubr.f32.mxu0 0.0
        %1796 = vmatmul.mubr.f32.gmra.mrb[0].mxu0 %v446
        %v1797 = vpop.f32.mrb[0].mxu0
        %v1798 = vadd.f32 %v375, %v1797
        %v1799 = vpop.f32.mrb[0].mxu0
        %v1800 = vadd.f32 %v375, %v1799
        %1801 = vmatprep.mubr.f32.mxu0 0.0
        %1802 = vmatmul.mubr.f32.gmra.mrb[0].mxu0 %v449
        %v1803 = vpop.f32.mrb[0].mxu0
        %v1804 = vadd.f32 %v380, %v1803
        %v1805 = vpop.f32.mrb[0].mxu0
        %v1806 = vadd.f32 %v380, %v1805
        %1807 = vdwg.mxu0
        %1808 = vmatprep.subr.mxu0 %v1486
        %1809 = vmatpush1.msra.mxu0 %v1485
        %1810 = vmatprep.subr.mxu0 %v1490
        %1811 = vmatpush1.msra.mxu0 %v1489
        %1812 = vmatprep.subr.mxu0 %v1494
        %1813 = vmatpush1.msra.mxu0 %v1493
        %1814 = vmatprep.subr.mxu0 %v1498
        %1815 = vmatpush1.msra.mxu0 %v1497
        %1816 = vmatprep.subr.mxu0 0.0
        %1817 = vmatpush1.msra.mxu0 0.0
        %1818 = vmatprep.subr.mxu0 0.0
        %1819 = vmatpush1.msra.mxu0 0.0
        %1820 = vmatprep.subr.mxu0 0.0
        %1821 = vmatpush1.msra.mxu0 0.0
        %1822 = vmatprep.subr.mxu0 0.0
        %1823 = vmatpush1.msra.mxu0 0.0
        %1824 = vmatprep.subr.mxu0 0.0
        %1825 = vmatpush1.msra.mxu0 0.0
        %1826 = vmatprep.subr.mxu0 0.0
        %1827 = vmatpush1.msra.mxu0 0.0
        %1828 = vmatprep.subr.mxu0 0.0
        %1829 = vmatpush1.msra.mxu0 0.0
        %1830 = vmatprep.subr.mxu0 0.0
        %1831 = vmatpush1.msra.mxu0 0.0
        %1832 = vmatprep.subr.mxu0 0.0
        %1833 = vmatpush1.msra.mxu0 0.0
        %1834 = vmatprep.subr.mxu0 0.0
        %1835 = vmatpush1.msra.mxu0 0.0
        %1836 = vmatprep.subr.mxu0 0.0
        %1837 = vmatpush1.msra.mxu0 0.0
        %1838 = vmatprep.subr.mxu0 0.0
        %1839 = vmatpush1.msra.mxu0 0.0
        %1840 = vmatprep.subr.mxu0 0.0
        %1841 = vmatpush1.msra.mxu0 0.0
        %1842 = vmatprep.subr.mxu0 0.0
        %1843 = vmatpush1.msra.mxu0 0.0
        %1844 = vmatprep.subr.mxu0 0.0
        %1845 = vmatpush1.msra.mxu0 0.0
        %1846 = vmatprep.subr.mxu0 0.0
        %1847 = vmatpush1.msra.mxu0 0.0
        %1848 = vmatprep.subr.mxu0 0.0
        %1849 = vmatpush1.msra.mxu0 0.0
        %1850 = vmatprep.subr.mxu0 0.0
        %1851 = vmatpush1.msra.mxu0 0.0
        %1852 = vmatprep.subr.mxu0 0.0
        %1853 = vmatpush1.msra.mxu0 0.0
        %1854 = vmatprep.subr.mxu0 0.0
        %1855 = vmatpush1.msra.mxu0 0.0
        %1856 = vmatprep.subr.mxu0 0.0
        %1857 = vmatpush1.msra.mxu0 0.0
        %1858 = vmatprep.subr.mxu0 0.0
        %1859 = vmatpush1.msra.mxu0 0.0
        %1860 = vmatprep.subr.mxu0 0.0
        %1861 = vmatpush1.msra.mxu0 0.0
        %1862 = vmatprep.subr.mxu0 0.0
        %1863 = vmatpush1.msra.mxu0 0.0
        %1864 = vmatprep.subr.mxu0 0.0
        %1865 = vmatpush1.msra.mxu0 0.0
        %1866 = vmatprep.subr.mxu0 0.0
        %1867 = vmatpush1.msra.mxu0 0.0
        %1868 = vmatprep.subr.mxu0 0.0
        %1869 = vmatpush1.msra.mxu0 0.0
        %1870 = vmatprep.subr.mxu0 0.0
        %1871 = vmatpush1.msra.mxu0 0.0
        %1872 = vmatprep.mubr.f32.mxu0 0.0
        %1873 = vmatmul.mubr.f32.gmra.mrb[0].mxu0 %v726
        %v1874 = vpop.f32.mrb[0].mxu0
        %v1875 = vadd.f32 0.0, %v1874
        %v1876 = vpop.f32.mrb[0].mxu0
        %v1877 = vadd.f32 0.0, %v1876
        %1878 = vmatprep.mubr.f32.mxu0 0.0
        %1879 = vmatmul.mubr.f32.gmra.mrb[0].mxu0 %v729
        %v1880 = vpop.f32.mrb[0].mxu0
        %v1881 = vadd.f32 0.0, %v1880
        %v1882 = vpop.f32.mrb[0].mxu0
        %v1883 = vadd.f32 0.0, %v1882
        %1884 = vmatprep.mubr.f32.mxu0 0.0
        %1885 = vmatmul.mubr.f32.gmra.mrb[0].mxu0 %v732
        %v1886 = vpop.f32.mrb[0].mxu0
        %v1887 = vadd.f32 0.0, %v1886
        %v1888 = vpop.f32.mrb[0].mxu0
        %v1889 = vadd.f32 0.0, %v1888
        %1890 = vmatprep.mubr.f32.mxu0 0.0
        %1891 = vmatmul.mubr.f32.gmra.mrb[0].mxu0 %v735
        %v1892 = vpop.f32.mrb[0].mxu0
        %v1893 = vadd.f32 0.0, %v1892
        %v1894 = vpop.f32.mrb[0].mxu0
        %v1895 = vadd.f32 0.0, %v1894
        %1896 = vmatprep.mubr.f32.mxu0 0.0
        %1897 = vmatmul.mubr.f32.gmra.mrb[0].mxu0 %v738
        %v1898 = vpop.f32.mrb[0].mxu0
        %v1899 = vadd.f32 0.0, %v1898
        %v1900 = vpop.f32.mrb[0].mxu0
        %v1901 = vadd.f32 0.0, %v1900
        %1902 = vmatprep.mubr.f32.mxu0 0.0
        %1903 = vmatmul.mubr.f32.gmra.mrb[0].mxu0 %v741
        %v1904 = vpop.f32.mrb[0].mxu0
        %v1905 = vadd.f32 0.0, %v1904
        %v1906 = vpop.f32.mrb[0].mxu0
        %v1907 = vadd.f32 0.0, %v1906
        %1908 = vmatprep.mubr.f32.mxu0 0.0
        %1909 = vmatmul.mubr.f32.gmra.mrb[0].mxu0 %v744
        %v1910 = vpop.f32.mrb[0].mxu0
        %v1911 = vadd.f32 0.0, %v1910
        %v1912 = vpop.f32.mrb[0].mxu0
        %v1913 = vadd.f32 0.0, %v1912
        %1914 = vmatprep.mubr.f32.mxu0 0.0
        %1915 = vmatmul.mubr.f32.gmra.mrb[0].mxu0 %v747
        %v1916 = vpop.f32.mrb[0].mxu0
        %v1917 = vadd.f32 0.0, %v1916
        %v1918 = vpop.f32.mrb[0].mxu0
        %v1919 = vadd.f32 0.0, %v1918
        %1920 = vdwg.mxu0
        %1921 = vmatprep.subr.mxu0 %v1488
        %1922 = vmatpush1.msra.mxu0 %v1487
        %1923 = vmatprep.subr.mxu0 %v1492
        %1924 = vmatpush1.msra.mxu0 %v1491
        %1925 = vmatprep.subr.mxu0 %v1496
        %1926 = vmatpush1.msra.mxu0 %v1495
        %1927 = vmatprep.subr.mxu0 %v1500
        %1928 = vmatpush1.msra.mxu0 %v1499
        %1929 = vmatprep.subr.mxu0 0.0
        %1930 = vmatpush1.msra.mxu0 0.0
        %1931 = vmatprep.subr.mxu0 0.0
        %1932 = vmatpush1.msra.mxu0 0.0
        %1933 = vmatprep.subr.mxu0 0.0
        %1934 = vmatpush1.msra.mxu0 0.0
        %1935 = vmatprep.subr.mxu0 0.0
        %1936 = vmatpush1.msra.mxu0 0.0
        %1937 = vmatprep.subr.mxu0 0.0
        %1938 = vmatpush1.msra.mxu0 0.0
        %1939 = vmatprep.subr.mxu0 0.0
        %1940 = vmatpush1.msra.mxu0 0.0
        %1941 = vmatprep.subr.mxu0 0.0
        %1942 = vmatpush1.msra.mxu0 0.0
        %1943 = vmatprep.subr.mxu0 0.0
        %1944 = vmatpush1.msra.mxu0 0.0
        %1945 = vmatprep.subr.mxu0 0.0
        %1946 = vmatpush1.msra.mxu0 0.0
        %1947 = vmatprep.subr.mxu0 0.0
        %1948 = vmatpush1.msra.mxu0 0.0
        %1949 = vmatprep.subr.mxu0 0.0
        %1950 = vmatpush1.msra.mxu0 0.0
        %1951 = vmatprep.subr.mxu0 0.0
        %1952 = vmatpush1.msra.mxu0 0.0
        %1953 = vmatprep.subr.mxu0 0.0
        %1954 = vmatpush1.msra.mxu0 0.0
        %1955 = vmatprep.subr.mxu0 0.0
        %1956 = vmatpush1.msra.mxu0 0.0
        %1957 = vmatprep.subr.mxu0 0.0
        %1958 = vmatpush1.msra.mxu0 0.0
        %1959 = vmatprep.subr.mxu0 0.0
        %1960 = vmatpush1.msra.mxu0 0.0
        %1961 = vmatprep.subr.mxu0 0.0
        %1962 = vmatpush1.msra.mxu0 0.0
        %1963 = vmatprep.subr.mxu0 0.0
        %1964 = vmatpush1.msra.mxu0 0.0
        %1965 = vmatprep.subr.mxu0 0.0
        %1966 = vmatpush1.msra.mxu0 0.0
        %1967 = vmatprep.subr.mxu0 0.0
        %1968 = vmatpush1.msra.mxu0 0.0
        %1969 = vmatprep.subr.mxu0 0.0
        %1970 = vmatpush1.msra.mxu0 0.0
        %1971 = vmatprep.subr.mxu0 0.0
        %1972 = vmatpush1.msra.mxu0 0.0
        %1973 = vmatprep.subr.mxu0 0.0
        %1974 = vmatpush1.msra.mxu0 0.0
        %1975 = vmatprep.subr.mxu0 0.0
        %1976 = vmatpush1.msra.mxu0 0.0
        %1977 = vmatprep.subr.mxu0 0.0
        %1978 = vmatpush1.msra.mxu0 0.0
        %1979 = vmatprep.subr.mxu0 0.0
        %1980 = vmatpush1.msra.mxu0 0.0
        %1981 = vmatprep.subr.mxu0 0.0
        %1982 = vmatpush1.msra.mxu0 0.0
        %1983 = vmatprep.subr.mxu0 0.0
        %1984 = vmatpush1.msra.mxu0 0.0
        %1985 = vmatprep.mubr.f32.mxu0 0.0
        %1986 = vmatmul.mubr.f32.gmra.mrb[0].mxu0 %v726
        %v1987 = vpop.f32.mrb[0].mxu0
        %v1988 = vadd.f32 0.0, %v1987
        %v1989 = vpop.f32.mrb[0].mxu0
        %v1990 = vadd.f32 0.0, %v1989
        %1991 = vmatprep.mubr.f32.mxu0 0.0
        %1992 = vmatmul.mubr.f32.gmra.mrb[0].mxu0 %v729
        %v1993 = vpop.f32.mrb[0].mxu0
        %v1994 = vadd.f32 0.0, %v1993
        %v1995 = vpop.f32.mrb[0].mxu0
        %v1996 = vadd.f32 0.0, %v1995
        %1997 = vmatprep.mubr.f32.mxu0 0.0
        %1998 = vmatmul.mubr.f32.gmra.mrb[0].mxu0 %v732
        %v1999 = vpop.f32.mrb[0].mxu0
        %v2000 = vadd.f32 0.0, %v1999
        %v2001 = vpop.f32.mrb[0].mxu0
        %v2002 = vadd.f32 0.0, %v2001
        %2003 = vmatprep.mubr.f32.mxu0 0.0
        %2004 = vmatmul.mubr.f32.gmra.mrb[0].mxu0 %v735
        %v2005 = vpop.f32.mrb[0].mxu0
        %v2006 = vadd.f32 0.0, %v2005
        %v2007 = vpop.f32.mrb[0].mxu0
        %v2008 = vadd.f32 0.0, %v2007
        %2009 = vmatprep.mubr.f32.mxu0 0.0
        %2010 = vmatmul.mubr.f32.gmra.mrb[0].mxu0 %v738
        %v2011 = vpop.f32.mrb[0].mxu0
        %v2012 = vadd.f32 0.0, %v2011
        %v2013 = vpop.f32.mrb[0].mxu0
        %v2014 = vadd.f32 0.0, %v2013
        %2015 = vmatprep.mubr.f32.mxu0 0.0
        %2016 = vmatmul.mubr.f32.gmra.mrb[0].mxu0 %v741
        %v2017 = vpop.f32.mrb[0].mxu0
        %v2018 = vadd.f32 0.0, %v2017
        %v2019 = vpop.f32.mrb[0].mxu0
        %v2020 = vadd.f32 0.0, %v2019
        %2021 = vmatprep.mubr.f32.mxu0 0.0
        %2022 = vmatmul.mubr.f32.gmra.mrb[0].mxu0 %v744
        %v2023 = vpop.f32.mrb[0].mxu0
        %v2024 = vadd.f32 0.0, %v2023
        %v2025 = vpop.f32.mrb[0].mxu0
        %v2026 = vadd.f32 0.0, %v2025
        %2027 = vmatprep.mubr.f32.mxu0 0.0
        %2028 = vmatmul.mubr.f32.gmra.mrb[0].mxu0 %v747
        %v2029 = vpop.f32.mrb[0].mxu0
        %v2030 = vadd.f32 0.0, %v2029
        %v2031 = vpop.f32.mrb[0].mxu0
        %v2032 = vadd.f32 0.0, %v2031
        %2033 = vdwg.mxu0
        %v2034 = vadd.f32 %v1601, %v1875
        %v2035 = vadd.f32 %v1603, %v1877
        %v2036 = vadd.f32 %v1738, %v1988
        %v2037 = vadd.f32 %v1740, %v1990
        %v2038 = vadd.f32 %v1607, %v1881
        %v2039 = vadd.f32 %v1609, %v1883
        %v2040 = vadd.f32 %v1744, %v1994
        %v2041 = vadd.f32 %v1746, %v1996
        %v2042 = vadd.f32 %v1613, %v1887
        %v2043 = vadd.f32 %v1615, %v1889
        %v2044 = vadd.f32 %v1750, %v2000
        %v2045 = vadd.f32 %v1752, %v2002
        %v2046 = vadd.f32 %v1619, %v1893
        %v2047 = vadd.f32 %v1621, %v1895
        %v2048 = vadd.f32 %v1756, %v2006
        %v2049 = vadd.f32 %v1758, %v2008
        %v2050 = vxor.u32 %v2034, 2147483648
        %v2051 = vxor.u32 %v2035, 2147483648
        %v2052 = vxor.u32 %v2036, 2147483648
        %v2053 = vxor.u32 %v2037, 2147483648
        %v2054 = vxor.u32 %v2038, 2147483648
        %v2055 = vxor.u32 %v2039, 2147483648
        %v2056 = vxor.u32 %v2040, 2147483648
        %v2057 = vxor.u32 %v2041, 2147483648
        %v2058 = vxor.u32 %v2042, 2147483648
        %v2059 = vxor.u32 %v2043, 2147483648
        %v2060 = vxor.u32 %v2044, 2147483648
        %v2061 = vxor.u32 %v2045, 2147483648
        %v2062 = vxor.u32 %v2046, 2147483648
        %v2063 = vxor.u32 %v2047, 2147483648
        %v2064 = vxor.u32 %v2048, 2147483648
        %v2065 = vxor.u32 %v2049, 2147483648
        %v2066 = vmul.f32 %v2050, 1.442695
        %v2067 = vpow.pop %v2066
        %v2068 = vmul.f32 %v2051, 1.442695
        %v2069 = vpow.pop %v2068
        %v2070 = vmul.f32 %v2052, 1.442695
        %v2071 = vpow.pop %v2070
        %v2072 = vmul.f32 %v2053, 1.442695
        %v2073 = vpow.pop %v2072
        %v2074 = vmul.f32 %v2054, 1.442695
        %v2075 = vpow.pop %v2074
        %v2076 = vmul.f32 %v2055, 1.442695
        %v2077 = vpow.pop %v2076
        %v2078 = vmul.f32 %v2056, 1.442695
        %v2079 = vpow.pop %v2078
        %v2080 = vmul.f32 %v2057, 1.442695
        %v2081 = vpow.pop %v2080
        %v2082 = vmul.f32 %v2058, 1.442695
        %v2083 = vpow.pop %v2082
        %v2084 = vmul.f32 %v2059, 1.442695
        %v2085 = vpow.pop %v2084
        %v2086 = vmul.f32 %v2060, 1.442695
        %v2087 = vpow.pop %v2086
        %v2088 = vmul.f32 %v2061, 1.442695
        %v2089 = vpow.pop %v2088
        %v2090 = vmul.f32 %v2062, 1.442695
        %v2091 = vpow.pop %v2090
        %v2092 = vmul.f32 %v2063, 1.442695
        %v2093 = vpow.pop %v2092
        %v2094 = vmul.f32 %v2064, 1.442695
        %v2095 = vpow.pop %v2094
        %v2096 = vmul.f32 %v2065, 1.442695
        %v2097 = vpow.pop %v2096
        %v2098 = vadd.f32 %v2067, 1.0
        %v2099 = vadd.f32 %v2069, 1.0
        %v2100 = vadd.f32 %v2071, 1.0
        %v2101 = vadd.f32 %v2073, 1.0
        %v2102 = vadd.f32 %v2075, 1.0
        %v2103 = vadd.f32 %v2077, 1.0
        %v2104 = vadd.f32 %v2079, 1.0
        %v2105 = vadd.f32 %v2081, 1.0
        %v2106 = vadd.f32 %v2083, 1.0
        %v2107 = vadd.f32 %v2085, 1.0
        %v2108 = vadd.f32 %v2087, 1.0
        %v2109 = vadd.f32 %v2089, 1.0
        %v2110 = vadd.f32 %v2091, 1.0
        %v2111 = vadd.f32 %v2093, 1.0
        %v2112 = vadd.f32 %v2095, 1.0
        %v2113 = vadd.f32 %v2097, 1.0
        %v2114 = vrcp.pop %v2098
        %v2115 = vmul.f32 1.0, %v2114
        %v2116 = vrcp.pop %v2099
        %v2117 = vmul.f32 1.0, %v2116
        %v2118 = vrcp.pop %v2100
        %v2119 = vmul.f32 1.0, %v2118
        %v2120 = vrcp.pop %v2101
        %v2121 = vmul.f32 1.0, %v2120
        %v2122 = vrcp.pop %v2102
        %v2123 = vmul.f32 1.0, %v2122
        %v2124 = vrcp.pop %v2103
        %v2125 = vmul.f32 1.0, %v2124
        %v2126 = vrcp.pop %v2104
        %v2127 = vmul.f32 1.0, %v2126
        %v2128 = vrcp.pop %v2105
        %v2129 = vmul.f32 1.0, %v2128
        %v2130 = vrcp.pop %v2106
        %v2131 = vmul.f32 1.0, %v2130
        %v2132 = vrcp.pop %v2107
        %v2133 = vmul.f32 1.0, %v2132
        %v2134 = vrcp.pop %v2108
        %v2135 = vmul.f32 1.0, %v2134
        %v2136 = vrcp.pop %v2109
        %v2137 = vmul.f32 1.0, %v2136
        %v2138 = vrcp.pop %v2110
        %v2139 = vmul.f32 1.0, %v2138
        %v2140 = vrcp.pop %v2111
        %v2141 = vmul.f32 1.0, %v2140
        %v2142 = vrcp.pop %v2112
        %v2143 = vmul.f32 1.0, %v2142
        %v2144 = vrcp.pop %v2113
        %v2145 = vmul.f32 1.0, %v2144
        %v2146 = vadd.f32 %v1625, %v1899
        %v2147 = vadd.f32 %v1627, %v1901
        %v2148 = vadd.f32 %v1762, %v2012
        %v2149 = vadd.f32 %v1764, %v2014
        %v2150 = vadd.f32 %v1631, %v1905
        %v2151 = vadd.f32 %v1633, %v1907
        %v2152 = vadd.f32 %v1768, %v2018
        %v2153 = vadd.f32 %v1770, %v2020
        %v2154 = vadd.f32 %v1637, %v1911
        %v2155 = vadd.f32 %v1639, %v1913
        %v2156 = vadd.f32 %v1774, %v2024
        %v2157 = vadd.f32 %v1776, %v2026
        %v2158 = vadd.f32 %v1643, %v1917
        %v2159 = vadd.f32 %v1645, %v1919
        %v2160 = vadd.f32 %v1780, %v2030
        %v2161 = vadd.f32 %v1782, %v2032
        %v2162 = vxor.u32 %v2146, 2147483648
        %v2163 = vxor.u32 %v2147, 2147483648
        %v2164 = vxor.u32 %v2148, 2147483648
        %v2165 = vxor.u32 %v2149, 2147483648
        %v2166 = vxor.u32 %v2150, 2147483648
        %v2167 = vxor.u32 %v2151, 2147483648
        %v2168 = vxor.u32 %v2152, 2147483648
        %v2169 = vxor.u32 %v2153, 2147483648
        %v2170 = vxor.u32 %v2154, 2147483648
        %v2171 = vxor.u32 %v2155, 2147483648
        %v2172 = vxor.u32 %v2156, 2147483648
        %v2173 = vxor.u32 %v2157, 2147483648
        %v2174 = vxor.u32 %v2158, 2147483648
        %v2175 = vxor.u32 %v2159, 2147483648
        %v2176 = vxor.u32 %v2160, 2147483648
        %v2177 = vxor.u32 %v2161, 2147483648
        %v2178 = vmul.f32 %v2162, 1.442695
        %v2179 = vpow.pop %v2178
        %v2180 = vmul.f32 %v2163, 1.442695
        %v2181 = vpow.pop %v2180
        %v2182 = vmul.f32 %v2164, 1.442695
        %v2183 = vpow.pop %v2182
        %v2184 = vmul.f32 %v2165, 1.442695
        %v2185 = vpow.pop %v2184
        %v2186 = vmul.f32 %v2166, 1.442695
        %v2187 = vpow.pop %v2186
        %v2188 = vmul.f32 %v2167, 1.442695
        %v2189 = vpow.pop %v2188
        %v2190 = vmul.f32 %v2168, 1.442695
        %v2191 = vpow.pop %v2190
        %v2192 = vmul.f32 %v2169, 1.442695
        %v2193 = vpow.pop %v2192
        %v2194 = vmul.f32 %v2170, 1.442695
        %v2195 = vpow.pop %v2194
        %v2196 = vmul.f32 %v2171, 1.442695
        %v2197 = vpow.pop %v2196
        %v2198 = vmul.f32 %v2172, 1.442695
        %v2199 = vpow.pop %v2198
        %v2200 = vmul.f32 %v2173, 1.442695
        %v2201 = vpow.pop %v2200
        %v2202 = vmul.f32 %v2174, 1.442695
        %v2203 = vpow.pop %v2202
        %v2204 = vmul.f32 %v2175, 1.442695
        %v2205 = vpow.pop %v2204
        %v2206 = vmul.f32 %v2176, 1.442695
        %v2207 = vpow.pop %v2206
        %v2208 = vmul.f32 %v2177, 1.442695
        %v2209 = vpow.pop %v2208
        %v2210 = vadd.f32 %v2179, 1.0
        %v2211 = vadd.f32 %v2181, 1.0
        %v2212 = vadd.f32 %v2183, 1.0
        %v2213 = vadd.f32 %v2185, 1.0
        %v2214 = vadd.f32 %v2187, 1.0
        %v2215 = vadd.f32 %v2189, 1.0
        %v2216 = vadd.f32 %v2191, 1.0
        %v2217 = vadd.f32 %v2193, 1.0
        %v2218 = vadd.f32 %v2195, 1.0
        %v2219 = vadd.f32 %v2197, 1.0
        %v2220 = vadd.f32 %v2199, 1.0
        %v2221 = vadd.f32 %v2201, 1.0
        %v2222 = vadd.f32 %v2203, 1.0
        %v2223 = vadd.f32 %v2205, 1.0
        %v2224 = vadd.f32 %v2207, 1.0
        %v2225 = vadd.f32 %v2209, 1.0
        %v2226 = vrcp.pop %v2210
        %v2227 = vmul.f32 1.0, %v2226
        %v2228 = vrcp.pop %v2211
        %v2229 = vmul.f32 1.0, %v2228
        %v2230 = vrcp.pop %v2212
        %v2231 = vmul.f32 1.0, %v2230
        %v2232 = vrcp.pop %v2213
        %v2233 = vmul.f32 1.0, %v2232
        %v2234 = vrcp.pop %v2214
        %v2235 = vmul.f32 1.0, %v2234
        %v2236 = vrcp.pop %v2215
        %v2237 = vmul.f32 1.0, %v2236
        %v2238 = vrcp.pop %v2216
        %v2239 = vmul.f32 1.0, %v2238
        %v2240 = vrcp.pop %v2217
        %v2241 = vmul.f32 1.0, %v2240
        %v2242 = vrcp.pop %v2218
        %v2243 = vmul.f32 1.0, %v2242
        %v2244 = vrcp.pop %v2219
        %v2245 = vmul.f32 1.0, %v2244
        %v2246 = vrcp.pop %v2220
        %v2247 = vmul.f32 1.0, %v2246
        %v2248 = vrcp.pop %v2221
        %v2249 = vmul.f32 1.0, %v2248
        %v2250 = vrcp.pop %v2222
        %v2251 = vmul.f32 1.0, %v2250
        %v2252 = vrcp.pop %v2223
        %v2253 = vmul.f32 1.0, %v2252
        %v2254 = vrcp.pop %v2224
        %v2255 = vmul.f32 1.0, %v2254
        %v2256 = vrcp.pop %v2225
        %v2257 = vmul.f32 1.0, %v2256
        %v2258 = vmul.f32 %v2227, %v1485
        %v2259 = vmul.f32 %v2229, %v1486
        %v2260 = vmul.f32 %v2231, %v1487
        %v2261 = vmul.f32 %v2233, %v1488
        %v2262 = vmul.f32 %v2235, %v1489
        %v2263 = vmul.f32 %v2237, %v1490
        %v2264 = vmul.f32 %v2239, %v1491
        %v2265 = vmul.f32 %v2241, %v1492
        %v2266 = vmul.f32 %v2243, %v1493
        %v2267 = vmul.f32 %v2245, %v1494
        %v2268 = vmul.f32 %v2247, %v1495
        %v2269 = vmul.f32 %v2249, %v1496
        %v2270 = vmul.f32 %v2251, %v1497
        %v2271 = vmul.f32 %v2253, %v1498
        %v2272 = vmul.f32 %v2255, %v1499
        %v2273 = vmul.f32 %v2257, %v1500
        %2274 = vmatprep.subr.mxu0 %v2259
        %2275 = vmatpush1.msra.mxu0 %v2258
        %2276 = vmatprep.subr.mxu0 %v2263
        %2277 = vmatpush1.msra.mxu0 %v2262
        %2278 = vmatprep.subr.mxu0 %v2267
        %2279 = vmatpush1.msra.mxu0 %v2266
        %2280 = vmatprep.subr.mxu0 %v2271
        %2281 = vmatpush1.msra.mxu0 %v2270
        %2282 = vmatprep.subr.mxu0 0.0
        %2283 = vmatpush1.msra.mxu0 0.0
        %2284 = vmatprep.subr.mxu0 0.0
        %2285 = vmatpush1.msra.mxu0 0.0
        %2286 = vmatprep.subr.mxu0 0.0
        %2287 = vmatpush1.msra.mxu0 0.0
        %2288 = vmatprep.subr.mxu0 0.0
        %2289 = vmatpush1.msra.mxu0 0.0
        %2290 = vmatprep.subr.mxu0 0.0
        %2291 = vmatpush1.msra.mxu0 0.0
        %2292 = vmatprep.subr.mxu0 0.0
        %2293 = vmatpush1.msra.mxu0 0.0
        %2294 = vmatprep.subr.mxu0 0.0
        %2295 = vmatpush1.msra.mxu0 0.0
        %2296 = vmatprep.subr.mxu0 0.0
        %2297 = vmatpush1.msra.mxu0 0.0
        %2298 = vmatprep.subr.mxu0 0.0
        %2299 = vmatpush1.msra.mxu0 0.0
        %2300 = vmatprep.subr.mxu0 0.0
        %2301 = vmatpush1.msra.mxu0 0.0
        %2302 = vmatprep.subr.mxu0 0.0
        %2303 = vmatpush1.msra.mxu0 0.0
        %2304 = vmatprep.subr.mxu0 0.0
        %2305 = vmatpush1.msra.mxu0 0.0
        %2306 = vmatprep.subr.mxu0 0.0
        %2307 = vmatpush1.msra.mxu0 0.0
        %2308 = vmatprep.subr.mxu0 0.0
        %2309 = vmatpush1.msra.mxu0 0.0
        %2310 = vmatprep.subr.mxu0 0.0
        %2311 = vmatpush1.msra.mxu0 0.0
        %2312 = vmatprep.subr.mxu0 0.0
        %2313 = vmatpush1.msra.mxu0 0.0
        %2314 = vmatprep.subr.mxu0 0.0
        %2315 = vmatpush1.msra.mxu0 0.0
        %2316 = vmatprep.subr.mxu0 0.0
        %2317 = vmatpush1.msra.mxu0 0.0
        %2318 = vmatprep.subr.mxu0 0.0
        %2319 = vmatpush1.msra.mxu0 0.0
        %2320 = vmatprep.subr.mxu0 0.0
        %2321 = vmatpush1.msra.mxu0 0.0
        %2322 = vmatprep.subr.mxu0 0.0
        %2323 = vmatpush1.msra.mxu0 0.0
        %2324 = vmatprep.subr.mxu0 0.0
        %2325 = vmatpush1.msra.mxu0 0.0
        %2326 = vmatprep.subr.mxu0 0.0
        %2327 = vmatpush1.msra.mxu0 0.0
        %2328 = vmatprep.subr.mxu0 0.0
        %2329 = vmatpush1.msra.mxu0 0.0
        %2330 = vmatprep.subr.mxu0 0.0
        %2331 = vmatpush1.msra.mxu0 0.0
        %2332 = vmatprep.subr.mxu0 0.0
        %2333 = vmatpush1.msra.mxu0 0.0
        %2334 = vmatprep.subr.mxu0 0.0
        %2335 = vmatpush1.msra.mxu0 0.0
        %2336 = vmatprep.subr.mxu0 0.0
        %2337 = vmatpush1.msra.mxu0 0.0
        %2338 = vmatprep.mubr.f32.mxu0 0.0
        %2339 = vmatmul.mubr.f32.gmra.mrb[0].mxu0 %v1216
        %v2340 = vpop.f32.mrb[0].mxu0
        %v2341 = vadd.f32 0.0, %v2340
        %v2342 = vpop.f32.mrb[0].mxu0
        %v2343 = vadd.f32 0.0, %v2342
        %2344 = vmatprep.mubr.f32.mxu0 0.0
        %2345 = vmatmul.mubr.f32.gmra.mrb[0].mxu0 %v1219
        %v2346 = vpop.f32.mrb[0].mxu0
        %v2347 = vadd.f32 0.0, %v2346
        %v2348 = vpop.f32.mrb[0].mxu0
        %v2349 = vadd.f32 0.0, %v2348
        %2350 = vmatprep.mubr.f32.mxu0 0.0
        %2351 = vmatmul.mubr.f32.gmra.mrb[0].mxu0 %v1222
        %v2352 = vpop.f32.mrb[0].mxu0
        %v2353 = vadd.f32 0.0, %v2352
        %v2354 = vpop.f32.mrb[0].mxu0
        %v2355 = vadd.f32 0.0, %v2354
        %2356 = vmatprep.mubr.f32.mxu0 0.0
        %2357 = vmatmul.mubr.f32.gmra.mrb[0].mxu0 %v1225
        %v2358 = vpop.f32.mrb[0].mxu0
        %v2359 = vadd.f32 0.0, %v2358
        %v2360 = vpop.f32.mrb[0].mxu0
        %v2361 = vadd.f32 0.0, %v2360
        %2362 = vdwg.mxu0
        %2363 = vmatprep.subr.mxu0 %v2261
        %2364 = vmatpush1.msra.mxu0 %v2260
        %2365 = vmatprep.subr.mxu0 %v2265
        %2366 = vmatpush1.msra.mxu0 %v2264
        %2367 = vmatprep.subr.mxu0 %v2269
        %2368 = vmatpush1.msra.mxu0 %v2268
        %2369 = vmatprep.subr.mxu0 %v2273
        %2370 = vmatpush1.msra.mxu0 %v2272
        %2371 = vmatprep.subr.mxu0 0.0
        %2372 = vmatpush1.msra.mxu0 0.0
        %2373 = vmatprep.subr.mxu0 0.0
        %2374 = vmatpush1.msra.mxu0 0.0
        %2375 = vmatprep.subr.mxu0 0.0
        %2376 = vmatpush1.msra.mxu0 0.0
        %2377 = vmatprep.subr.mxu0 0.0
        %2378 = vmatpush1.msra.mxu0 0.0
        %2379 = vmatprep.subr.mxu0 0.0
        %2380 = vmatpush1.msra.mxu0 0.0
        %2381 = vmatprep.subr.mxu0 0.0
        %2382 = vmatpush1.msra.mxu0 0.0
        %2383 = vmatprep.subr.mxu0 0.0
        %2384 = vmatpush1.msra.mxu0 0.0
        %2385 = vmatprep.subr.mxu0 0.0
        %2386 = vmatpush1.msra.mxu0 0.0
        %2387 = vmatprep.subr.mxu0 0.0
        %2388 = vmatpush1.msra.mxu0 0.0
        %2389 = vmatprep.subr.mxu0 0.0
        %2390 = vmatpush1.msra.mxu0 0.0
        %2391 = vmatprep.subr.mxu0 0.0
        %2392 = vmatpush1.msra.mxu0 0.0
        %2393 = vmatprep.subr.mxu0 0.0
        %2394 = vmatpush1.msra.mxu0 0.0
        %2395 = vmatprep.subr.mxu0 0.0
        %2396 = vmatpush1.msra.mxu0 0.0
        %2397 = vmatprep.subr.mxu0 0.0
        %2398 = vmatpush1.msra.mxu0 0.0
        %2399 = vmatprep.subr.mxu0 0.0
        %2400 = vmatpush1.msra.mxu0 0.0
        %2401 = vmatprep.subr.mxu0 0.0
        %2402 = vmatpush1.msra.mxu0 0.0
        %2403 = vmatprep.subr.mxu0 0.0
        %2404 = vmatpush1.msra.mxu0 0.0
        %2405 = vmatprep.subr.mxu0 0.0
        %2406 = vmatpush1.msra.mxu0 0.0
        %2407 = vmatprep.subr.mxu0 0.0
        %2408 = vmatpush1.msra.mxu0 0.0
        %2409 = vmatprep.subr.mxu0 0.0
        %2410 = vmatpush1.msra.mxu0 0.0
        %2411 = vmatprep.subr.mxu0 0.0
        %2412 = vmatpush1.msra.mxu0 0.0
        %2413 = vmatprep.subr.mxu0 0.0
        %2414 = vmatpush1.msra.mxu0 0.0
        %2415 = vmatprep.subr.mxu0 0.0
        %2416 = vmatpush1.msra.mxu0 0.0
        %2417 = vmatprep.subr.mxu0 0.0
        %2418 = vmatpush1.msra.mxu0 0.0
        %2419 = vmatprep.subr.mxu0 0.0
        %2420 = vmatpush1.msra.mxu0 0.0
        %2421 = vmatprep.subr.mxu0 0.0
        %2422 = vmatpush1.msra.mxu0 0.0
        %2423 = vmatprep.subr.mxu0 0.0
        %2424 = vmatpush1.msra.mxu0 0.0
        %2425 = vmatprep.subr.mxu0 0.0
        %2426 = vmatpush1.msra.mxu0 0.0
        %2427 = vmatprep.mubr.f32.mxu0 0.0
        %2428 = vmatmul.mubr.f32.gmra.mrb[0].mxu0 %v1216
        %v2429 = vpop.f32.mrb[0].mxu0
        %v2430 = vadd.f32 0.0, %v2429
        %v2431 = vpop.f32.mrb[0].mxu0
        %v2432 = vadd.f32 0.0, %v2431
        %2433 = vmatprep.mubr.f32.mxu0 0.0
        %2434 = vmatmul.mubr.f32.gmra.mrb[0].mxu0 %v1219
        %v2435 = vpop.f32.mrb[0].mxu0
        %v2436 = vadd.f32 0.0, %v2435
        %v2437 = vpop.f32.mrb[0].mxu0
        %v2438 = vadd.f32 0.0, %v2437
        %2439 = vmatprep.mubr.f32.mxu0 0.0
        %2440 = vmatmul.mubr.f32.gmra.mrb[0].mxu0 %v1222
        %v2441 = vpop.f32.mrb[0].mxu0
        %v2442 = vadd.f32 0.0, %v2441
        %v2443 = vpop.f32.mrb[0].mxu0
        %v2444 = vadd.f32 0.0, %v2443
        %2445 = vmatprep.mubr.f32.mxu0 0.0
        %2446 = vmatmul.mubr.f32.gmra.mrb[0].mxu0 %v1225
        %v2447 = vpop.f32.mrb[0].mxu0
        %v2448 = vadd.f32 0.0, %v2447
        %v2449 = vpop.f32.mrb[0].mxu0
        %v2450 = vadd.f32 0.0, %v2449
        %2451 = vdwg.mxu0
        %v2452 = vsub.f32 1.0, %v2115
        %v2453 = vsub.f32 1.0, %v2117
        %v2454 = vsub.f32 1.0, %v2119
        %v2455 = vsub.f32 1.0, %v2121
        %v2456 = vsub.f32 1.0, %v2123
        %v2457 = vsub.f32 1.0, %v2125
        %v2458 = vsub.f32 1.0, %v2127
        %v2459 = vsub.f32 1.0, %v2129
        %v2460 = vsub.f32 1.0, %v2131
        %v2461 = vsub.f32 1.0, %v2133
        %v2462 = vsub.f32 1.0, %v2135
        %v2463 = vsub.f32 1.0, %v2137
        %v2464 = vsub.f32 1.0, %v2139
        %v2465 = vsub.f32 1.0, %v2141
        %v2466 = vsub.f32 1.0, %v2143
        %v2467 = vsub.f32 1.0, %v2145
        %v2468 = vmul.f32 %v2452, %v1485
        %v2469 = vmul.f32 %v2453, %v1486
        %v2470 = vmul.f32 %v2454, %v1487
        %v2471 = vmul.f32 %v2455, %v1488
        %v2472 = vmul.f32 %v2456, %v1489
        %v2473 = vmul.f32 %v2457, %v1490
        %v2474 = vmul.f32 %v2458, %v1491
        %v2475 = vmul.f32 %v2459, %v1492
        %v2476 = vmul.f32 %v2460, %v1493
        %v2477 = vmul.f32 %v2461, %v1494
        %v2478 = vmul.f32 %v2462, %v1495
        %v2479 = vmul.f32 %v2463, %v1496
        %v2480 = vmul.f32 %v2464, %v1497
        %v2481 = vmul.f32 %v2465, %v1498
        %v2482 = vmul.f32 %v2466, %v1499
        %v2483 = vmul.f32 %v2467, %v1500
        %v2484 = vadd.f32 %v1649, %v2341
        %v2485 = vadd.f32 %v1651, %v2343
        %v2486 = vadd.f32 %v1786, %v2430
        %v2487 = vadd.f32 %v1788, %v2432
        %v2488 = vadd.f32 %v1655, %v2347
        %v2489 = vadd.f32 %v1657, %v2349
        %v2490 = vadd.f32 %v1792, %v2436
        %v2491 = vadd.f32 %v1794, %v2438
        %v2492 = vadd.f32 %v1661, %v2353
        %v2493 = vadd.f32 %v1663, %v2355
        %v2494 = vadd.f32 %v1798, %v2442
        %v2495 = vadd.f32 %v1800, %v2444
        %v2496 = vadd.f32 %v1667, %v2359
        %v2497 = vadd.f32 %v1669, %v2361
        %v2498 = vadd.f32 %v1804, %v2448
        %v2499 = vadd.f32 %v1806, %v2450
        %v2500 = vtanh.pop %v2484
        %v2501 = vtanh.pop %v2485
        %v2502 = vtanh.pop %v2486
        %v2503 = vtanh.pop %v2487
        %v2504 = vtanh.pop %v2488
        %v2505 = vtanh.pop %v2489
        %v2506 = vtanh.pop %v2490
        %v2507 = vtanh.pop %v2491
        %v2508 = vtanh.pop %v2492
        %v2509 = vtanh.pop %v2493
        %v2510 = vtanh.pop %v2494
        %v2511 = vtanh.pop %v2495
        %v2512 = vtanh.pop %v2496
        %v2513 = vtanh.pop %v2497
        %v2514 = vtanh.pop %v2498
        %v2515 = vtanh.pop %v2499
        %v2516 = vmul.f32 %v2115, %v2500
        %v2517 = vmul.f32 %v2117, %v2501
        %v2518 = vmul.f32 %v2119, %v2502
        %v2519 = vmul.f32 %v2121, %v2503
        %v2520 = vmul.f32 %v2123, %v2504
        %v2521 = vmul.f32 %v2125, %v2505
        %v2522 = vmul.f32 %v2127, %v2506
        %v2523 = vmul.f32 %v2129, %v2507
        %v2524 = vmul.f32 %v2131, %v2508
        %v2525 = vmul.f32 %v2133, %v2509
        %v2526 = vmul.f32 %v2135, %v2510
        %v2527 = vmul.f32 %v2137, %v2511
        %v2528 = vmul.f32 %v2139, %v2512
        %v2529 = vmul.f32 %v2141, %v2513
        %v2530 = vmul.f32 %v2143, %v2514
        %v2531 = vmul.f32 %v2145, %v2515
        %v2532 = vadd.f32 %v2468, %v2516
        %v2533 = vadd.f32 %v2469, %v2517
        %v2534 = vadd.f32 %v2470, %v2518
        %v2535 = vadd.f32 %v2471, %v2519
        %v2536 = vadd.f32 %v2472, %v2520
        %v2537 = vadd.f32 %v2473, %v2521
        %v2538 = vadd.f32 %v2474, %v2522
        %v2539 = vadd.f32 %v2475, %v2523
        %v2540 = vadd.f32 %v2476, %v2524
        %v2541 = vadd.f32 %v2477, %v2525
        %v2542 = vadd.f32 %v2478, %v2526
        %v2543 = vadd.f32 %v2479, %v2527
        %v2544 = vadd.f32 %v2480, %v2528
        %v2545 = vadd.f32 %v2481, %v2529
        %v2546 = vadd.f32 %v2482, %v2530
        %v2547 = vadd.f32 %v2483, %v2531
        %s2548 = scalar_lea.vmem %s261, 128 [#allocation6]
        %2549 = vst [vmem:[%s2548] sm:$0xff] %v2532
        %2550 = vst [vmem:[%s2548 + $0x8] sm:$0xff] %v2533
        %2551 = vst [vmem:[%s2548 + $0x10] sm:$0xff] %v2534
        %2552 = vst [vmem:[%s2548 + $0x18] sm:$0xff] %v2535
        %2553 = vst [vmem:[%s2548 + $0x20] sm:$0xff] %v2536
        %2554 = vst [vmem:[%s2548 + $0x28] sm:$0xff] %v2537
        %2555 = vst [vmem:[%s2548 + $0x30] sm:$0xff] %v2538
        %2556 = vst [vmem:[%s2548 + $0x38] sm:$0xff] %v2539
        %2557 = vst [vmem:[%s2548 + $0x40] sm:$0xff] %v2540
        %2558 = vst [vmem:[%s2548 + $0x48] sm:$0xff] %v2541
        %2559 = vst [vmem:[%s2548 + $0x50] sm:$0xff] %v2542
        %2560 = vst [vmem:[%s2548 + $0x58] sm:$0xff] %v2543
        %2561 = vst [vmem:[%s2548 + $0x60] sm:$0xff] %v2544
        %2562 = vst [vmem:[%s2548 + $0x68] sm:$0xff] %v2545
        %2563 = vst [vmem:[%s2548 + $0x70] sm:$0xff] %v2546
        %2564 = vst [vmem:[%s2548 + $0x78] sm:$0xff] %v2547
        %s2565 = scalar_lea.vmem %s235, 256 [#allocation3]
        %v2566 = vld [vmem:[%s2565] sm:$0xff]
        %v2567 = vld [vmem:[%s2565 + $0x8] sm:$0xff]
        %v2568 = vld [vmem:[%s2565 + $0x10] sm:$0xff]
        %v2569 = vld [vmem:[%s2565 + $0x18] sm:$0xff]
        %v2570 = vld [vmem:[%s2565 + $0x20] sm:$0xff]
        %v2571 = vld [vmem:[%s2565 + $0x28] sm:$0xff]
        %v2572 = vld [vmem:[%s2565 + $0x30] sm:$0xff]
        %v2573 = vld [vmem:[%s2565 + $0x38] sm:$0xff]
        %v2574 = vld [vmem:[%s2565 + $0x40] sm:$0xff]
        %v2575 = vld [vmem:[%s2565 + $0x48] sm:$0xff]
        %v2576 = vld [vmem:[%s2565 + $0x50] sm:$0xff]
        %v2577 = vld [vmem:[%s2565 + $0x58] sm:$0xff]
        %v2578 = vld [vmem:[%s2565 + $0x60] sm:$0xff]
        %v2579 = vld [vmem:[%s2565 + $0x68] sm:$0xff]
        %v2580 = vld [vmem:[%s2565 + $0x70] sm:$0xff]
        %v2581 = vld [vmem:[%s2565 + $0x78] sm:$0xff]
        %2582 = vmatprep.subr.mxu0 %v2567
        %2583 = vmatpush1.msra.mxu0 %v2566
        %2584 = vmatprep.subr.mxu0 %v2571
        %2585 = vmatpush1.msra.mxu0 %v2570
        %2586 = vmatprep.subr.mxu0 %v2575
        %2587 = vmatpush1.msra.mxu0 %v2574
        %2588 = vmatprep.subr.mxu0 %v2579
        %2589 = vmatpush1.msra.mxu0 %v2578
        %2590 = vmatprep.subr.mxu0 0.0
        %2591 = vmatpush1.msra.mxu0 0.0
        %2592 = vmatprep.subr.mxu0 0.0
        %2593 = vmatpush1.msra.mxu0 0.0
        %2594 = vmatprep.subr.mxu0 0.0
        %2595 = vmatpush1.msra.mxu0 0.0
        %2596 = vmatprep.subr.mxu0 0.0
        %2597 = vmatpush1.msra.mxu0 0.0
        %2598 = vmatprep.subr.mxu0 0.0
        %2599 = vmatpush1.msra.mxu0 0.0
        %2600 = vmatprep.subr.mxu0 0.0
        %2601 = vmatpush1.msra.mxu0 0.0
        %2602 = vmatprep.subr.mxu0 0.0
        %2603 = vmatpush1.msra.mxu0 0.0
        %2604 = vmatprep.subr.mxu0 0.0
        %2605 = vmatpush1.msra.mxu0 0.0
        %2606 = vmatprep.subr.mxu0 0.0
        %2607 = vmatpush1.msra.mxu0 0.0
        %2608 = vmatprep.subr.mxu0 0.0
        %2609 = vmatpush1.msra.mxu0 0.0
        %2610 = vmatprep.subr.mxu0 0.0
        %2611 = vmatpush1.msra.mxu0 0.0
        %2612 = vmatprep.subr.mxu0 0.0
        %2613 = vmatpush1.msra.mxu0 0.0
        %2614 = vmatprep.subr.mxu0 0.0
        %2615 = vmatpush1.msra.mxu0 0.0
        %2616 = vmatprep.subr.mxu0 0.0
        %2617 = vmatpush1.msra.mxu0 0.0
        %2618 = vmatprep.subr.mxu0 0.0
        %2619 = vmatpush1.msra.mxu0 0.0
        %2620 = vmatprep.subr.mxu0 0.0
        %2621 = vmatpush1.msra.mxu0 0.0
        %2622 = vmatprep.subr.mxu0 0.0
        %2623 = vmatpush1.msra.mxu0 0.0
        %2624 = vmatprep.subr.mxu0 0.0
        %2625 = vmatpush1.msra.mxu0 0.0
        %2626 = vmatprep.subr.mxu0 0.0
        %2627 = vmatpush1.msra.mxu0 0.0
        %2628 = vmatprep.subr.mxu0 0.0
        %2629 = vmatpush1.msra.mxu0 0.0
        %2630 = vmatprep.subr.mxu0 0.0
        %2631 = vmatpush1.msra.mxu0 0.0
        %2632 = vmatprep.subr.mxu0 0.0
        %2633 = vmatpush1.msra.mxu0 0.0
        %2634 = vmatprep.subr.mxu0 0.0
        %2635 = vmatpush1.msra.mxu0 0.0
        %2636 = vmatprep.subr.mxu0 0.0
        %2637 = vmatpush1.msra.mxu0 0.0
        %2638 = vmatprep.subr.mxu0 0.0
        %2639 = vmatpush1.msra.mxu0 0.0
        %2640 = vmatprep.subr.mxu0 0.0
        %2641 = vmatpush1.msra.mxu0 0.0
        %2642 = vmatprep.subr.mxu0 0.0
        %2643 = vmatpush1.msra.mxu0 0.0
        %2644 = vmatprep.subr.mxu0 0.0
        %2645 = vmatpush1.msra.mxu0 0.0
        %2646 = vmatprep.mubr.f32.mxu0 0.0
        %2647 = vmatmul.mubr.f32.gmra.mrb[0].mxu0 %v416
        %v2648 = vpop.f32.mrb[0].mxu0
        %v2649 = vadd.f32 %v325, %v2648
        %v2650 = vpop.f32.mrb[0].mxu0
        %v2651 = vadd.f32 %v325, %v2650
        %2652 = vmatprep.mubr.f32.mxu0 0.0
        %2653 = vmatmul.mubr.f32.gmra.mrb[0].mxu0 %v419
        %v2654 = vpop.f32.mrb[0].mxu0
        %v2655 = vadd.f32 %v330, %v2654
        %v2656 = vpop.f32.mrb[0].mxu0
        %v2657 = vadd.f32 %v330, %v2656
        %2658 = vmatprep.mubr.f32.mxu0 0.0
        %2659 = vmatmul.mubr.f32.gmra.mrb[0].mxu0 %v422
        %v2660 = vpop.f32.mrb[0].mxu0
        %v2661 = vadd.f32 %v335, %v2660
        %v2662 = vpop.f32.mrb[0].mxu0
        %v2663 = vadd.f32 %v335, %v2662
        %2664 = vmatprep.mubr.f32.mxu0 0.0
        %2665 = vmatmul.mubr.f32.gmra.mrb[0].mxu0 %v425
        %v2666 = vpop.f32.mrb[0].mxu0
        %v2667 = vadd.f32 %v340, %v2666
        %v2668 = vpop.f32.mrb[0].mxu0
        %v2669 = vadd.f32 %v340, %v2668
        %2670 = vmatprep.mubr.f32.mxu0 0.0
        %2671 = vmatmul.mubr.f32.gmra.mrb[0].mxu0 %v428
        %v2672 = vpop.f32.mrb[0].mxu0
        %v2673 = vadd.f32 %v345, %v2672
        %v2674 = vpop.f32.mrb[0].mxu0
        %v2675 = vadd.f32 %v345, %v2674
        %2676 = vmatprep.mubr.f32.mxu0 0.0
        %2677 = vmatmul.mubr.f32.gmra.mrb[0].mxu0 %v431
        %v2678 = vpop.f32.mrb[0].mxu0
        %v2679 = vadd.f32 %v350, %v2678
        %v2680 = vpop.f32.mrb[0].mxu0
        %v2681 = vadd.f32 %v350, %v2680
        %2682 = vmatprep.mubr.f32.mxu0 0.0
        %2683 = vmatmul.mubr.f32.gmra.mrb[0].mxu0 %v434
        %v2684 = vpop.f32.mrb[0].mxu0
        %v2685 = vadd.f32 %v355, %v2684
        %v2686 = vpop.f32.mrb[0].mxu0
        %v2687 = vadd.f32 %v355, %v2686
        %2688 = vmatprep.mubr.f32.mxu0 0.0
        %2689 = vmatmul.mubr.f32.gmra.mrb[0].mxu0 %v437
        %v2690 = vpop.f32.mrb[0].mxu0
        %v2691 = vadd.f32 %v360, %v2690
        %v2692 = vpop.f32.mrb[0].mxu0
        %v2693 = vadd.f32 %v360, %v2692
        %2694 = vmatprep.mubr.f32.mxu0 0.0
        %2695 = vmatmul.mubr.f32.gmra.mrb[0].mxu0 %v440
        %v2696 = vpop.f32.mrb[0].mxu0
        %v2697 = vadd.f32 %v365, %v2696
        %v2698 = vpop.f32.mrb[0].mxu0
        %v2699 = vadd.f32 %v365, %v2698
        %2700 = vmatprep.mubr.f32.mxu0 0.0
        %2701 = vmatmul.mubr.f32.gmra.mrb[0].mxu0 %v443
        %v2702 = vpop.f32.mrb[0].mxu0
        %v2703 = vadd.f32 %v370, %v2702
        %v2704 = vpop.f32.mrb[0].mxu0
        %v2705 = vadd.f32 %v370, %v2704
        %2706 = vmatprep.mubr.f32.mxu0 0.0
        %2707 = vmatmul.mubr.f32.gmra.mrb[0].mxu0 %v446
        %v2708 = vpop.f32.mrb[0].mxu0
        %v2709 = vadd.f32 %v375, %v2708
        %v2710 = vpop.f32.mrb[0].mxu0
        %v2711 = vadd.f32 %v375, %v2710
        %2712 = vmatprep.mubr.f32.mxu0 0.0
        %2713 = vmatmul.mubr.f32.gmra.mrb[0].mxu0 %v449
        %v2714 = vpop.f32.mrb[0].mxu0
        %v2715 = vadd.f32 %v380, %v2714
        %v2716 = vpop.f32.mrb[0].mxu0
        %v2717 = vadd.f32 %v380, %v2716
        %2718 = vdwg.mxu0
        %2719 = vmatprep.subr.mxu0 %v2569
        %2720 = vmatpush1.msra.mxu0 %v2568
        %2721 = vmatprep.subr.mxu0 %v2573
        %2722 = vmatpush1.msra.mxu0 %v2572
        %2723 = vmatprep.subr.mxu0 %v2577
        %2724 = vmatpush1.msra.mxu0 %v2576
        %2725 = vmatprep.subr.mxu0 %v2581
        %2726 = vmatpush1.msra.mxu0 %v2580
        %2727 = vmatprep.subr.mxu0 0.0
        %2728 = vmatpush1.msra.mxu0 0.0
        %2729 = vmatprep.subr.mxu0 0.0
        %2730 = vmatpush1.msra.mxu0 0.0
        %2731 = vmatprep.subr.mxu0 0.0
        %2732 = vmatpush1.msra.mxu0 0.0
        %2733 = vmatprep.subr.mxu0 0.0
        %2734 = vmatpush1.msra.mxu0 0.0
        %2735 = vmatprep.subr.mxu0 0.0
        %2736 = vmatpush1.msra.mxu0 0.0
        %2737 = vmatprep.subr.mxu0 0.0
        %2738 = vmatpush1.msra.mxu0 0.0
        %2739 = vmatprep.subr.mxu0 0.0
        %2740 = vmatpush1.msra.mxu0 0.0
        %2741 = vmatprep.subr.mxu0 0.0
        %2742 = vmatpush1.msra.mxu0 0.0
        %2743 = vmatprep.subr.mxu0 0.0
        %2744 = vmatpush1.msra.mxu0 0.0
        %2745 = vmatprep.subr.mxu0 0.0
        %2746 = vmatpush1.msra.mxu0 0.0
        %2747 = vmatprep.subr.mxu0 0.0
        %2748 = vmatpush1.msra.mxu0 0.0
        %2749 = vmatprep.subr.mxu0 0.0
        %2750 = vmatpush1.msra.mxu0 0.0
        %2751 = vmatprep.subr.mxu0 0.0
        %2752 = vmatpush1.msra.mxu0 0.0
        %2753 = vmatprep.subr.mxu0 0.0
        %2754 = vmatpush1.msra.mxu0 0.0
        %2755 = vmatprep.subr.mxu0 0.0
        %2756 = vmatpush1.msra.mxu0 0.0
        %2757 = vmatprep.subr.mxu0 0.0
        %2758 = vmatpush1.msra.mxu0 0.0
        %2759 = vmatprep.subr.mxu0 0.0
        %2760 = vmatpush1.msra.mxu0 0.0
        %2761 = vmatprep.subr.mxu0 0.0
        %2762 = vmatpush1.msra.mxu0 0.0
        %2763 = vmatprep.subr.mxu0 0.0
        %2764 = vmatpush1.msra.mxu0 0.0
        %2765 = vmatprep.subr.mxu0 0.0
        %2766 = vmatpush1.msra.mxu0 0.0
        %2767 = vmatprep.subr.mxu0 0.0
        %2768 = vmatpush1.msra.mxu0 0.0
        %2769 = vmatprep.subr.mxu0 0.0
        %2770 = vmatpush1.msra.mxu0 0.0
        %2771 = vmatprep.subr.mxu0 0.0
        %2772 = vmatpush1.msra.mxu0 0.0
        %2773 = vmatprep.subr.mxu0 0.0
        %2774 = vmatpush1.msra.mxu0 0.0
        %2775 = vmatprep.subr.mxu0 0.0
        %2776 = vmatpush1.msra.mxu0 0.0
        %2777 = vmatprep.subr.mxu0 0.0
        %2778 = vmatpush1.msra.mxu0 0.0
        %2779 = vmatprep.subr.mxu0 0.0
        %2780 = vmatpush1.msra.mxu0 0.0
        %2781 = vmatprep.subr.mxu0 0.0
        %2782 = vmatpush1.msra.mxu0 0.0
        %2783 = vmatprep.mubr.f32.mxu0 0.0
        %2784 = vmatmul.mubr.f32.gmra.mrb[0].mxu0 %v416
        %v2785 = vpop.f32.mrb[0].mxu0
        %v2786 = vadd.f32 %v325, %v2785
        %v2787 = vpop.f32.mrb[0].mxu0
        %v2788 = vadd.f32 %v325, %v2787
        %2789 = vmatprep.mubr.f32.mxu0 0.0
        %2790 = vmatmul.mubr.f32.gmra.mrb[0].mxu0 %v419
        %v2791 = vpop.f32.mrb[0].mxu0
        %v2792 = vadd.f32 %v330, %v2791
        %v2793 = vpop.f32.mrb[0].mxu0
        %v2794 = vadd.f32 %v330, %v2793
        %2795 = vmatprep.mubr.f32.mxu0 0.0
        %2796 = vmatmul.mubr.f32.gmra.mrb[0].mxu0 %v422
        %v2797 = vpop.f32.mrb[0].mxu0
        %v2798 = vadd.f32 %v335, %v2797
        %v2799 = vpop.f32.mrb[0].mxu0
        %v2800 = vadd.f32 %v335, %v2799
        %2801 = vmatprep.mubr.f32.mxu0 0.0
        %2802 = vmatmul.mubr.f32.gmra.mrb[0].mxu0 %v425
        %v2803 = vpop.f32.mrb[0].mxu0
        %v2804 = vadd.f32 %v340, %v2803
        %v2805 = vpop.f32.mrb[0].mxu0
        %v2806 = vadd.f32 %v340, %v2805
        %2807 = vmatprep.mubr.f32.mxu0 0.0
        %2808 = vmatmul.mubr.f32.gmra.mrb[0].mxu0 %v428
        %v2809 = vpop.f32.mrb[0].mxu0
        %v2810 = vadd.f32 %v345, %v2809
        %v2811 = vpop.f32.mrb[0].mxu0
        %v2812 = vadd.f32 %v345, %v2811
        %2813 = vmatprep.mubr.f32.mxu0 0.0
        %2814 = vmatmul.mubr.f32.gmra.mrb[0].mxu0 %v431
        %v2815 = vpop.f32.mrb[0].mxu0
        %v2816 = vadd.f32 %v350, %v2815
        %v2817 = vpop.f32.mrb[0].mxu0
        %v2818 = vadd.f32 %v350, %v2817
        %2819 = vmatprep.mubr.f32.mxu0 0.0
        %2820 = vmatmul.mubr.f32.gmra.mrb[0].mxu0 %v434
        %v2821 = vpop.f32.mrb[0].mxu0
        %v2822 = vadd.f32 %v355, %v2821
        %v2823 = vpop.f32.mrb[0].mxu0
        %v2824 = vadd.f32 %v355, %v2823
        %2825 = vmatprep.mubr.f32.mxu0 0.0
        %2826 = vmatmul.mubr.f32.gmra.mrb[0].mxu0 %v437
        %v2827 = vpop.f32.mrb[0].mxu0
        %v2828 = vadd.f32 %v360, %v2827
        %v2829 = vpop.f32.mrb[0].mxu0
        %v2830 = vadd.f32 %v360, %v2829
        %2831 = vmatprep.mubr.f32.mxu0 0.0
        %2832 = vmatmul.mubr.f32.gmra.mrb[0].mxu0 %v440
        %v2833 = vpop.f32.mrb[0].mxu0
        %v2834 = vadd.f32 %v365, %v2833
        %v2835 = vpop.f32.mrb[0].mxu0
        %v2836 = vadd.f32 %v365, %v2835
        %2837 = vmatprep.mubr.f32.mxu0 0.0
        %2838 = vmatmul.mubr.f32.gmra.mrb[0].mxu0 %v443
        %v2839 = vpop.f32.mrb[0].mxu0
        %v2840 = vadd.f32 %v370, %v2839
        %v2841 = vpop.f32.mrb[0].mxu0
        %v2842 = vadd.f32 %v370, %v2841
        %2843 = vmatprep.mubr.f32.mxu0 0.0
        %2844 = vmatmul.mubr.f32.gmra.mrb[0].mxu0 %v446
        %v2845 = vpop.f32.mrb[0].mxu0
        %v2846 = vadd.f32 %v375, %v2845
        %v2847 = vpop.f32.mrb[0].mxu0
        %v2848 = vadd.f32 %v375, %v2847
        %2849 = vmatprep.mubr.f32.mxu0 0.0
        %2850 = vmatmul.mubr.f32.gmra.mrb[0].mxu0 %v449
        %v2851 = vpop.f32.mrb[0].mxu0
        %v2852 = vadd.f32 %v380, %v2851
        %v2853 = vpop.f32.mrb[0].mxu0
        %v2854 = vadd.f32 %v380, %v2853
        %2855 = vdwg.mxu0
        %2856 = vmatprep.subr.mxu0 %v2533
        %2857 = vmatpush1.msra.mxu0 %v2532
        %2858 = vmatprep.subr.mxu0 %v2537
        %2859 = vmatpush1.msra.mxu0 %v2536
        %2860 = vmatprep.subr.mxu0 %v2541
        %2861 = vmatpush1.msra.mxu0 %v2540
        %2862 = vmatprep.subr.mxu0 %v2545
        %2863 = vmatpush1.msra.mxu0 %v2544
        %2864 = vmatprep.subr.mxu0 0.0
        %2865 = vmatpush1.msra.mxu0 0.0
        %2866 = vmatprep.subr.mxu0 0.0
        %2867 = vmatpush1.msra.mxu0 0.0
        %2868 = vmatprep.subr.mxu0 0.0
        %2869 = vmatpush1.msra.mxu0 0.0
        %2870 = vmatprep.subr.mxu0 0.0
        %2871 = vmatpush1.msra.mxu0 0.0
        %2872 = vmatprep.subr.mxu0 0.0
        %2873 = vmatpush1.msra.mxu0 0.0
        %2874 = vmatprep.subr.mxu0 0.0
        %2875 = vmatpush1.msra.mxu0 0.0
        %2876 = vmatprep.subr.mxu0 0.0
        %2877 = vmatpush1.msra.mxu0 0.0
        %2878 = vmatprep.subr.mxu0 0.0
        %2879 = vmatpush1.msra.mxu0 0.0
        %2880 = vmatprep.subr.mxu0 0.0
        %2881 = vmatpush1.msra.mxu0 0.0
        %2882 = vmatprep.subr.mxu0 0.0
        %2883 = vmatpush1.msra.mxu0 0.0
        %2884 = vmatprep.subr.mxu0 0.0
        %2885 = vmatpush1.msra.mxu0 0.0
        %2886 = vmatprep.subr.mxu0 0.0
        %2887 = vmatpush1.msra.mxu0 0.0
        %2888 = vmatprep.subr.mxu0 0.0
        %2889 = vmatpush1.msra.mxu0 0.0
        %2890 = vmatprep.subr.mxu0 0.0
        %2891 = vmatpush1.msra.mxu0 0.0
        %2892 = vmatprep.subr.mxu0 0.0
        %2893 = vmatpush1.msra.mxu0 0.0
        %2894 = vmatprep.subr.mxu0 0.0
        %2895 = vmatpush1.msra.mxu0 0.0
        %2896 = vmatprep.subr.mxu0 0.0
        %2897 = vmatpush1.msra.mxu0 0.0
        %2898 = vmatprep.subr.mxu0 0.0
        %2899 = vmatpush1.msra.mxu0 0.0
        %2900 = vmatprep.subr.mxu0 0.0
        %2901 = vmatpush1.msra.mxu0 0.0
        %2902 = vmatprep.subr.mxu0 0.0
        %2903 = vmatpush1.msra.mxu0 0.0
        %2904 = vmatprep.subr.mxu0 0.0
        %2905 = vmatpush1.msra.mxu0 0.0
        %2906 = vmatprep.subr.mxu0 0.0
        %2907 = vmatpush1.msra.mxu0 0.0
        %2908 = vmatprep.subr.mxu0 0.0
        %2909 = vmatpush1.msra.mxu0 0.0
        %2910 = vmatprep.subr.mxu0 0.0
        %2911 = vmatpush1.msra.mxu0 0.0
        %2912 = vmatprep.subr.mxu0 0.0
        %2913 = vmatpush1.msra.mxu0 0.0
        %2914 = vmatprep.subr.mxu0 0.0
        %2915 = vmatpush1.msra.mxu0 0.0
        %2916 = vmatprep.subr.mxu0 0.0
        %2917 = vmatpush1.msra.mxu0 0.0
        %2918 = vmatprep.subr.mxu0 0.0
        %2919 = vmatpush1.msra.mxu0 0.0
        %2920 = vmatprep.mubr.f32.mxu0 0.0
        %2921 = vmatmul.mubr.f32.gmra.mrb[0].mxu0 %v726
        %v2922 = vpop.f32.mrb[0].mxu0
        %v2923 = vadd.f32 0.0, %v2922
        %v2924 = vpop.f32.mrb[0].mxu0
        %v2925 = vadd.f32 0.0, %v2924
        %2926 = vmatprep.mubr.f32.mxu0 0.0
        %2927 = vmatmul.mubr.f32.gmra.mrb[0].mxu0 %v729
        %v2928 = vpop.f32.mrb[0].mxu0
        %v2929 = vadd.f32 0.0, %v2928
        %v2930 = vpop.f32.mrb[0].mxu0
        %v2931 = vadd.f32 0.0, %v2930
        %2932 = vmatprep.mubr.f32.mxu0 0.0
        %2933 = vmatmul.mubr.f32.gmra.mrb[0].mxu0 %v732
        %v2934 = vpop.f32.mrb[0].mxu0
        %v2935 = vadd.f32 0.0, %v2934
        %v2936 = vpop.f32.mrb[0].mxu0
        %v2937 = vadd.f32 0.0, %v2936
        %2938 = vmatprep.mubr.f32.mxu0 0.0
        %2939 = vmatmul.mubr.f32.gmra.mrb[0].mxu0 %v735
        %v2940 = vpop.f32.mrb[0].mxu0
        %v2941 = vadd.f32 0.0, %v2940
        %v2942 = vpop.f32.mrb[0].mxu0
        %v2943 = vadd.f32 0.0, %v2942
        %2944 = vmatprep.mubr.f32.mxu0 0.0
        %2945 = vmatmul.mubr.f32.gmra.mrb[0].mxu0 %v738
        %v2946 = vpop.f32.mrb[0].mxu0
        %v2947 = vadd.f32 0.0, %v2946
        %v2948 = vpop.f32.mrb[0].mxu0
        %v2949 = vadd.f32 0.0, %v2948
        %2950 = vmatprep.mubr.f32.mxu0 0.0
        %2951 = vmatmul.mubr.f32.gmra.mrb[0].mxu0 %v741
        %v2952 = vpop.f32.mrb[0].mxu0
        %v2953 = vadd.f32 0.0, %v2952
        %v2954 = vpop.f32.mrb[0].mxu0
        %v2955 = vadd.f32 0.0, %v2954
        %2956 = vmatprep.mubr.f32.mxu0 0.0
        %2957 = vmatmul.mubr.f32.gmra.mrb[0].mxu0 %v744
        %v2958 = vpop.f32.mrb[0].mxu0
        %v2959 = vadd.f32 0.0, %v2958
        %v2960 = vpop.f32.mrb[0].mxu0
        %v2961 = vadd.f32 0.0, %v2960
        %2962 = vmatprep.mubr.f32.mxu0 0.0
        %2963 = vmatmul.mubr.f32.gmra.mrb[0].mxu0 %v747
        %v2964 = vpop.f32.mrb[0].mxu0
        %v2965 = vadd.f32 0.0, %v2964
        %v2966 = vpop.f32.mrb[0].mxu0
        %v2967 = vadd.f32 0.0, %v2966
        %2968 = vdwg.mxu0
        %2969 = vmatprep.subr.mxu0 %v2535
        %2970 = vmatpush1.msra.mxu0 %v2534
        %2971 = vmatprep.subr.mxu0 %v2539
        %2972 = vmatpush1.msra.mxu0 %v2538
        %2973 = vmatprep.subr.mxu0 %v2543
        %2974 = vmatpush1.msra.mxu0 %v2542
        %2975 = vmatprep.subr.mxu0 %v2547
        %2976 = vmatpush1.msra.mxu0 %v2546
        %2977 = vmatprep.subr.mxu0 0.0
        %2978 = vmatpush1.msra.mxu0 0.0
        %2979 = vmatprep.subr.mxu0 0.0
        %2980 = vmatpush1.msra.mxu0 0.0
        %2981 = vmatprep.subr.mxu0 0.0
        %2982 = vmatpush1.msra.mxu0 0.0
        %2983 = vmatprep.subr.mxu0 0.0
        %2984 = vmatpush1.msra.mxu0 0.0
        %2985 = vmatprep.subr.mxu0 0.0
        %2986 = vmatpush1.msra.mxu0 0.0
        %2987 = vmatprep.subr.mxu0 0.0
        %2988 = vmatpush1.msra.mxu0 0.0
        %2989 = vmatprep.subr.mxu0 0.0
        %2990 = vmatpush1.msra.mxu0 0.0
        %2991 = vmatprep.subr.mxu0 0.0
        %2992 = vmatpush1.msra.mxu0 0.0
        %2993 = vmatprep.subr.mxu0 0.0
        %2994 = vmatpush1.msra.mxu0 0.0
        %2995 = vmatprep.subr.mxu0 0.0
        %2996 = vmatpush1.msra.mxu0 0.0
        %2997 = vmatprep.subr.mxu0 0.0
        %2998 = vmatpush1.msra.mxu0 0.0
        %2999 = vmatprep.subr.mxu0 0.0
        %3000 = vmatpush1.msra.mxu0 0.0
        %3001 = vmatprep.subr.mxu0 0.0
        %3002 = vmatpush1.msra.mxu0 0.0
        %3003 = vmatprep.subr.mxu0 0.0
        %3004 = vmatpush1.msra.mxu0 0.0
        %3005 = vmatprep.subr.mxu0 0.0
        %3006 = vmatpush1.msra.mxu0 0.0
        %3007 = vmatprep.subr.mxu0 0.0
        %3008 = vmatpush1.msra.mxu0 0.0
        %3009 = vmatprep.subr.mxu0 0.0
        %3010 = vmatpush1.msra.mxu0 0.0
        %3011 = vmatprep.subr.mxu0 0.0
        %3012 = vmatpush1.msra.mxu0 0.0
        %3013 = vmatprep.subr.mxu0 0.0
        %3014 = vmatpush1.msra.mxu0 0.0
        %3015 = vmatprep.subr.mxu0 0.0
        %3016 = vmatpush1.msra.mxu0 0.0
        %3017 = vmatprep.subr.mxu0 0.0
        %3018 = vmatpush1.msra.mxu0 0.0
        %3019 = vmatprep.subr.mxu0 0.0
        %3020 = vmatpush1.msra.mxu0 0.0
        %3021 = vmatprep.subr.mxu0 0.0
        %3022 = vmatpush1.msra.mxu0 0.0
        %3023 = vmatprep.subr.mxu0 0.0
        %3024 = vmatpush1.msra.mxu0 0.0
        %3025 = vmatprep.subr.mxu0 0.0
        %3026 = vmatpush1.msra.mxu0 0.0
        %3027 = vmatprep.subr.mxu0 0.0
        %3028 = vmatpush1.msra.mxu0 0.0
        %3029 = vmatprep.subr.mxu0 0.0
        %3030 = vmatpush1.msra.mxu0 0.0
        %3031 = vmatprep.subr.mxu0 0.0
        %3032 = vmatpush1.msra.mxu0 0.0
        %3033 = vmatprep.mubr.f32.mxu0 0.0
        %3034 = vmatmul.mubr.f32.gmra.mrb[0].mxu0 %v726
        %v3035 = vpop.f32.mrb[0].mxu0
        %v3036 = vadd.f32 0.0, %v3035
        %v3037 = vpop.f32.mrb[0].mxu0
        %v3038 = vadd.f32 0.0, %v3037
        %3039 = vmatprep.mubr.f32.mxu0 0.0
        %3040 = vmatmul.mubr.f32.gmra.mrb[0].mxu0 %v729
        %v3041 = vpop.f32.mrb[0].mxu0
        %v3042 = vadd.f32 0.0, %v3041
        %v3043 = vpop.f32.mrb[0].mxu0
        %v3044 = vadd.f32 0.0, %v3043
        %3045 = vmatprep.mubr.f32.mxu0 0.0
        %3046 = vmatmul.mubr.f32.gmra.mrb[0].mxu0 %v732
        %v3047 = vpop.f32.mrb[0].mxu0
        %v3048 = vadd.f32 0.0, %v3047
        %v3049 = vpop.f32.mrb[0].mxu0
        %v3050 = vadd.f32 0.0, %v3049
        %3051 = vmatprep.mubr.f32.mxu0 0.0
        %3052 = vmatmul.mubr.f32.gmra.mrb[0].mxu0 %v735
        %v3053 = vpop.f32.mrb[0].mxu0
        %v3054 = vadd.f32 0.0, %v3053
        %v3055 = vpop.f32.mrb[0].mxu0
        %v3056 = vadd.f32 0.0, %v3055
        %3057 = vmatprep.mubr.f32.mxu0 0.0
        %3058 = vmatmul.mubr.f32.gmra.mrb[0].mxu0 %v738
        %v3059 = vpop.f32.mrb[0].mxu0
        %v3060 = vadd.f32 0.0, %v3059
        %v3061 = vpop.f32.mrb[0].mxu0
        %v3062 = vadd.f32 0.0, %v3061
        %3063 = vmatprep.mubr.f32.mxu0 0.0
        %3064 = vmatmul.mubr.f32.gmra.mrb[0].mxu0 %v741
        %v3065 = vpop.f32.mrb[0].mxu0
        %v3066 = vadd.f32 0.0, %v3065
        %v3067 = vpop.f32.mrb[0].mxu0
        %v3068 = vadd.f32 0.0, %v3067
        %3069 = vmatprep.mubr.f32.mxu0 0.0
        %3070 = vmatmul.mubr.f32.gmra.mrb[0].mxu0 %v744
        %v3071 = vpop.f32.mrb[0].mxu0
        %v3072 = vadd.f32 0.0, %v3071
        %v3073 = vpop.f32.mrb[0].mxu0
        %v3074 = vadd.f32 0.0, %v3073
        %3075 = vmatprep.mubr.f32.mxu0 0.0
        %3076 = vmatmul.mubr.f32.gmra.mrb[0].mxu0 %v747
        %v3077 = vpop.f32.mrb[0].mxu0
        %v3078 = vadd.f32 0.0, %v3077
        %v3079 = vpop.f32.mrb[0].mxu0
        %v3080 = vadd.f32 0.0, %v3079
        %3081 = vdwg.mxu0
        %v3082 = vadd.f32 %v2649, %v2923
        %v3083 = vadd.f32 %v2651, %v2925
        %v3084 = vadd.f32 %v2786, %v3036
        %v3085 = vadd.f32 %v2788, %v3038
        %v3086 = vadd.f32 %v2655, %v2929
        %v3087 = vadd.f32 %v2657, %v2931
        %v3088 = vadd.f32 %v2792, %v3042
        %v3089 = vadd.f32 %v2794, %v3044
        %v3090 = vadd.f32 %v2661, %v2935
        %v3091 = vadd.f32 %v2663, %v2937
        %v3092 = vadd.f32 %v2798, %v3048
        %v3093 = vadd.f32 %v2800, %v3050
        %v3094 = vadd.f32 %v2667, %v2941
        %v3095 = vadd.f32 %v2669, %v2943
        %v3096 = vadd.f32 %v2804, %v3054
        %v3097 = vadd.f32 %v2806, %v3056
        %v3098 = vxor.u32 %v3082, 2147483648
        %v3099 = vxor.u32 %v3083, 2147483648
        %v3100 = vxor.u32 %v3084, 2147483648
        %v3101 = vxor.u32 %v3085, 2147483648
        %v3102 = vxor.u32 %v3086, 2147483648
        %v3103 = vxor.u32 %v3087, 2147483648
        %v3104 = vxor.u32 %v3088, 2147483648
        %v3105 = vxor.u32 %v3089, 2147483648
        %v3106 = vxor.u32 %v3090, 2147483648
        %v3107 = vxor.u32 %v3091, 2147483648
        %v3108 = vxor.u32 %v3092, 2147483648
        %v3109 = vxor.u32 %v3093, 2147483648
        %v3110 = vxor.u32 %v3094, 2147483648
        %v3111 = vxor.u32 %v3095, 2147483648
        %v3112 = vxor.u32 %v3096, 2147483648
        %v3113 = vxor.u32 %v3097, 2147483648
        %v3114 = vmul.f32 %v3098, 1.442695
        %v3115 = vpow.pop %v3114
        %v3116 = vmul.f32 %v3099, 1.442695
        %v3117 = vpow.pop %v3116
        %v3118 = vmul.f32 %v3100, 1.442695
        %v3119 = vpow.pop %v3118
        %v3120 = vmul.f32 %v3101, 1.442695
        %v3121 = vpow.pop %v3120
        %v3122 = vmul.f32 %v3102, 1.442695
        %v3123 = vpow.pop %v3122
        %v3124 = vmul.f32 %v3103, 1.442695
        %v3125 = vpow.pop %v3124
        %v3126 = vmul.f32 %v3104, 1.442695
        %v3127 = vpow.pop %v3126
        %v3128 = vmul.f32 %v3105, 1.442695
        %v3129 = vpow.pop %v3128
        %v3130 = vmul.f32 %v3106, 1.442695
        %v3131 = vpow.pop %v3130
        %v3132 = vmul.f32 %v3107, 1.442695
        %v3133 = vpow.pop %v3132
        %v3134 = vmul.f32 %v3108, 1.442695
        %v3135 = vpow.pop %v3134
        %v3136 = vmul.f32 %v3109, 1.442695
        %v3137 = vpow.pop %v3136
        %v3138 = vmul.f32 %v3110, 1.442695
        %v3139 = vpow.pop %v3138
        %v3140 = vmul.f32 %v3111, 1.442695
        %v3141 = vpow.pop %v3140
        %v3142 = vmul.f32 %v3112, 1.442695
        %v3143 = vpow.pop %v3142
        %v3144 = vmul.f32 %v3113, 1.442695
        %v3145 = vpow.pop %v3144
        %v3146 = vadd.f32 %v3115, 1.0
        %v3147 = vadd.f32 %v3117, 1.0
        %v3148 = vadd.f32 %v3119, 1.0
        %v3149 = vadd.f32 %v3121, 1.0
        %v3150 = vadd.f32 %v3123, 1.0
        %v3151 = vadd.f32 %v3125, 1.0
        %v3152 = vadd.f32 %v3127, 1.0
        %v3153 = vadd.f32 %v3129, 1.0
        %v3154 = vadd.f32 %v3131, 1.0
        %v3155 = vadd.f32 %v3133, 1.0
        %v3156 = vadd.f32 %v3135, 1.0
        %v3157 = vadd.f32 %v3137, 1.0
        %v3158 = vadd.f32 %v3139, 1.0
        %v3159 = vadd.f32 %v3141, 1.0
        %v3160 = vadd.f32 %v3143, 1.0
        %v3161 = vadd.f32 %v3145, 1.0
        %v3162 = vrcp.pop %v3146
        %v3163 = vmul.f32 1.0, %v3162
        %v3164 = vrcp.pop %v3147
        %v3165 = vmul.f32 1.0, %v3164
        %v3166 = vrcp.pop %v3148
        %v3167 = vmul.f32 1.0, %v3166
        %v3168 = vrcp.pop %v3149
        %v3169 = vmul.f32 1.0, %v3168
        %v3170 = vrcp.pop %v3150
        %v3171 = vmul.f32 1.0, %v3170
        %v3172 = vrcp.pop %v3151
        %v3173 = vmul.f32 1.0, %v3172
        %v3174 = vrcp.pop %v3152
        %v3175 = vmul.f32 1.0, %v3174
        %v3176 = vrcp.pop %v3153
        %v3177 = vmul.f32 1.0, %v3176
        %v3178 = vrcp.pop %v3154
        %v3179 = vmul.f32 1.0, %v3178
        %v3180 = vrcp.pop %v3155
        %v3181 = vmul.f32 1.0, %v3180
        %v3182 = vrcp.pop %v3156
        %v3183 = vmul.f32 1.0, %v3182
        %v3184 = vrcp.pop %v3157
        %v3185 = vmul.f32 1.0, %v3184
        %v3186 = vrcp.pop %v3158
        %v3187 = vmul.f32 1.0, %v3186
        %v3188 = vrcp.pop %v3159
        %v3189 = vmul.f32 1.0, %v3188
        %v3190 = vrcp.pop %v3160
        %v3191 = vmul.f32 1.0, %v3190
        %v3192 = vrcp.pop %v3161
        %v3193 = vmul.f32 1.0, %v3192
        %v3194 = vadd.f32 %v2673, %v2947
        %v3195 = vadd.f32 %v2675, %v2949
        %v3196 = vadd.f32 %v2810, %v3060
        %v3197 = vadd.f32 %v2812, %v3062
        %v3198 = vadd.f32 %v2679, %v2953
        %v3199 = vadd.f32 %v2681, %v2955
        %v3200 = vadd.f32 %v2816, %v3066
        %v3201 = vadd.f32 %v2818, %v3068
        %v3202 = vadd.f32 %v2685, %v2959
        %v3203 = vadd.f32 %v2687, %v2961
        %v3204 = vadd.f32 %v2822, %v3072
        %v3205 = vadd.f32 %v2824, %v3074
        %v3206 = vadd.f32 %v2691, %v2965
        %v3207 = vadd.f32 %v2693, %v2967
        %v3208 = vadd.f32 %v2828, %v3078
        %v3209 = vadd.f32 %v2830, %v3080
        %v3210 = vxor.u32 %v3194, 2147483648
        %v3211 = vxor.u32 %v3195, 2147483648
        %v3212 = vxor.u32 %v3196, 2147483648
        %v3213 = vxor.u32 %v3197, 2147483648
        %v3214 = vxor.u32 %v3198, 2147483648
        %v3215 = vxor.u32 %v3199, 2147483648
        %v3216 = vxor.u32 %v3200, 2147483648
        %v3217 = vxor.u32 %v3201, 2147483648
        %v3218 = vxor.u32 %v3202, 2147483648
        %v3219 = vxor.u32 %v3203, 2147483648
        %v3220 = vxor.u32 %v3204, 2147483648
        %v3221 = vxor.u32 %v3205, 2147483648
        %v3222 = vxor.u32 %v3206, 2147483648
        %v3223 = vxor.u32 %v3207, 2147483648
        %v3224 = vxor.u32 %v3208, 2147483648
        %v3225 = vxor.u32 %v3209, 2147483648
        %v3226 = vmul.f32 %v3210, 1.442695
        %v3227 = vpow.pop %v3226
        %v3228 = vmul.f32 %v3211, 1.442695
        %v3229 = vpow.pop %v3228
        %v3230 = vmul.f32 %v3212, 1.442695
        %v3231 = vpow.pop %v3230
        %v3232 = vmul.f32 %v3213, 1.442695
        %v3233 = vpow.pop %v3232
        %v3234 = vmul.f32 %v3214, 1.442695
        %v3235 = vpow.pop %v3234
        %v3236 = vmul.f32 %v3215, 1.442695
        %v3237 = vpow.pop %v3236
        %v3238 = vmul.f32 %v3216, 1.442695
        %v3239 = vpow.pop %v3238
        %v3240 = vmul.f32 %v3217, 1.442695
        %v3241 = vpow.pop %v3240
        %v3242 = vmul.f32 %v3218, 1.442695
        %v3243 = vpow.pop %v3242
        %v3244 = vmul.f32 %v3219, 1.442695
        %v3245 = vpow.pop %v3244
        %v3246 = vmul.f32 %v3220, 1.442695
        %v3247 = vpow.pop %v3246
        %v3248 = vmul.f32 %v3221, 1.442695
        %v3249 = vpow.pop %v3248
        %v3250 = vmul.f32 %v3222, 1.442695
        %v3251 = vpow.pop %v3250
        %v3252 = vmul.f32 %v3223, 1.442695
        %v3253 = vpow.pop %v3252
        %v3254 = vmul.f32 %v3224, 1.442695
        %v3255 = vpow.pop %v3254
        %v3256 = vmul.f32 %v3225, 1.442695
        %v3257 = vpow.pop %v3256
        %v3258 = vadd.f32 %v3227, 1.0
        %v3259 = vadd.f32 %v3229, 1.0
        %v3260 = vadd.f32 %v3231, 1.0
        %v3261 = vadd.f32 %v3233, 1.0
        %v3262 = vadd.f32 %v3235, 1.0
        %v3263 = vadd.f32 %v3237, 1.0
        %v3264 = vadd.f32 %v3239, 1.0
        %v3265 = vadd.f32 %v3241, 1.0
        %v3266 = vadd.f32 %v3243, 1.0
        %v3267 = vadd.f32 %v3245, 1.0
        %v3268 = vadd.f32 %v3247, 1.0
        %v3269 = vadd.f32 %v3249, 1.0
        %v3270 = vadd.f32 %v3251, 1.0
        %v3271 = vadd.f32 %v3253, 1.0
        %v3272 = vadd.f32 %v3255, 1.0
        %v3273 = vadd.f32 %v3257, 1.0
        %v3274 = vrcp.pop %v3258
        %v3275 = vmul.f32 1.0, %v3274
        %v3276 = vrcp.pop %v3259
        %v3277 = vmul.f32 1.0, %v3276
        %v3278 = vrcp.pop %v3260
        %v3279 = vmul.f32 1.0, %v3278
        %v3280 = vrcp.pop %v3261
        %v3281 = vmul.f32 1.0, %v3280
        %v3282 = vrcp.pop %v3262
        %v3283 = vmul.f32 1.0, %v3282
        %v3284 = vrcp.pop %v3263
        %v3285 = vmul.f32 1.0, %v3284
        %v3286 = vrcp.pop %v3264
        %v3287 = vmul.f32 1.0, %v3286
        %v3288 = vrcp.pop %v3265
        %v3289 = vmul.f32 1.0, %v3288
        %v3290 = vrcp.pop %v3266
        %v3291 = vmul.f32 1.0, %v3290
        %v3292 = vrcp.pop %v3267
        %v3293 = vmul.f32 1.0, %v3292
        %v3294 = vrcp.pop %v3268
        %v3295 = vmul.f32 1.0, %v3294
        %v3296 = vrcp.pop %v3269
        %v3297 = vmul.f32 1.0, %v3296
        %v3298 = vrcp.pop %v3270
        %v3299 = vmul.f32 1.0, %v3298
        %v3300 = vrcp.pop %v3271
        %v3301 = vmul.f32 1.0, %v3300
        %v3302 = vrcp.pop %v3272
        %v3303 = vmul.f32 1.0, %v3302
        %v3304 = vrcp.pop %v3273
        %v3305 = vmul.f32 1.0, %v3304
        %v3306 = vmul.f32 %v3275, %v2532
        %v3307 = vmul.f32 %v3277, %v2533
        %v3308 = vmul.f32 %v3279, %v2534
        %v3309 = vmul.f32 %v3281, %v2535
        %v3310 = vmul.f32 %v3283, %v2536
        %v3311 = vmul.f32 %v3285, %v2537
        %v3312 = vmul.f32 %v3287, %v2538
        %v3313 = vmul.f32 %v3289, %v2539
        %v3314 = vmul.f32 %v3291, %v2540
        %v3315 = vmul.f32 %v3293, %v2541
        %v3316 = vmul.f32 %v3295, %v2542
        %v3317 = vmul.f32 %v3297, %v2543
        %v3318 = vmul.f32 %v3299, %v2544
        %v3319 = vmul.f32 %v3301, %v2545
        %v3320 = vmul.f32 %v3303, %v2546
        %v3321 = vmul.f32 %v3305, %v2547
        %3322 = vmatprep.subr.mxu0 %v3307
        %3323 = vmatpush1.msra.mxu0 %v3306
        %3324 = vmatprep.subr.mxu0 %v3311
        %3325 = vmatpush1.msra.mxu0 %v3310
        %3326 = vmatprep.subr.mxu0 %v3315
        %3327 = vmatpush1.msra.mxu0 %v3314
        %3328 = vmatprep.subr.mxu0 %v3319
        %3329 = vmatpush1.msra.mxu0 %v3318
        %3330 = vmatprep.subr.mxu0 0.0
        %3331 = vmatpush1.msra.mxu0 0.0
        %3332 = vmatprep.subr.mxu0 0.0
        %3333 = vmatpush1.msra.mxu0 0.0
        %3334 = vmatprep.subr.mxu0 0.0
        %3335 = vmatpush1.msra.mxu0 0.0
        %3336 = vmatprep.subr.mxu0 0.0
        %3337 = vmatpush1.msra.mxu0 0.0
        %3338 = vmatprep.subr.mxu0 0.0
        %3339 = vmatpush1.msra.mxu0 0.0
        %3340 = vmatprep.subr.mxu0 0.0
        %3341 = vmatpush1.msra.mxu0 0.0
        %3342 = vmatprep.subr.mxu0 0.0
        %3343 = vmatpush1.msra.mxu0 0.0
        %3344 = vmatprep.subr.mxu0 0.0
        %3345 = vmatpush1.msra.mxu0 0.0
        %3346 = vmatprep.subr.mxu0 0.0
        %3347 = vmatpush1.msra.mxu0 0.0
        %3348 = vmatprep.subr.mxu0 0.0
        %3349 = vmatpush1.msra.mxu0 0.0
        %3350 = vmatprep.subr.mxu0 0.0
        %3351 = vmatpush1.msra.mxu0 0.0
        %3352 = vmatprep.subr.mxu0 0.0
        %3353 = vmatpush1.msra.mxu0 0.0
        %3354 = vmatprep.subr.mxu0 0.0
        %3355 = vmatpush1.msra.mxu0 0.0
        %3356 = vmatprep.subr.mxu0 0.0
        %3357 = vmatpush1.msra.mxu0 0.0
        %3358 = vmatprep.subr.mxu0 0.0
        %3359 = vmatpush1.msra.mxu0 0.0
        %3360 = vmatprep.subr.mxu0 0.0
        %3361 = vmatpush1.msra.mxu0 0.0
        %3362 = vmatprep.subr.mxu0 0.0
        %3363 = vmatpush1.msra.mxu0 0.0
        %3364 = vmatprep.subr.mxu0 0.0
        %3365 = vmatpush1.msra.mxu0 0.0
        %3366 = vmatprep.subr.mxu0 0.0
        %3367 = vmatpush1.msra.mxu0 0.0
        %3368 = vmatprep.subr.mxu0 0.0
        %3369 = vmatpush1.msra.mxu0 0.0
        %3370 = vmatprep.subr.mxu0 0.0
        %3371 = vmatpush1.msra.mxu0 0.0
        %3372 = vmatprep.subr.mxu0 0.0
        %3373 = vmatpush1.msra.mxu0 0.0
        %3374 = vmatprep.subr.mxu0 0.0
        %3375 = vmatpush1.msra.mxu0 0.0
        %3376 = vmatprep.subr.mxu0 0.0
        %3377 = vmatpush1.msra.mxu0 0.0
        %3378 = vmatprep.subr.mxu0 0.0
        %3379 = vmatpush1.msra.mxu0 0.0
        %3380 = vmatprep.subr.mxu0 0.0
        %3381 = vmatpush1.msra.mxu0 0.0
        %3382 = vmatprep.subr.mxu0 0.0
        %3383 = vmatpush1.msra.mxu0 0.0
        %3384 = vmatprep.subr.mxu0 0.0
        %3385 = vmatpush1.msra.mxu0 0.0
        %3386 = vmatprep.mubr.f32.mxu0 0.0
        %3387 = vmatmul.mubr.f32.gmra.mrb[0].mxu0 %v1216
        %v3388 = vpop.f32.mrb[0].mxu0
        %v3389 = vadd.f32 0.0, %v3388
        %v3390 = vpop.f32.mrb[0].mxu0
        %v3391 = vadd.f32 0.0, %v3390
        %3392 = vmatprep.mubr.f32.mxu0 0.0
        %3393 = vmatmul.mubr.f32.gmra.mrb[0].mxu0 %v1219
        %v3394 = vpop.f32.mrb[0].mxu0
        %v3395 = vadd.f32 0.0, %v3394
        %v3396 = vpop.f32.mrb[0].mxu0
        %v3397 = vadd.f32 0.0, %v3396
        %3398 = vmatprep.mubr.f32.mxu0 0.0
        %3399 = vmatmul.mubr.f32.gmra.mrb[0].mxu0 %v1222
        %v3400 = vpop.f32.mrb[0].mxu0
        %v3401 = vadd.f32 0.0, %v3400
        %v3402 = vpop.f32.mrb[0].mxu0
        %v3403 = vadd.f32 0.0, %v3402
        %3404 = vmatprep.mubr.f32.mxu0 0.0
        %3405 = vmatmul.mubr.f32.gmra.mrb[0].mxu0 %v1225
        %v3406 = vpop.f32.mrb[0].mxu0
        %v3407 = vadd.f32 0.0, %v3406
        %v3408 = vpop.f32.mrb[0].mxu0
        %v3409 = vadd.f32 0.0, %v3408
        %3410 = vdwg.mxu0
        %3411 = vmatprep.subr.mxu0 %v3309
        %3412 = vmatpush1.msra.mxu0 %v3308
        %3413 = vmatprep.subr.mxu0 %v3313
        %3414 = vmatpush1.msra.mxu0 %v3312
        %3415 = vmatprep.subr.mxu0 %v3317
        %3416 = vmatpush1.msra.mxu0 %v3316
        %3417 = vmatprep.subr.mxu0 %v3321
        %3418 = vmatpush1.msra.mxu0 %v3320
        %3419 = vmatprep.subr.mxu0 0.0
        %3420 = vmatpush1.msra.mxu0 0.0
        %3421 = vmatprep.subr.mxu0 0.0
        %3422 = vmatpush1.msra.mxu0 0.0
        %3423 = vmatprep.subr.mxu0 0.0
        %3424 = vmatpush1.msra.mxu0 0.0
        %3425 = vmatprep.subr.mxu0 0.0
        %3426 = vmatpush1.msra.mxu0 0.0
        %3427 = vmatprep.subr.mxu0 0.0
        %3428 = vmatpush1.msra.mxu0 0.0
        %3429 = vmatprep.subr.mxu0 0.0
        %3430 = vmatpush1.msra.mxu0 0.0
        %3431 = vmatprep.subr.mxu0 0.0
        %3432 = vmatpush1.msra.mxu0 0.0
        %3433 = vmatprep.subr.mxu0 0.0
        %3434 = vmatpush1.msra.mxu0 0.0
        %3435 = vmatprep.subr.mxu0 0.0
        %3436 = vmatpush1.msra.mxu0 0.0
        %3437 = vmatprep.subr.mxu0 0.0
        %3438 = vmatpush1.msra.mxu0 0.0
        %3439 = vmatprep.subr.mxu0 0.0
        %3440 = vmatpush1.msra.mxu0 0.0
        %3441 = vmatprep.subr.mxu0 0.0
        %3442 = vmatpush1.msra.mxu0 0.0
        %3443 = vmatprep.subr.mxu0 0.0
        %3444 = vmatpush1.msra.mxu0 0.0
        %3445 = vmatprep.subr.mxu0 0.0
        %3446 = vmatpush1.msra.mxu0 0.0
        %3447 = vmatprep.subr.mxu0 0.0
        %3448 = vmatpush1.msra.mxu0 0.0
        %3449 = vmatprep.subr.mxu0 0.0
        %3450 = vmatpush1.msra.mxu0 0.0
        %3451 = vmatprep.subr.mxu0 0.0
        %3452 = vmatpush1.msra.mxu0 0.0
        %3453 = vmatprep.subr.mxu0 0.0
        %3454 = vmatpush1.msra.mxu0 0.0
        %3455 = vmatprep.subr.mxu0 0.0
        %3456 = vmatpush1.msra.mxu0 0.0
        %3457 = vmatprep.subr.mxu0 0.0
        %3458 = vmatpush1.msra.mxu0 0.0
        %3459 = vmatprep.subr.mxu0 0.0
        %3460 = vmatpush1.msra.mxu0 0.0
        %3461 = vmatprep.subr.mxu0 0.0
        %3462 = vmatpush1.msra.mxu0 0.0
        %3463 = vmatprep.subr.mxu0 0.0
        %3464 = vmatpush1.msra.mxu0 0.0
        %3465 = vmatprep.subr.mxu0 0.0
        %3466 = vmatpush1.msra.mxu0 0.0
        %3467 = vmatprep.subr.mxu0 0.0
        %3468 = vmatpush1.msra.mxu0 0.0
        %3469 = vmatprep.subr.mxu0 0.0
        %3470 = vmatpush1.msra.mxu0 0.0
        %3471 = vmatprep.subr.mxu0 0.0
        %3472 = vmatpush1.msra.mxu0 0.0
        %3473 = vmatprep.subr.mxu0 0.0
        %3474 = vmatpush1.msra.mxu0 0.0
        %3475 = vmatprep.mubr.f32.mxu0 0.0
        %3476 = vmatmul.mubr.f32.gmra.mrb[0].mxu0 %v1216
        %v3477 = vpop.f32.mrb[0].mxu0
        %v3478 = vadd.f32 0.0, %v3477
        %v3479 = vpop.f32.mrb[0].mxu0
        %v3480 = vadd.f32 0.0, %v3479
        %3481 = vmatprep.mubr.f32.mxu0 0.0
        %3482 = vmatmul.mubr.f32.gmra.mrb[0].mxu0 %v1219
        %v3483 = vpop.f32.mrb[0].mxu0
        %v3484 = vadd.f32 0.0, %v3483
        %v3485 = vpop.f32.mrb[0].mxu0
        %v3486 = vadd.f32 0.0, %v3485
        %3487 = vmatprep.mubr.f32.mxu0 0.0
        %3488 = vmatmul.mubr.f32.gmra.mrb[0].mxu0 %v1222
        %v3489 = vpop.f32.mrb[0].mxu0
        %v3490 = vadd.f32 0.0, %v3489
        %v3491 = vpop.f32.mrb[0].mxu0
        %v3492 = vadd.f32 0.0, %v3491
        %3493 = vmatprep.mubr.f32.mxu0 0.0
        %3494 = vmatmul.mubr.f32.gmra.mrb[0].mxu0 %v1225
        %v3495 = vpop.f32.mrb[0].mxu0
        %v3496 = vadd.f32 0.0, %v3495
        %v3497 = vpop.f32.mrb[0].mxu0
        %v3498 = vadd.f32 0.0, %v3497
        %3499 = vdwg.mxu0
        %v3500 = vsub.f32 1.0, %v3163
        %v3501 = vsub.f32 1.0, %v3165
        %v3502 = vsub.f32 1.0, %v3167
        %v3503 = vsub.f32 1.0, %v3169
        %v3504 = vsub.f32 1.0, %v3171
        %v3505 = vsub.f32 1.0, %v3173
        %v3506 = vsub.f32 1.0, %v3175
        %v3507 = vsub.f32 1.0, %v3177
        %v3508 = vsub.f32 1.0, %v3179
        %v3509 = vsub.f32 1.0, %v3181
        %v3510 = vsub.f32 1.0, %v3183
        %v3511 = vsub.f32 1.0, %v3185
        %v3512 = vsub.f32 1.0, %v3187
        %v3513 = vsub.f32 1.0, %v3189
        %v3514 = vsub.f32 1.0, %v3191
        %v3515 = vsub.f32 1.0, %v3193
        %v3516 = vmul.f32 %v3500, %v2532
        %v3517 = vmul.f32 %v3501, %v2533
        %v3518 = vmul.f32 %v3502, %v2534
        %v3519 = vmul.f32 %v3503, %v2535
        %v3520 = vmul.f32 %v3504, %v2536
        %v3521 = vmul.f32 %v3505, %v2537
        %v3522 = vmul.f32 %v3506, %v2538
        %v3523 = vmul.f32 %v3507, %v2539
        %v3524 = vmul.f32 %v3508, %v2540
        %v3525 = vmul.f32 %v3509, %v2541
        %v3526 = vmul.f32 %v3510, %v2542
        %v3527 = vmul.f32 %v3511, %v2543
        %v3528 = vmul.f32 %v3512, %v2544
        %v3529 = vmul.f32 %v3513, %v2545
        %v3530 = vmul.f32 %v3514, %v2546
        %v3531 = vmul.f32 %v3515, %v2547
        %v3532 = vadd.f32 %v2697, %v3389
        %v3533 = vadd.f32 %v2699, %v3391
        %v3534 = vadd.f32 %v2834, %v3478
        %v3535 = vadd.f32 %v2836, %v3480
        %v3536 = vadd.f32 %v2703, %v3395
        %v3537 = vadd.f32 %v2705, %v3397
        %v3538 = vadd.f32 %v2840, %v3484
        %v3539 = vadd.f32 %v2842, %v3486
        %v3540 = vadd.f32 %v2709, %v3401
        %v3541 = vadd.f32 %v2711, %v3403
        %v3542 = vadd.f32 %v2846, %v3490
        %v3543 = vadd.f32 %v2848, %v3492
        %v3544 = vadd.f32 %v2715, %v3407
        %v3545 = vadd.f32 %v2717, %v3409
        %v3546 = vadd.f32 %v2852, %v3496
        %v3547 = vadd.f32 %v2854, %v3498
        %v3548 = vtanh.pop %v3532
        %v3549 = vtanh.pop %v3533
        %v3550 = vtanh.pop %v3534
        %v3551 = vtanh.pop %v3535
        %v3552 = vtanh.pop %v3536
        %v3553 = vtanh.pop %v3537
        %v3554 = vtanh.pop %v3538
        %v3555 = vtanh.pop %v3539
        %v3556 = vtanh.pop %v3540
        %v3557 = vtanh.pop %v3541
        %v3558 = vtanh.pop %v3542
        %v3559 = vtanh.pop %v3543
        %v3560 = vtanh.pop %v3544
        %v3561 = vtanh.pop %v3545
        %v3562 = vtanh.pop %v3546
        %v3563 = vtanh.pop %v3547
        %v3564 = vmul.f32 %v3163, %v3548
        %v3565 = vmul.f32 %v3165, %v3549
        %v3566 = vmul.f32 %v3167, %v3550
        %v3567 = vmul.f32 %v3169, %v3551
        %v3568 = vmul.f32 %v3171, %v3552
        %v3569 = vmul.f32 %v3173, %v3553
        %v3570 = vmul.f32 %v3175, %v3554
        %v3571 = vmul.f32 %v3177, %v3555
        %v3572 = vmul.f32 %v3179, %v3556
        %v3573 = vmul.f32 %v3181, %v3557
        %v3574 = vmul.f32 %v3183, %v3558
        %v3575 = vmul.f32 %v3185, %v3559
        %v3576 = vmul.f32 %v3187, %v3560
        %v3577 = vmul.f32 %v3189, %v3561
        %v3578 = vmul.f32 %v3191, %v3562
        %v3579 = vmul.f32 %v3193, %v3563
        %v3580 = vadd.f32 %v3516, %v3564
        %v3581 = vadd.f32 %v3517, %v3565
        %v3582 = vadd.f32 %v3518, %v3566
        %v3583 = vadd.f32 %v3519, %v3567
        %v3584 = vadd.f32 %v3520, %v3568
        %v3585 = vadd.f32 %v3521, %v3569
        %v3586 = vadd.f32 %v3522, %v3570
        %v3587 = vadd.f32 %v3523, %v3571
        %v3588 = vadd.f32 %v3524, %v3572
        %v3589 = vadd.f32 %v3525, %v3573
        %v3590 = vadd.f32 %v3526, %v3574
        %v3591 = vadd.f32 %v3527, %v3575
        %v3592 = vadd.f32 %v3528, %v3576
        %v3593 = vadd.f32 %v3529, %v3577
        %v3594 = vadd.f32 %v3530, %v3578
        %v3595 = vadd.f32 %v3531, %v3579
        %s3596 = scalar_lea.vmem %s261, 256 [#allocation6]
        %3597 = vst [vmem:[%s3596] sm:$0xff] %v3580
        %3598 = vst [vmem:[%s3596 + $0x8] sm:$0xff] %v3581
        %3599 = vst [vmem:[%s3596 + $0x10] sm:$0xff] %v3582
        %3600 = vst [vmem:[%s3596 + $0x18] sm:$0xff] %v3583
        %3601 = vst [vmem:[%s3596 + $0x20] sm:$0xff] %v3584
        %3602 = vst [vmem:[%s3596 + $0x28] sm:$0xff] %v3585
        %3603 = vst [vmem:[%s3596 + $0x30] sm:$0xff] %v3586
        %3604 = vst [vmem:[%s3596 + $0x38] sm:$0xff] %v3587
        %3605 = vst [vmem:[%s3596 + $0x40] sm:$0xff] %v3588
        %3606 = vst [vmem:[%s3596 + $0x48] sm:$0xff] %v3589
        %3607 = vst [vmem:[%s3596 + $0x50] sm:$0xff] %v3590
        %3608 = vst [vmem:[%s3596 + $0x58] sm:$0xff] %v3591
        %3609 = vst [vmem:[%s3596 + $0x60] sm:$0xff] %v3592
        %3610 = vst [vmem:[%s3596 + $0x68] sm:$0xff] %v3593
        %3611 = vst [vmem:[%s3596 + $0x70] sm:$0xff] %v3594
        %3612 = vst [vmem:[%s3596 + $0x78] sm:$0xff] %v3595
        %s3613 = scalar_lea.vmem %s235, 384 [#allocation3]
        %v3614 = vld [vmem:[%s3613] sm:$0xff]
        %v3615 = vld [vmem:[%s3613 + $0x8] sm:$0xff]
        %v3616 = vld [vmem:[%s3613 + $0x10] sm:$0xff]
        %v3617 = vld [vmem:[%s3613 + $0x18] sm:$0xff]
        %v3618 = vld [vmem:[%s3613 + $0x20] sm:$0xff]
        %v3619 = vld [vmem:[%s3613 + $0x28] sm:$0xff]
        %v3620 = vld [vmem:[%s3613 + $0x30] sm:$0xff]
        %v3621 = vld [vmem:[%s3613 + $0x38] sm:$0xff]
        %v3622 = vld [vmem:[%s3613 + $0x40] sm:$0xff]
        %v3623 = vld [vmem:[%s3613 + $0x48] sm:$0xff]
        %v3624 = vld [vmem:[%s3613 + $0x50] sm:$0xff]
        %v3625 = vld [vmem:[%s3613 + $0x58] sm:$0xff]
        %v3626 = vld [vmem:[%s3613 + $0x60] sm:$0xff]
        %v3627 = vld [vmem:[%s3613 + $0x68] sm:$0xff]
        %v3628 = vld [vmem:[%s3613 + $0x70] sm:$0xff]
        %v3629 = vld [vmem:[%s3613 + $0x78] sm:$0xff]
        %3630 = vmatprep.subr.mxu0 %v3615
        %3631 = vmatpush1.msra.mxu0 %v3614
        %3632 = vmatprep.subr.mxu0 %v3619
        %3633 = vmatpush1.msra.mxu0 %v3618
        %3634 = vmatprep.subr.mxu0 %v3623
        %3635 = vmatpush1.msra.mxu0 %v3622
        %3636 = vmatprep.subr.mxu0 %v3627
        %3637 = vmatpush1.msra.mxu0 %v3626
        %3638 = vmatprep.subr.mxu0 0.0
        %3639 = vmatpush1.msra.mxu0 0.0
        %3640 = vmatprep.subr.mxu0 0.0
        %3641 = vmatpush1.msra.mxu0 0.0
        %3642 = vmatprep.subr.mxu0 0.0
        %3643 = vmatpush1.msra.mxu0 0.0
        %3644 = vmatprep.subr.mxu0 0.0
        %3645 = vmatpush1.msra.mxu0 0.0
        %3646 = vmatprep.subr.mxu0 0.0
        %3647 = vmatpush1.msra.mxu0 0.0
        %3648 = vmatprep.subr.mxu0 0.0
        %3649 = vmatpush1.msra.mxu0 0.0
        %3650 = vmatprep.subr.mxu0 0.0
        %3651 = vmatpush1.msra.mxu0 0.0
        %3652 = vmatprep.subr.mxu0 0.0
        %3653 = vmatpush1.msra.mxu0 0.0
        %3654 = vmatprep.subr.mxu0 0.0
        %3655 = vmatpush1.msra.mxu0 0.0
        %3656 = vmatprep.subr.mxu0 0.0
        %3657 = vmatpush1.msra.mxu0 0.0
        %3658 = vmatprep.subr.mxu0 0.0
        %3659 = vmatpush1.msra.mxu0 0.0
        %3660 = vmatprep.subr.mxu0 0.0
        %3661 = vmatpush1.msra.mxu0 0.0
        %3662 = vmatprep.subr.mxu0 0.0
        %3663 = vmatpush1.msra.mxu0 0.0
        %3664 = vmatprep.subr.mxu0 0.0
        %3665 = vmatpush1.msra.mxu0 0.0
        %3666 = vmatprep.subr.mxu0 0.0
        %3667 = vmatpush1.msra.mxu0 0.0
        %3668 = vmatprep.subr.mxu0 0.0
        %3669 = vmatpush1.msra.mxu0 0.0
        %3670 = vmatprep.subr.mxu0 0.0
        %3671 = vmatpush1.msra.mxu0 0.0
        %3672 = vmatprep.subr.mxu0 0.0
        %3673 = vmatpush1.msra.mxu0 0.0
        %3674 = vmatprep.subr.mxu0 0.0
        %3675 = vmatpush1.msra.mxu0 0.0
        %3676 = vmatprep.subr.mxu0 0.0
        %3677 = vmatpush1.msra.mxu0 0.0
        %3678 = vmatprep.subr.mxu0 0.0
        %3679 = vmatpush1.msra.mxu0 0.0
        %3680 = vmatprep.subr.mxu0 0.0
        %3681 = vmatpush1.msra.mxu0 0.0
        %3682 = vmatprep.subr.mxu0 0.0
        %3683 = vmatpush1.msra.mxu0 0.0
        %3684 = vmatprep.subr.mxu0 0.0
        %3685 = vmatpush1.msra.mxu0 0.0
        %3686 = vmatprep.subr.mxu0 0.0
        %3687 = vmatpush1.msra.mxu0 0.0
        %3688 = vmatprep.subr.mxu0 0.0
        %3689 = vmatpush1.msra.mxu0 0.0
        %3690 = vmatprep.subr.mxu0 0.0
        %3691 = vmatpush1.msra.mxu0 0.0
        %3692 = vmatprep.subr.mxu0 0.0
        %3693 = vmatpush1.msra.mxu0 0.0
        %3694 = vmatprep.mubr.f32.mxu0 0.0
        %3695 = vmatmul.mubr.f32.gmra.mrb[0].mxu0 %v416
        %v3696 = vpop.f32.mrb[0].mxu0
        %v3697 = vadd.f32 %v325, %v3696
        %v3698 = vpop.f32.mrb[0].mxu0
        %v3699 = vadd.f32 %v325, %v3698
        %3700 = vmatprep.mubr.f32.mxu0 0.0
        %3701 = vmatmul.mubr.f32.gmra.mrb[0].mxu0 %v419
        %v3702 = vpop.f32.mrb[0].mxu0
        %v3703 = vadd.f32 %v330, %v3702
        %v3704 = vpop.f32.mrb[0].mxu0
        %v3705 = vadd.f32 %v330, %v3704
        %3706 = vmatprep.mubr.f32.mxu0 0.0
        %3707 = vmatmul.mubr.f32.gmra.mrb[0].mxu0 %v422
        %v3708 = vpop.f32.mrb[0].mxu0
        %v3709 = vadd.f32 %v335, %v3708
        %v3710 = vpop.f32.mrb[0].mxu0
        %v3711 = vadd.f32 %v335, %v3710
        %3712 = vmatprep.mubr.f32.mxu0 0.0
        %3713 = vmatmul.mubr.f32.gmra.mrb[0].mxu0 %v425
        %v3714 = vpop.f32.mrb[0].mxu0
        %v3715 = vadd.f32 %v340, %v3714
        %v3716 = vpop.f32.mrb[0].mxu0
        %v3717 = vadd.f32 %v340, %v3716
        %3718 = vmatprep.mubr.f32.mxu0 0.0
        %3719 = vmatmul.mubr.f32.gmra.mrb[0].mxu0 %v428
        %v3720 = vpop.f32.mrb[0].mxu0
        %v3721 = vadd.f32 %v345, %v3720
        %v3722 = vpop.f32.mrb[0].mxu0
        %v3723 = vadd.f32 %v345, %v3722
        %3724 = vmatprep.mubr.f32.mxu0 0.0
        %3725 = vmatmul.mubr.f32.gmra.mrb[0].mxu0 %v431
        %v3726 = vpop.f32.mrb[0].mxu0
        %v3727 = vadd.f32 %v350, %v3726
        %v3728 = vpop.f32.mrb[0].mxu0
        %v3729 = vadd.f32 %v350, %v3728
        %3730 = vmatprep.mubr.f32.mxu0 0.0
        %3731 = vmatmul.mubr.f32.gmra.mrb[0].mxu0 %v434
        %v3732 = vpop.f32.mrb[0].mxu0
        %v3733 = vadd.f32 %v355, %v3732
        %v3734 = vpop.f32.mrb[0].mxu0
        %v3735 = vadd.f32 %v355, %v3734
        %3736 = vmatprep.mubr.f32.mxu0 0.0
        %3737 = vmatmul.mubr.f32.gmra.mrb[0].mxu0 %v437
        %v3738 = vpop.f32.mrb[0].mxu0
        %v3739 = vadd.f32 %v360, %v3738
        %v3740 = vpop.f32.mrb[0].mxu0
        %v3741 = vadd.f32 %v360, %v3740
        %3742 = vmatprep.mubr.f32.mxu0 0.0
        %3743 = vmatmul.mubr.f32.gmra.mrb[0].mxu0 %v440
        %v3744 = vpop.f32.mrb[0].mxu0
        %v3745 = vadd.f32 %v365, %v3744
        %v3746 = vpop.f32.mrb[0].mxu0
        %v3747 = vadd.f32 %v365, %v3746
        %3748 = vmatprep.mubr.f32.mxu0 0.0
        %3749 = vmatmul.mubr.f32.gmra.mrb[0].mxu0 %v443
        %v3750 = vpop.f32.mrb[0].mxu0
        %v3751 = vadd.f32 %v370, %v3750
        %v3752 = vpop.f32.mrb[0].mxu0
        %v3753 = vadd.f32 %v370, %v3752
        %3754 = vmatprep.mubr.f32.mxu0 0.0
        %3755 = vmatmul.mubr.f32.gmra.mrb[0].mxu0 %v446
        %v3756 = vpop.f32.mrb[0].mxu0
        %v3757 = vadd.f32 %v375, %v3756
        %v3758 = vpop.f32.mrb[0].mxu0
        %v3759 = vadd.f32 %v375, %v3758
        %3760 = vmatprep.mubr.f32.mxu0 0.0
        %3761 = vmatmul.mubr.f32.gmra.mrb[0].mxu0 %v449
        %v3762 = vpop.f32.mrb[0].mxu0
        %v3763 = vadd.f32 %v380, %v3762
        %v3764 = vpop.f32.mrb[0].mxu0
        %v3765 = vadd.f32 %v380, %v3764
        %3766 = vdwg.mxu0
        %3767 = vmatprep.subr.mxu0 %v3617
        %3768 = vmatpush1.msra.mxu0 %v3616
        %3769 = vmatprep.subr.mxu0 %v3621
        %3770 = vmatpush1.msra.mxu0 %v3620
        %3771 = vmatprep.subr.mxu0 %v3625
        %3772 = vmatpush1.msra.mxu0 %v3624
        %3773 = vmatprep.subr.mxu0 %v3629
        %3774 = vmatpush1.msra.mxu0 %v3628
        %3775 = vmatprep.subr.mxu0 0.0
        %3776 = vmatpush1.msra.mxu0 0.0
        %3777 = vmatprep.subr.mxu0 0.0
        %3778 = vmatpush1.msra.mxu0 0.0
        %3779 = vmatprep.subr.mxu0 0.0
        %3780 = vmatpush1.msra.mxu0 0.0
        %3781 = vmatprep.subr.mxu0 0.0
        %3782 = vmatpush1.msra.mxu0 0.0
        %3783 = vmatprep.subr.mxu0 0.0
        %3784 = vmatpush1.msra.mxu0 0.0
        %3785 = vmatprep.subr.mxu0 0.0
        %3786 = vmatpush1.msra.mxu0 0.0
        %3787 = vmatprep.subr.mxu0 0.0
        %3788 = vmatpush1.msra.mxu0 0.0
        %3789 = vmatprep.subr.mxu0 0.0
        %3790 = vmatpush1.msra.mxu0 0.0
        %3791 = vmatprep.subr.mxu0 0.0
        %3792 = vmatpush1.msra.mxu0 0.0
        %3793 = vmatprep.subr.mxu0 0.0
        %3794 = vmatpush1.msra.mxu0 0.0
        %3795 = vmatprep.subr.mxu0 0.0
        %3796 = vmatpush1.msra.mxu0 0.0
        %3797 = vmatprep.subr.mxu0 0.0
        %3798 = vmatpush1.msra.mxu0 0.0
        %3799 = vmatprep.subr.mxu0 0.0
        %3800 = vmatpush1.msra.mxu0 0.0
        %3801 = vmatprep.subr.mxu0 0.0
        %3802 = vmatpush1.msra.mxu0 0.0
        %3803 = vmatprep.subr.mxu0 0.0
        %3804 = vmatpush1.msra.mxu0 0.0
        %3805 = vmatprep.subr.mxu0 0.0
        %3806 = vmatpush1.msra.mxu0 0.0
        %3807 = vmatprep.subr.mxu0 0.0
        %3808 = vmatpush1.msra.mxu0 0.0
        %3809 = vmatprep.subr.mxu0 0.0
        %3810 = vmatpush1.msra.mxu0 0.0
        %3811 = vmatprep.subr.mxu0 0.0
        %3812 = vmatpush1.msra.mxu0 0.0
        %3813 = vmatprep.subr.mxu0 0.0
        %3814 = vmatpush1.msra.mxu0 0.0
        %3815 = vmatprep.subr.mxu0 0.0
        %3816 = vmatpush1.msra.mxu0 0.0
        %3817 = vmatprep.subr.mxu0 0.0
        %3818 = vmatpush1.msra.mxu0 0.0
        %3819 = vmatprep.subr.mxu0 0.0
        %3820 = vmatpush1.msra.mxu0 0.0
        %3821 = vmatprep.subr.mxu0 0.0
        %3822 = vmatpush1.msra.mxu0 0.0
        %3823 = vmatprep.subr.mxu0 0.0
        %3824 = vmatpush1.msra.mxu0 0.0
        %3825 = vmatprep.subr.mxu0 0.0
        %3826 = vmatpush1.msra.mxu0 0.0
        %3827 = vmatprep.subr.mxu0 0.0
        %3828 = vmatpush1.msra.mxu0 0.0
        %3829 = vmatprep.subr.mxu0 0.0
        %3830 = vmatpush1.msra.mxu0 0.0
        %3831 = vmatprep.mubr.f32.mxu0 0.0
        %3832 = vmatmul.mubr.f32.gmra.mrb[0].mxu0 %v416
        %v3833 = vpop.f32.mrb[0].mxu0
        %v3834 = vadd.f32 %v325, %v3833
        %v3835 = vpop.f32.mrb[0].mxu0
        %v3836 = vadd.f32 %v325, %v3835
        %3837 = vmatprep.mubr.f32.mxu0 0.0
        %3838 = vmatmul.mubr.f32.gmra.mrb[0].mxu0 %v419
        %v3839 = vpop.f32.mrb[0].mxu0
        %v3840 = vadd.f32 %v330, %v3839
        %v3841 = vpop.f32.mrb[0].mxu0
        %v3842 = vadd.f32 %v330, %v3841
        %3843 = vmatprep.mubr.f32.mxu0 0.0
        %3844 = vmatmul.mubr.f32.gmra.mrb[0].mxu0 %v422
        %v3845 = vpop.f32.mrb[0].mxu0
        %v3846 = vadd.f32 %v335, %v3845
        %v3847 = vpop.f32.mrb[0].mxu0
        %v3848 = vadd.f32 %v335, %v3847
        %3849 = vmatprep.mubr.f32.mxu0 0.0
        %3850 = vmatmul.mubr.f32.gmra.mrb[0].mxu0 %v425
        %v3851 = vpop.f32.mrb[0].mxu0
        %v3852 = vadd.f32 %v340, %v3851
        %v3853 = vpop.f32.mrb[0].mxu0
        %v3854 = vadd.f32 %v340, %v3853
        %3855 = vmatprep.mubr.f32.mxu0 0.0
        %3856 = vmatmul.mubr.f32.gmra.mrb[0].mxu0 %v428
        %v3857 = vpop.f32.mrb[0].mxu0
        %v3858 = vadd.f32 %v345, %v3857
        %v3859 = vpop.f32.mrb[0].mxu0
        %v3860 = vadd.f32 %v345, %v3859
        %3861 = vmatprep.mubr.f32.mxu0 0.0
        %3862 = vmatmul.mubr.f32.gmra.mrb[0].mxu0 %v431
        %v3863 = vpop.f32.mrb[0].mxu0
        %v3864 = vadd.f32 %v350, %v3863
        %v3865 = vpop.f32.mrb[0].mxu0
        %v3866 = vadd.f32 %v350, %v3865
        %3867 = vmatprep.mubr.f32.mxu0 0.0
        %3868 = vmatmul.mubr.f32.gmra.mrb[0].mxu0 %v434
        %v3869 = vpop.f32.mrb[0].mxu0
        %v3870 = vadd.f32 %v355, %v3869
        %v3871 = vpop.f32.mrb[0].mxu0
        %v3872 = vadd.f32 %v355, %v3871
        %3873 = vmatprep.mubr.f32.mxu0 0.0
        %3874 = vmatmul.mubr.f32.gmra.mrb[0].mxu0 %v437
        %v3875 = vpop.f32.mrb[0].mxu0
        %v3876 = vadd.f32 %v360, %v3875
        %v3877 = vpop.f32.mrb[0].mxu0
        %v3878 = vadd.f32 %v360, %v3877
        %3879 = vmatprep.mubr.f32.mxu0 0.0
        %3880 = vmatmul.mubr.f32.gmra.mrb[0].mxu0 %v440
        %v3881 = vpop.f32.mrb[0].mxu0
        %v3882 = vadd.f32 %v365, %v3881
        %v3883 = vpop.f32.mrb[0].mxu0
        %v3884 = vadd.f32 %v365, %v3883
        %3885 = vmatprep.mubr.f32.mxu0 0.0
        %3886 = vmatmul.mubr.f32.gmra.mrb[0].mxu0 %v443
        %v3887 = vpop.f32.mrb[0].mxu0
        %v3888 = vadd.f32 %v370, %v3887
        %v3889 = vpop.f32.mrb[0].mxu0
        %v3890 = vadd.f32 %v370, %v3889
        %3891 = vmatprep.mubr.f32.mxu0 0.0
        %3892 = vmatmul.mubr.f32.gmra.mrb[0].mxu0 %v446
        %v3893 = vpop.f32.mrb[0].mxu0
        %v3894 = vadd.f32 %v375, %v3893
        %v3895 = vpop.f32.mrb[0].mxu0
        %v3896 = vadd.f32 %v375, %v3895
        %3897 = vmatprep.mubr.f32.mxu0 0.0
        %3898 = vmatmul.mubr.f32.gmra.mrb[0].mxu0 %v449
        %v3899 = vpop.f32.mrb[0].mxu0
        %v3900 = vadd.f32 %v380, %v3899
        %v3901 = vpop.f32.mrb[0].mxu0
        %v3902 = vadd.f32 %v380, %v3901
        %3903 = vdwg.mxu0
        %3904 = vmatprep.subr.mxu0 %v3581
        %3905 = vmatpush1.msra.mxu0 %v3580
        %3906 = vmatprep.subr.mxu0 %v3585
        %3907 = vmatpush1.msra.mxu0 %v3584
        %3908 = vmatprep.subr.mxu0 %v3589
        %3909 = vmatpush1.msra.mxu0 %v3588
        %3910 = vmatprep.subr.mxu0 %v3593
        %3911 = vmatpush1.msra.mxu0 %v3592
        %3912 = vmatprep.subr.mxu0 0.0
        %3913 = vmatpush1.msra.mxu0 0.0
        %3914 = vmatprep.subr.mxu0 0.0
        %3915 = vmatpush1.msra.mxu0 0.0
        %3916 = vmatprep.subr.mxu0 0.0
        %3917 = vmatpush1.msra.mxu0 0.0
        %3918 = vmatprep.subr.mxu0 0.0
        %3919 = vmatpush1.msra.mxu0 0.0
        %3920 = vmatprep.subr.mxu0 0.0
        %3921 = vmatpush1.msra.mxu0 0.0
        %3922 = vmatprep.subr.mxu0 0.0
        %3923 = vmatpush1.msra.mxu0 0.0
        %3924 = vmatprep.subr.mxu0 0.0
        %3925 = vmatpush1.msra.mxu0 0.0
        %3926 = vmatprep.subr.mxu0 0.0
        %3927 = vmatpush1.msra.mxu0 0.0
        %3928 = vmatprep.subr.mxu0 0.0
        %3929 = vmatpush1.msra.mxu0 0.0
        %3930 = vmatprep.subr.mxu0 0.0
        %3931 = vmatpush1.msra.mxu0 0.0
        %3932 = vmatprep.subr.mxu0 0.0
        %3933 = vmatpush1.msra.mxu0 0.0
        %3934 = vmatprep.subr.mxu0 0.0
        %3935 = vmatpush1.msra.mxu0 0.0
        %3936 = vmatprep.subr.mxu0 0.0
        %3937 = vmatpush1.msra.mxu0 0.0
        %3938 = vmatprep.subr.mxu0 0.0
        %3939 = vmatpush1.msra.mxu0 0.0
        %3940 = vmatprep.subr.mxu0 0.0
        %3941 = vmatpush1.msra.mxu0 0.0
        %3942 = vmatprep.subr.mxu0 0.0
        %3943 = vmatpush1.msra.mxu0 0.0
        %3944 = vmatprep.subr.mxu0 0.0
        %3945 = vmatpush1.msra.mxu0 0.0
        %3946 = vmatprep.subr.mxu0 0.0
        %3947 = vmatpush1.msra.mxu0 0.0
        %3948 = vmatprep.subr.mxu0 0.0
        %3949 = vmatpush1.msra.mxu0 0.0
        %3950 = vmatprep.subr.mxu0 0.0
        %3951 = vmatpush1.msra.mxu0 0.0
        %3952 = vmatprep.subr.mxu0 0.0
        %3953 = vmatpush1.msra.mxu0 0.0
        %3954 = vmatprep.subr.mxu0 0.0
        %3955 = vmatpush1.msra.mxu0 0.0
        %3956 = vmatprep.subr.mxu0 0.0
        %3957 = vmatpush1.msra.mxu0 0.0
        %3958 = vmatprep.subr.mxu0 0.0
        %3959 = vmatpush1.msra.mxu0 0.0
        %3960 = vmatprep.subr.mxu0 0.0
        %3961 = vmatpush1.msra.mxu0 0.0
        %3962 = vmatprep.subr.mxu0 0.0
        %3963 = vmatpush1.msra.mxu0 0.0
        %3964 = vmatprep.subr.mxu0 0.0
        %3965 = vmatpush1.msra.mxu0 0.0
        %3966 = vmatprep.subr.mxu0 0.0
        %3967 = vmatpush1.msra.mxu0 0.0
        %3968 = vmatprep.mubr.f32.mxu0 0.0
        %3969 = vmatmul.mubr.f32.gmra.mrb[0].mxu0 %v726
        %v3970 = vpop.f32.mrb[0].mxu0
        %v3971 = vadd.f32 0.0, %v3970
        %v3972 = vpop.f32.mrb[0].mxu0
        %v3973 = vadd.f32 0.0, %v3972
        %3974 = vmatprep.mubr.f32.mxu0 0.0
        %3975 = vmatmul.mubr.f32.gmra.mrb[0].mxu0 %v729
        %v3976 = vpop.f32.mrb[0].mxu0
        %v3977 = vadd.f32 0.0, %v3976
        %v3978 = vpop.f32.mrb[0].mxu0
        %v3979 = vadd.f32 0.0, %v3978
        %3980 = vmatprep.mubr.f32.mxu0 0.0
        %3981 = vmatmul.mubr.f32.gmra.mrb[0].mxu0 %v732
        %v3982 = vpop.f32.mrb[0].mxu0
        %v3983 = vadd.f32 0.0, %v3982
        %v3984 = vpop.f32.mrb[0].mxu0
        %v3985 = vadd.f32 0.0, %v3984
        %3986 = vmatprep.mubr.f32.mxu0 0.0
        %3987 = vmatmul.mubr.f32.gmra.mrb[0].mxu0 %v735
        %v3988 = vpop.f32.mrb[0].mxu0
        %v3989 = vadd.f32 0.0, %v3988
        %v3990 = vpop.f32.mrb[0].mxu0
        %v3991 = vadd.f32 0.0, %v3990
        %3992 = vmatprep.mubr.f32.mxu0 0.0
        %3993 = vmatmul.mubr.f32.gmra.mrb[0].mxu0 %v738
        %v3994 = vpop.f32.mrb[0].mxu0
        %v3995 = vadd.f32 0.0, %v3994
        %v3996 = vpop.f32.mrb[0].mxu0
        %v3997 = vadd.f32 0.0, %v3996
        %3998 = vmatprep.mubr.f32.mxu0 0.0
        %3999 = vmatmul.mubr.f32.gmra.mrb[0].mxu0 %v741
        %v4000 = vpop.f32.mrb[0].mxu0
        %v4001 = vadd.f32 0.0, %v4000
        %v4002 = vpop.f32.mrb[0].mxu0
        %v4003 = vadd.f32 0.0, %v4002
        %4004 = vmatprep.mubr.f32.mxu0 0.0
        %4005 = vmatmul.mubr.f32.gmra.mrb[0].mxu0 %v744
        %v4006 = vpop.f32.mrb[0].mxu0
        %v4007 = vadd.f32 0.0, %v4006
        %v4008 = vpop.f32.mrb[0].mxu0
        %v4009 = vadd.f32 0.0, %v4008
        %4010 = vmatprep.mubr.f32.mxu0 0.0
        %4011 = vmatmul.mubr.f32.gmra.mrb[0].mxu0 %v747
        %v4012 = vpop.f32.mrb[0].mxu0
        %v4013 = vadd.f32 0.0, %v4012
        %v4014 = vpop.f32.mrb[0].mxu0
        %v4015 = vadd.f32 0.0, %v4014
        %4016 = vdwg.mxu0
        %4017 = vmatprep.subr.mxu0 %v3583
        %4018 = vmatpush1.msra.mxu0 %v3582
        %4019 = vmatprep.subr.mxu0 %v3587
        %4020 = vmatpush1.msra.mxu0 %v3586
        %4021 = vmatprep.subr.mxu0 %v3591
        %4022 = vmatpush1.msra.mxu0 %v3590
        %4023 = vmatprep.subr.mxu0 %v3595
        %4024 = vmatpush1.msra.mxu0 %v3594
        %4025 = vmatprep.subr.mxu0 0.0
        %4026 = vmatpush1.msra.mxu0 0.0
        %4027 = vmatprep.subr.mxu0 0.0
        %4028 = vmatpush1.msra.mxu0 0.0
        %4029 = vmatprep.subr.mxu0 0.0
        %4030 = vmatpush1.msra.mxu0 0.0
        %4031 = vmatprep.subr.mxu0 0.0
        %4032 = vmatpush1.msra.mxu0 0.0
        %4033 = vmatprep.subr.mxu0 0.0
        %4034 = vmatpush1.msra.mxu0 0.0
        %4035 = vmatprep.subr.mxu0 0.0
        %4036 = vmatpush1.msra.mxu0 0.0
        %4037 = vmatprep.subr.mxu0 0.0
        %4038 = vmatpush1.msra.mxu0 0.0
        %4039 = vmatprep.subr.mxu0 0.0
        %4040 = vmatpush1.msra.mxu0 0.0
        %4041 = vmatprep.subr.mxu0 0.0
        %4042 = vmatpush1.msra.mxu0 0.0
        %4043 = vmatprep.subr.mxu0 0.0
        %4044 = vmatpush1.msra.mxu0 0.0
        %4045 = vmatprep.subr.mxu0 0.0
        %4046 = vmatpush1.msra.mxu0 0.0
        %4047 = vmatprep.subr.mxu0 0.0
        %4048 = vmatpush1.msra.mxu0 0.0
        %4049 = vmatprep.subr.mxu0 0.0
        %4050 = vmatpush1.msra.mxu0 0.0
        %4051 = vmatprep.subr.mxu0 0.0
        %4052 = vmatpush1.msra.mxu0 0.0
        %4053 = vmatprep.subr.mxu0 0.0
        %4054 = vmatpush1.msra.mxu0 0.0
        %4055 = vmatprep.subr.mxu0 0.0
        %4056 = vmatpush1.msra.mxu0 0.0
        %4057 = vmatprep.subr.mxu0 0.0
        %4058 = vmatpush1.msra.mxu0 0.0
        %4059 = vmatprep.subr.mxu0 0.0
        %4060 = vmatpush1.msra.mxu0 0.0
        %4061 = vmatprep.subr.mxu0 0.0
        %4062 = vmatpush1.msra.mxu0 0.0
        %4063 = vmatprep.subr.mxu0 0.0
        %4064 = vmatpush1.msra.mxu0 0.0
        %4065 = vmatprep.subr.mxu0 0.0
        %4066 = vmatpush1.msra.mxu0 0.0
        %4067 = vmatprep.subr.mxu0 0.0
        %4068 = vmatpush1.msra.mxu0 0.0
        %4069 = vmatprep.subr.mxu0 0.0
        %4070 = vmatpush1.msra.mxu0 0.0
        %4071 = vmatprep.subr.mxu0 0.0
        %4072 = vmatpush1.msra.mxu0 0.0
        %4073 = vmatprep.subr.mxu0 0.0
        %4074 = vmatpush1.msra.mxu0 0.0
        %4075 = vmatprep.subr.mxu0 0.0
        %4076 = vmatpush1.msra.mxu0 0.0
        %4077 = vmatprep.subr.mxu0 0.0
        %4078 = vmatpush1.msra.mxu0 0.0
        %4079 = vmatprep.subr.mxu0 0.0
        %4080 = vmatpush1.msra.mxu0 0.0
        %4081 = vmatprep.mubr.f32.mxu0 0.0
        %4082 = vmatmul.mubr.f32.gmra.mrb[0].mxu0 %v726
        %v4083 = vpop.f32.mrb[0].mxu0
        %v4084 = vadd.f32 0.0, %v4083
        %v4085 = vpop.f32.mrb[0].mxu0
        %v4086 = vadd.f32 0.0, %v4085
        %4087 = vmatprep.mubr.f32.mxu0 0.0
        %4088 = vmatmul.mubr.f32.gmra.mrb[0].mxu0 %v729
        %v4089 = vpop.f32.mrb[0].mxu0
        %v4090 = vadd.f32 0.0, %v4089
        %v4091 = vpop.f32.mrb[0].mxu0
        %v4092 = vadd.f32 0.0, %v4091
        %4093 = vmatprep.mubr.f32.mxu0 0.0
        %4094 = vmatmul.mubr.f32.gmra.mrb[0].mxu0 %v732
        %v4095 = vpop.f32.mrb[0].mxu0
        %v4096 = vadd.f32 0.0, %v4095
        %v4097 = vpop.f32.mrb[0].mxu0
        %v4098 = vadd.f32 0.0, %v4097
        %4099 = vmatprep.mubr.f32.mxu0 0.0
        %4100 = vmatmul.mubr.f32.gmra.mrb[0].mxu0 %v735
        %v4101 = vpop.f32.mrb[0].mxu0
        %v4102 = vadd.f32 0.0, %v4101
        %v4103 = vpop.f32.mrb[0].mxu0
        %v4104 = vadd.f32 0.0, %v4103
        %4105 = vmatprep.mubr.f32.mxu0 0.0
        %4106 = vmatmul.mubr.f32.gmra.mrb[0].mxu0 %v738
        %v4107 = vpop.f32.mrb[0].mxu0
        %v4108 = vadd.f32 0.0, %v4107
        %v4109 = vpop.f32.mrb[0].mxu0
        %v4110 = vadd.f32 0.0, %v4109
        %4111 = vmatprep.mubr.f32.mxu0 0.0
        %4112 = vmatmul.mubr.f32.gmra.mrb[0].mxu0 %v741
        %v4113 = vpop.f32.mrb[0].mxu0
        %v4114 = vadd.f32 0.0, %v4113
        %v4115 = vpop.f32.mrb[0].mxu0
        %v4116 = vadd.f32 0.0, %v4115
        %4117 = vmatprep.mubr.f32.mxu0 0.0
        %4118 = vmatmul.mubr.f32.gmra.mrb[0].mxu0 %v744
        %v4119 = vpop.f32.mrb[0].mxu0
        %v4120 = vadd.f32 0.0, %v4119
        %v4121 = vpop.f32.mrb[0].mxu0
        %v4122 = vadd.f32 0.0, %v4121
        %4123 = vmatprep.mubr.f32.mxu0 0.0
        %4124 = vmatmul.mubr.f32.gmra.mrb[0].mxu0 %v747
        %v4125 = vpop.f32.mrb[0].mxu0
        %v4126 = vadd.f32 0.0, %v4125
        %v4127 = vpop.f32.mrb[0].mxu0
        %v4128 = vadd.f32 0.0, %v4127
        %4129 = vdwg.mxu0
        %v4130 = vadd.f32 %v3697, %v3971
        %v4131 = vadd.f32 %v3699, %v3973
        %v4132 = vadd.f32 %v3834, %v4084
        %v4133 = vadd.f32 %v3836, %v4086
        %v4134 = vadd.f32 %v3703, %v3977
        %v4135 = vadd.f32 %v3705, %v3979
        %v4136 = vadd.f32 %v3840, %v4090
        %v4137 = vadd.f32 %v3842, %v4092
        %v4138 = vadd.f32 %v3709, %v3983
        %v4139 = vadd.f32 %v3711, %v3985
        %v4140 = vadd.f32 %v3846, %v4096
        %v4141 = vadd.f32 %v3848, %v4098
        %v4142 = vadd.f32 %v3715, %v3989
        %v4143 = vadd.f32 %v3717, %v3991
        %v4144 = vadd.f32 %v3852, %v4102
        %v4145 = vadd.f32 %v3854, %v4104
        %v4146 = vxor.u32 %v4130, 2147483648
        %v4147 = vxor.u32 %v4131, 2147483648
        %v4148 = vxor.u32 %v4132, 2147483648
        %v4149 = vxor.u32 %v4133, 2147483648
        %v4150 = vxor.u32 %v4134, 2147483648
        %v4151 = vxor.u32 %v4135, 2147483648
        %v4152 = vxor.u32 %v4136, 2147483648
        %v4153 = vxor.u32 %v4137, 2147483648
        %v4154 = vxor.u32 %v4138, 2147483648
        %v4155 = vxor.u32 %v4139, 2147483648
        %v4156 = vxor.u32 %v4140, 2147483648
        %v4157 = vxor.u32 %v4141, 2147483648
        %v4158 = vxor.u32 %v4142, 2147483648
        %v4159 = vxor.u32 %v4143, 2147483648
        %v4160 = vxor.u32 %v4144, 2147483648
        %v4161 = vxor.u32 %v4145, 2147483648
        %v4162 = vmul.f32 %v4146, 1.442695
        %v4163 = vpow.pop %v4162
        %v4164 = vmul.f32 %v4147, 1.442695
        %v4165 = vpow.pop %v4164
        %v4166 = vmul.f32 %v4148, 1.442695
        %v4167 = vpow.pop %v4166
        %v4168 = vmul.f32 %v4149, 1.442695
        %v4169 = vpow.pop %v4168
        %v4170 = vmul.f32 %v4150, 1.442695
        %v4171 = vpow.pop %v4170
        %v4172 = vmul.f32 %v4151, 1.442695
        %v4173 = vpow.pop %v4172
        %v4174 = vmul.f32 %v4152, 1.442695
        %v4175 = vpow.pop %v4174
        %v4176 = vmul.f32 %v4153, 1.442695
        %v4177 = vpow.pop %v4176
        %v4178 = vmul.f32 %v4154, 1.442695
        %v4179 = vpow.pop %v4178
        %v4180 = vmul.f32 %v4155, 1.442695
        %v4181 = vpow.pop %v4180
        %v4182 = vmul.f32 %v4156, 1.442695
        %v4183 = vpow.pop %v4182
        %v4184 = vmul.f32 %v4157, 1.442695
        %v4185 = vpow.pop %v4184
        %v4186 = vmul.f32 %v4158, 1.442695
        %v4187 = vpow.pop %v4186
        %v4188 = vmul.f32 %v4159, 1.442695
        %v4189 = vpow.pop %v4188
        %v4190 = vmul.f32 %v4160, 1.442695
        %v4191 = vpow.pop %v4190
        %v4192 = vmul.f32 %v4161, 1.442695
        %v4193 = vpow.pop %v4192
        %v4194 = vadd.f32 %v4163, 1.0
        %v4195 = vadd.f32 %v4165, 1.0
        %v4196 = vadd.f32 %v4167, 1.0
        %v4197 = vadd.f32 %v4169, 1.0
        %v4198 = vadd.f32 %v4171, 1.0
        %v4199 = vadd.f32 %v4173, 1.0
        %v4200 = vadd.f32 %v4175, 1.0
        %v4201 = vadd.f32 %v4177, 1.0
        %v4202 = vadd.f32 %v4179, 1.0
        %v4203 = vadd.f32 %v4181, 1.0
        %v4204 = vadd.f32 %v4183, 1.0
        %v4205 = vadd.f32 %v4185, 1.0
        %v4206 = vadd.f32 %v4187, 1.0
        %v4207 = vadd.f32 %v4189, 1.0
        %v4208 = vadd.f32 %v4191, 1.0
        %v4209 = vadd.f32 %v4193, 1.0
        %v4210 = vrcp.pop %v4194
        %v4211 = vmul.f32 1.0, %v4210
        %v4212 = vrcp.pop %v4195
        %v4213 = vmul.f32 1.0, %v4212
        %v4214 = vrcp.pop %v4196
        %v4215 = vmul.f32 1.0, %v4214
        %v4216 = vrcp.pop %v4197
        %v4217 = vmul.f32 1.0, %v4216
        %v4218 = vrcp.pop %v4198
        %v4219 = vmul.f32 1.0, %v4218
        %v4220 = vrcp.pop %v4199
        %v4221 = vmul.f32 1.0, %v4220
        %v4222 = vrcp.pop %v4200
        %v4223 = vmul.f32 1.0, %v4222
        %v4224 = vrcp.pop %v4201
        %v4225 = vmul.f32 1.0, %v4224
        %v4226 = vrcp.pop %v4202
        %v4227 = vmul.f32 1.0, %v4226
        %v4228 = vrcp.pop %v4203
        %v4229 = vmul.f32 1.0, %v4228
        %v4230 = vrcp.pop %v4204
        %v4231 = vmul.f32 1.0, %v4230
        %v4232 = vrcp.pop %v4205
        %v4233 = vmul.f32 1.0, %v4232
        %v4234 = vrcp.pop %v4206
        %v4235 = vmul.f32 1.0, %v4234
        %v4236 = vrcp.pop %v4207
        %v4237 = vmul.f32 1.0, %v4236
        %v4238 = vrcp.pop %v4208
        %v4239 = vmul.f32 1.0, %v4238
        %v4240 = vrcp.pop %v4209
        %v4241 = vmul.f32 1.0, %v4240
        %v4242 = vadd.f32 %v3721, %v3995
        %v4243 = vadd.f32 %v3723, %v3997
        %v4244 = vadd.f32 %v3858, %v4108
        %v4245 = vadd.f32 %v3860, %v4110
        %v4246 = vadd.f32 %v3727, %v4001
        %v4247 = vadd.f32 %v3729, %v4003
        %v4248 = vadd.f32 %v3864, %v4114
        %v4249 = vadd.f32 %v3866, %v4116
        %v4250 = vadd.f32 %v3733, %v4007
        %v4251 = vadd.f32 %v3735, %v4009
        %v4252 = vadd.f32 %v3870, %v4120
        %v4253 = vadd.f32 %v3872, %v4122
        %v4254 = vadd.f32 %v3739, %v4013
        %v4255 = vadd.f32 %v3741, %v4015
        %v4256 = vadd.f32 %v3876, %v4126
        %v4257 = vadd.f32 %v3878, %v4128
        %v4258 = vxor.u32 %v4242, 2147483648
        %v4259 = vxor.u32 %v4243, 2147483648
        %v4260 = vxor.u32 %v4244, 2147483648
        %v4261 = vxor.u32 %v4245, 2147483648
        %v4262 = vxor.u32 %v4246, 2147483648
        %v4263 = vxor.u32 %v4247, 2147483648
        %v4264 = vxor.u32 %v4248, 2147483648
        %v4265 = vxor.u32 %v4249, 2147483648
        %v4266 = vxor.u32 %v4250, 2147483648
        %v4267 = vxor.u32 %v4251, 2147483648
        %v4268 = vxor.u32 %v4252, 2147483648
        %v4269 = vxor.u32 %v4253, 2147483648
        %v4270 = vxor.u32 %v4254, 2147483648
        %v4271 = vxor.u32 %v4255, 2147483648
        %v4272 = vxor.u32 %v4256, 2147483648
        %v4273 = vxor.u32 %v4257, 2147483648
        %v4274 = vmul.f32 %v4258, 1.442695
        %v4275 = vpow.pop %v4274
        %v4276 = vmul.f32 %v4259, 1.442695
        %v4277 = vpow.pop %v4276
        %v4278 = vmul.f32 %v4260, 1.442695
        %v4279 = vpow.pop %v4278
        %v4280 = vmul.f32 %v4261, 1.442695
        %v4281 = vpow.pop %v4280
        %v4282 = vmul.f32 %v4262, 1.442695
        %v4283 = vpow.pop %v4282
        %v4284 = vmul.f32 %v4263, 1.442695
        %v4285 = vpow.pop %v4284
        %v4286 = vmul.f32 %v4264, 1.442695
        %v4287 = vpow.pop %v4286
        %v4288 = vmul.f32 %v4265, 1.442695
        %v4289 = vpow.pop %v4288
        %v4290 = vmul.f32 %v4266, 1.442695
        %v4291 = vpow.pop %v4290
        %v4292 = vmul.f32 %v4267, 1.442695
        %v4293 = vpow.pop %v4292
        %v4294 = vmul.f32 %v4268, 1.442695
        %v4295 = vpow.pop %v4294
        %v4296 = vmul.f32 %v4269, 1.442695
        %v4297 = vpow.pop %v4296
        %v4298 = vmul.f32 %v4270, 1.442695
        %v4299 = vpow.pop %v4298
        %v4300 = vmul.f32 %v4271, 1.442695
        %v4301 = vpow.pop %v4300
        %v4302 = vmul.f32 %v4272, 1.442695
        %v4303 = vpow.pop %v4302
        %v4304 = vmul.f32 %v4273, 1.442695
        %v4305 = vpow.pop %v4304
        %v4306 = vadd.f32 %v4275, 1.0
        %v4307 = vadd.f32 %v4277, 1.0
        %v4308 = vadd.f32 %v4279, 1.0
        %v4309 = vadd.f32 %v4281, 1.0
        %v4310 = vadd.f32 %v4283, 1.0
        %v4311 = vadd.f32 %v4285, 1.0
        %v4312 = vadd.f32 %v4287, 1.0
        %v4313 = vadd.f32 %v4289, 1.0
        %v4314 = vadd.f32 %v4291, 1.0
        %v4315 = vadd.f32 %v4293, 1.0
        %v4316 = vadd.f32 %v4295, 1.0
        %v4317 = vadd.f32 %v4297, 1.0
        %v4318 = vadd.f32 %v4299, 1.0
        %v4319 = vadd.f32 %v4301, 1.0
        %v4320 = vadd.f32 %v4303, 1.0
        %v4321 = vadd.f32 %v4305, 1.0
        %v4322 = vrcp.pop %v4306
        %v4323 = vmul.f32 1.0, %v4322
        %v4324 = vrcp.pop %v4307
        %v4325 = vmul.f32 1.0, %v4324
        %v4326 = vrcp.pop %v4308
        %v4327 = vmul.f32 1.0, %v4326
        %v4328 = vrcp.pop %v4309
        %v4329 = vmul.f32 1.0, %v4328
        %v4330 = vrcp.pop %v4310
        %v4331 = vmul.f32 1.0, %v4330
        %v4332 = vrcp.pop %v4311
        %v4333 = vmul.f32 1.0, %v4332
        %v4334 = vrcp.pop %v4312
        %v4335 = vmul.f32 1.0, %v4334
        %v4336 = vrcp.pop %v4313
        %v4337 = vmul.f32 1.0, %v4336
        %v4338 = vrcp.pop %v4314
        %v4339 = vmul.f32 1.0, %v4338
        %v4340 = vrcp.pop %v4315
        %v4341 = vmul.f32 1.0, %v4340
        %v4342 = vrcp.pop %v4316
        %v4343 = vmul.f32 1.0, %v4342
        %v4344 = vrcp.pop %v4317
        %v4345 = vmul.f32 1.0, %v4344
        %v4346 = vrcp.pop %v4318
        %v4347 = vmul.f32 1.0, %v4346
        %v4348 = vrcp.pop %v4319
        %v4349 = vmul.f32 1.0, %v4348
        %v4350 = vrcp.pop %v4320
        %v4351 = vmul.f32 1.0, %v4350
        %v4352 = vrcp.pop %v4321
        %v4353 = vmul.f32 1.0, %v4352
        %v4354 = vmul.f32 %v4323, %v3580
        %v4355 = vmul.f32 %v4325, %v3581
        %v4356 = vmul.f32 %v4327, %v3582
        %v4357 = vmul.f32 %v4329, %v3583
        %v4358 = vmul.f32 %v4331, %v3584
        %v4359 = vmul.f32 %v4333, %v3585
        %v4360 = vmul.f32 %v4335, %v3586
        %v4361 = vmul.f32 %v4337, %v3587
        %v4362 = vmul.f32 %v4339, %v3588
        %v4363 = vmul.f32 %v4341, %v3589
        %v4364 = vmul.f32 %v4343, %v3590
        %v4365 = vmul.f32 %v4345, %v3591
        %v4366 = vmul.f32 %v4347, %v3592
        %v4367 = vmul.f32 %v4349, %v3593
        %v4368 = vmul.f32 %v4351, %v3594
        %v4369 = vmul.f32 %v4353, %v3595
        %4370 = vmatprep.subr.mxu0 %v4355
        %4371 = vmatpush1.msra.mxu0 %v4354
        %4372 = vmatprep.subr.mxu0 %v4359
        %4373 = vmatpush1.msra.mxu0 %v4358
        %4374 = vmatprep.subr.mxu0 %v4363
        %4375 = vmatpush1.msra.mxu0 %v4362
        %4376 = vmatprep.subr.mxu0 %v4367
        %4377 = vmatpush1.msra.mxu0 %v4366
        %4378 = vmatprep.subr.mxu0 0.0
        %4379 = vmatpush1.msra.mxu0 0.0
        %4380 = vmatprep.subr.mxu0 0.0
        %4381 = vmatpush1.msra.mxu0 0.0
        %4382 = vmatprep.subr.mxu0 0.0
        %4383 = vmatpush1.msra.mxu0 0.0
        %4384 = vmatprep.subr.mxu0 0.0
        %4385 = vmatpush1.msra.mxu0 0.0
        %4386 = vmatprep.subr.mxu0 0.0
        %4387 = vmatpush1.msra.mxu0 0.0
        %4388 = vmatprep.subr.mxu0 0.0
        %4389 = vmatpush1.msra.mxu0 0.0
        %4390 = vmatprep.subr.mxu0 0.0
        %4391 = vmatpush1.msra.mxu0 0.0
        %4392 = vmatprep.subr.mxu0 0.0
        %4393 = vmatpush1.msra.mxu0 0.0
        %4394 = vmatprep.subr.mxu0 0.0
        %4395 = vmatpush1.msra.mxu0 0.0
        %4396 = vmatprep.subr.mxu0 0.0
        %4397 = vmatpush1.msra.mxu0 0.0
        %4398 = vmatprep.subr.mxu0 0.0
        %4399 = vmatpush1.msra.mxu0 0.0
        %4400 = vmatprep.subr.mxu0 0.0
        %4401 = vmatpush1.msra.mxu0 0.0
        %4402 = vmatprep.subr.mxu0 0.0
        %4403 = vmatpush1.msra.mxu0 0.0
        %4404 = vmatprep.subr.mxu0 0.0
        %4405 = vmatpush1.msra.mxu0 0.0
        %4406 = vmatprep.subr.mxu0 0.0
        %4407 = vmatpush1.msra.mxu0 0.0
        %4408 = vmatprep.subr.mxu0 0.0
        %4409 = vmatpush1.msra.mxu0 0.0
        %4410 = vmatprep.subr.mxu0 0.0
        %4411 = vmatpush1.msra.mxu0 0.0
        %4412 = vmatprep.subr.mxu0 0.0
        %4413 = vmatpush1.msra.mxu0 0.0
        %4414 = vmatprep.subr.mxu0 0.0
        %4415 = vmatpush1.msra.mxu0 0.0
        %4416 = vmatprep.subr.mxu0 0.0
        %4417 = vmatpush1.msra.mxu0 0.0
        %4418 = vmatprep.subr.mxu0 0.0
        %4419 = vmatpush1.msra.mxu0 0.0
        %4420 = vmatprep.subr.mxu0 0.0
        %4421 = vmatpush1.msra.mxu0 0.0
        %4422 = vmatprep.subr.mxu0 0.0
        %4423 = vmatpush1.msra.mxu0 0.0
        %4424 = vmatprep.subr.mxu0 0.0
        %4425 = vmatpush1.msra.mxu0 0.0
        %4426 = vmatprep.subr.mxu0 0.0
        %4427 = vmatpush1.msra.mxu0 0.0
        %4428 = vmatprep.subr.mxu0 0.0
        %4429 = vmatpush1.msra.mxu0 0.0
        %4430 = vmatprep.subr.mxu0 0.0
        %4431 = vmatpush1.msra.mxu0 0.0
        %4432 = vmatprep.subr.mxu0 0.0
        %4433 = vmatpush1.msra.mxu0 0.0
        %4434 = vmatprep.mubr.f32.mxu0 0.0
        %4435 = vmatmul.mubr.f32.gmra.mrb[0].mxu0 %v1216
        %v4436 = vpop.f32.mrb[0].mxu0
        %v4437 = vadd.f32 0.0, %v4436
        %v4438 = vpop.f32.mrb[0].mxu0
        %v4439 = vadd.f32 0.0, %v4438
        %4440 = vmatprep.mubr.f32.mxu0 0.0
        %4441 = vmatmul.mubr.f32.gmra.mrb[0].mxu0 %v1219
        %v4442 = vpop.f32.mrb[0].mxu0
        %v4443 = vadd.f32 0.0, %v4442
        %v4444 = vpop.f32.mrb[0].mxu0
        %v4445 = vadd.f32 0.0, %v4444
        %4446 = vmatprep.mubr.f32.mxu0 0.0
        %4447 = vmatmul.mubr.f32.gmra.mrb[0].mxu0 %v1222
        %v4448 = vpop.f32.mrb[0].mxu0
        %v4449 = vadd.f32 0.0, %v4448
        %v4450 = vpop.f32.mrb[0].mxu0
        %v4451 = vadd.f32 0.0, %v4450
        %4452 = vmatprep.mubr.f32.mxu0 0.0
        %4453 = vmatmul.mubr.f32.gmra.mrb[0].mxu0 %v1225
        %v4454 = vpop.f32.mrb[0].mxu0
        %v4455 = vadd.f32 0.0, %v4454
        %v4456 = vpop.f32.mrb[0].mxu0
        %v4457 = vadd.f32 0.0, %v4456
        %4458 = vdwg.mxu0
        %4459 = vmatprep.subr.mxu0 %v4357
        %4460 = vmatpush1.msra.mxu0 %v4356
        %4461 = vmatprep.subr.mxu0 %v4361
        %4462 = vmatpush1.msra.mxu0 %v4360
        %4463 = vmatprep.subr.mxu0 %v4365
        %4464 = vmatpush1.msra.mxu0 %v4364
        %4465 = vmatprep.subr.mxu0 %v4369
        %4466 = vmatpush1.msra.mxu0 %v4368
        %4467 = vmatprep.subr.mxu0 0.0
        %4468 = vmatpush1.msra.mxu0 0.0
        %4469 = vmatprep.subr.mxu0 0.0
        %4470 = vmatpush1.msra.mxu0 0.0
        %4471 = vmatprep.subr.mxu0 0.0
        %4472 = vmatpush1.msra.mxu0 0.0
        %4473 = vmatprep.subr.mxu0 0.0
        %4474 = vmatpush1.msra.mxu0 0.0
        %4475 = vmatprep.subr.mxu0 0.0
        %4476 = vmatpush1.msra.mxu0 0.0
        %4477 = vmatprep.subr.mxu0 0.0
        %4478 = vmatpush1.msra.mxu0 0.0
        %4479 = vmatprep.subr.mxu0 0.0
        %4480 = vmatpush1.msra.mxu0 0.0
        %4481 = vmatprep.subr.mxu0 0.0
        %4482 = vmatpush1.msra.mxu0 0.0
        %4483 = vmatprep.subr.mxu0 0.0
        %4484 = vmatpush1.msra.mxu0 0.0
        %4485 = vmatprep.subr.mxu0 0.0
        %4486 = vmatpush1.msra.mxu0 0.0
        %4487 = vmatprep.subr.mxu0 0.0
        %4488 = vmatpush1.msra.mxu0 0.0
        %4489 = vmatprep.subr.mxu0 0.0
        %4490 = vmatpush1.msra.mxu0 0.0
        %4491 = vmatprep.subr.mxu0 0.0
        %4492 = vmatpush1.msra.mxu0 0.0
        %4493 = vmatprep.subr.mxu0 0.0
        %4494 = vmatpush1.msra.mxu0 0.0
        %4495 = vmatprep.subr.mxu0 0.0
        %4496 = vmatpush1.msra.mxu0 0.0
        %4497 = vmatprep.subr.mxu0 0.0
        %4498 = vmatpush1.msra.mxu0 0.0
        %4499 = vmatprep.subr.mxu0 0.0
        %4500 = vmatpush1.msra.mxu0 0.0
        %4501 = vmatprep.subr.mxu0 0.0
        %4502 = vmatpush1.msra.mxu0 0.0
        %4503 = vmatprep.subr.mxu0 0.0
        %4504 = vmatpush1.msra.mxu0 0.0
        %4505 = vmatprep.subr.mxu0 0.0
        %4506 = vmatpush1.msra.mxu0 0.0
        %4507 = vmatprep.subr.mxu0 0.0
        %4508 = vmatpush1.msra.mxu0 0.0
        %4509 = vmatprep.subr.mxu0 0.0
        %4510 = vmatpush1.msra.mxu0 0.0
        %4511 = vmatprep.subr.mxu0 0.0
        %4512 = vmatpush1.msra.mxu0 0.0
        %4513 = vmatprep.subr.mxu0 0.0
        %4514 = vmatpush1.msra.mxu0 0.0
        %4515 = vmatprep.subr.mxu0 0.0
        %4516 = vmatpush1.msra.mxu0 0.0
        %4517 = vmatprep.subr.mxu0 0.0
        %4518 = vmatpush1.msra.mxu0 0.0
        %4519 = vmatprep.subr.mxu0 0.0
        %4520 = vmatpush1.msra.mxu0 0.0
        %4521 = vmatprep.subr.mxu0 0.0
        %4522 = vmatpush1.msra.mxu0 0.0
        %4523 = vmatprep.mubr.f32.mxu0 0.0
        %4524 = vmatmul.mubr.f32.gmra.mrb[0].mxu0 %v1216
        %v4525 = vpop.f32.mrb[0].mxu0
        %v4526 = vadd.f32 0.0, %v4525
        %v4527 = vpop.f32.mrb[0].mxu0
        %v4528 = vadd.f32 0.0, %v4527
        %4529 = vmatprep.mubr.f32.mxu0 0.0
        %4530 = vmatmul.mubr.f32.gmra.mrb[0].mxu0 %v1219
        %v4531 = vpop.f32.mrb[0].mxu0
        %v4532 = vadd.f32 0.0, %v4531
        %v4533 = vpop.f32.mrb[0].mxu0
        %v4534 = vadd.f32 0.0, %v4533
        %4535 = vmatprep.mubr.f32.mxu0 0.0
        %4536 = vmatmul.mubr.f32.gmra.mrb[0].mxu0 %v1222
        %v4537 = vpop.f32.mrb[0].mxu0
        %v4538 = vadd.f32 0.0, %v4537
        %v4539 = vpop.f32.mrb[0].mxu0
        %v4540 = vadd.f32 0.0, %v4539
        %4541 = vmatprep.mubr.f32.mxu0 0.0
        %4542 = vmatmul.mubr.f32.gmra.mrb[0].mxu0 %v1225
        %v4543 = vpop.f32.mrb[0].mxu0
        %v4544 = vadd.f32 0.0, %v4543
        %v4545 = vpop.f32.mrb[0].mxu0
        %v4546 = vadd.f32 0.0, %v4545
        %4547 = vdwg.mxu0
        %v4548 = vsub.f32 1.0, %v4211
        %v4549 = vsub.f32 1.0, %v4213
        %v4550 = vsub.f32 1.0, %v4215
        %v4551 = vsub.f32 1.0, %v4217
        %v4552 = vsub.f32 1.0, %v4219
        %v4553 = vsub.f32 1.0, %v4221
        %v4554 = vsub.f32 1.0, %v4223
        %v4555 = vsub.f32 1.0, %v4225
        %v4556 = vsub.f32 1.0, %v4227
        %v4557 = vsub.f32 1.0, %v4229
        %v4558 = vsub.f32 1.0, %v4231
        %v4559 = vsub.f32 1.0, %v4233
        %v4560 = vsub.f32 1.0, %v4235
        %v4561 = vsub.f32 1.0, %v4237
        %v4562 = vsub.f32 1.0, %v4239
        %v4563 = vsub.f32 1.0, %v4241
        %v4564 = vmul.f32 %v4548, %v3580
        %v4565 = vmul.f32 %v4549, %v3581
        %v4566 = vmul.f32 %v4550, %v3582
        %v4567 = vmul.f32 %v4551, %v3583
        %v4568 = vmul.f32 %v4552, %v3584
        %v4569 = vmul.f32 %v4553, %v3585
        %v4570 = vmul.f32 %v4554, %v3586
        %v4571 = vmul.f32 %v4555, %v3587
        %v4572 = vmul.f32 %v4556, %v3588
        %v4573 = vmul.f32 %v4557, %v3589
        %v4574 = vmul.f32 %v4558, %v3590
        %v4575 = vmul.f32 %v4559, %v3591
        %v4576 = vmul.f32 %v4560, %v3592
        %v4577 = vmul.f32 %v4561, %v3593
        %v4578 = vmul.f32 %v4562, %v3594
        %v4579 = vmul.f32 %v4563, %v3595
        %v4580 = vadd.f32 %v3745, %v4437
        %v4581 = vadd.f32 %v3747, %v4439
        %v4582 = vadd.f32 %v3882, %v4526
        %v4583 = vadd.f32 %v3884, %v4528
        %v4584 = vadd.f32 %v3751, %v4443
        %v4585 = vadd.f32 %v3753, %v4445
        %v4586 = vadd.f32 %v3888, %v4532
        %v4587 = vadd.f32 %v3890, %v4534
        %v4588 = vadd.f32 %v3757, %v4449
        %v4589 = vadd.f32 %v3759, %v4451
        %v4590 = vadd.f32 %v3894, %v4538
        %v4591 = vadd.f32 %v3896, %v4540
        %v4592 = vadd.f32 %v3763, %v4455
        %v4593 = vadd.f32 %v3765, %v4457
        %v4594 = vadd.f32 %v3900, %v4544
        %v4595 = vadd.f32 %v3902, %v4546
        %v4596 = vtanh.pop %v4580
        %v4597 = vtanh.pop %v4581
        %v4598 = vtanh.pop %v4582
        %v4599 = vtanh.pop %v4583
        %v4600 = vtanh.pop %v4584
        %v4601 = vtanh.pop %v4585
        %v4602 = vtanh.pop %v4586
        %v4603 = vtanh.pop %v4587
        %v4604 = vtanh.pop %v4588
        %v4605 = vtanh.pop %v4589
        %v4606 = vtanh.pop %v4590
        %v4607 = vtanh.pop %v4591
        %v4608 = vtanh.pop %v4592
        %v4609 = vtanh.pop %v4593
        %v4610 = vtanh.pop %v4594
        %v4611 = vtanh.pop %v4595
        %v4612 = vmul.f32 %v4211, %v4596
        %v4613 = vmul.f32 %v4213, %v4597
        %v4614 = vmul.f32 %v4215, %v4598
        %v4615 = vmul.f32 %v4217, %v4599
        %v4616 = vmul.f32 %v4219, %v4600
        %v4617 = vmul.f32 %v4221, %v4601
        %v4618 = vmul.f32 %v4223, %v4602
        %v4619 = vmul.f32 %v4225, %v4603
        %v4620 = vmul.f32 %v4227, %v4604
        %v4621 = vmul.f32 %v4229, %v4605
        %v4622 = vmul.f32 %v4231, %v4606
        %v4623 = vmul.f32 %v4233, %v4607
        %v4624 = vmul.f32 %v4235, %v4608
        %v4625 = vmul.f32 %v4237, %v4609
        %v4626 = vmul.f32 %v4239, %v4610
        %v4627 = vmul.f32 %v4241, %v4611
        %v4628 = vadd.f32 %v4564, %v4612
        %v4629 = vadd.f32 %v4565, %v4613
        %v4630 = vadd.f32 %v4566, %v4614
        %v4631 = vadd.f32 %v4567, %v4615
        %v4632 = vadd.f32 %v4568, %v4616
        %v4633 = vadd.f32 %v4569, %v4617
        %v4634 = vadd.f32 %v4570, %v4618
        %v4635 = vadd.f32 %v4571, %v4619
        %v4636 = vadd.f32 %v4572, %v4620
        %v4637 = vadd.f32 %v4573, %v4621
        %v4638 = vadd.f32 %v4574, %v4622
        %v4639 = vadd.f32 %v4575, %v4623
        %v4640 = vadd.f32 %v4576, %v4624
        %v4641 = vadd.f32 %v4577, %v4625
        %v4642 = vadd.f32 %v4578, %v4626
        %v4643 = vadd.f32 %v4579, %v4627
        %s4644 = scalar_lea.vmem %s261, 384 [#allocation6]
        %4645 = vst [vmem:[%s4644] sm:$0xff] %v4628
        %4646 = vst [vmem:[%s4644 + $0x8] sm:$0xff] %v4629
        %4647 = vst [vmem:[%s4644 + $0x10] sm:$0xff] %v4630
        %4648 = vst [vmem:[%s4644 + $0x18] sm:$0xff] %v4631
        %4649 = vst [vmem:[%s4644 + $0x20] sm:$0xff] %v4632
        %4650 = vst [vmem:[%s4644 + $0x28] sm:$0xff] %v4633
        %4651 = vst [vmem:[%s4644 + $0x30] sm:$0xff] %v4634
        %4652 = vst [vmem:[%s4644 + $0x38] sm:$0xff] %v4635
        %4653 = vst [vmem:[%s4644 + $0x40] sm:$0xff] %v4636
        %4654 = vst [vmem:[%s4644 + $0x48] sm:$0xff] %v4637
        %4655 = vst [vmem:[%s4644 + $0x50] sm:$0xff] %v4638
        %4656 = vst [vmem:[%s4644 + $0x58] sm:$0xff] %v4639
        %4657 = vst [vmem:[%s4644 + $0x60] sm:$0xff] %v4640
        %4658 = vst [vmem:[%s4644 + $0x68] sm:$0xff] %v4641
        %4659 = vst [vmem:[%s4644 + $0x70] sm:$0xff] %v4642
        %4660 = vst [vmem:[%s4644 + $0x78] sm:$0xff] %v4643
        %4661 = vst [vmem:[#allocation2] sm:$0xff] %v4628
        %4662 = vst [vmem:[#allocation2 + $0x8] sm:$0xff] %v4629
        %4663 = vst [vmem:[#allocation2 + $0x10] sm:$0xff] %v4630
        %4664 = vst [vmem:[#allocation2 + $0x18] sm:$0xff] %v4631
        %4665 = vst [vmem:[#allocation2 + $0x20] sm:$0xff] %v4632
        %4666 = vst [vmem:[#allocation2 + $0x28] sm:$0xff] %v4633
        %4667 = vst [vmem:[#allocation2 + $0x30] sm:$0xff] %v4634
        %4668 = vst [vmem:[#allocation2 + $0x38] sm:$0xff] %v4635
        %4669 = vst [vmem:[#allocation2 + $0x40] sm:$0xff] %v4636
        %4670 = vst [vmem:[#allocation2 + $0x48] sm:$0xff] %v4637
        %4671 = vst [vmem:[#allocation2 + $0x50] sm:$0xff] %v4638
        %4672 = vst [vmem:[#allocation2 + $0x58] sm:$0xff] %v4639
        %4673 = vst [vmem:[#allocation2 + $0x60] sm:$0xff] %v4640
        %4674 = vst [vmem:[#allocation2 + $0x68] sm:$0xff] %v4641
        %4675 = vst [vmem:[#allocation2 + $0x70] sm:$0xff] %v4642
        %4676 = vst [vmem:[#allocation2 + $0x78] sm:$0xff] %v4643
        %s4677 = sand.u32 %s156, 1
        %s4678 = scalar_lea.sflag [#allocation5], %s4677
        %s4679 = sand.u32 %s156, 1
        %s4680 = smul.addr %s4679, 512
        %s4681 = scalar_lea.vmem [#allocation6], %s4680
        // Predicated region
        $region49: #{tpu_custom_call.1} parent=39 // pred_check
          %p4682 = pneg %p166
        $region50: #{tpu_custom_call.1} parent=39 // pred_check_branch
          %4684 = sbr.rel (%p4682) target = $region52
        $region51: #{tpu_custom_call.1} parent=39 // pred_region
          %s4685 = smul.u32 4, %s27
          %s4686 = smul.u32 4, %s26
          %s4688 = ssub.s32 8192, 8192
          %4689 = vsyncadd %s4678, %s4688
          %s4690 = smul.addr %s4685, 32
          %s4691 = sadd.s32 %s4686, %s4690
          %s4692 = smul.addr %s4691, 128
          %s4693 = scalar_lea.hbm %s5, %s4692
          %s4694 = sshll.u32 %s4681, 4
          %s4695 = int_to_ptr.vmem [resolvable:$true] %s4694
          %4700 = dma.vmem_to_hbm [thread:$0]  %s4695, 8192, %s4693, %s4678, 512, 1024, 32
        $region52: #{tpu_custom_call.1} parent=39 // pred_fallthru
          _
      $region40: #{tpu_custom_call.1} parent=5 // pred_fallthru
        _
      %p4701 = scmp.le.s32.totalorder 2, %s17
      // Predicated region
      $region53: #{tpu_custom_call.1} parent=5 // pred_check
        %p4702 = pneg %p4701
      $region54: #{tpu_custom_call.1} parent=5 // pred_check_branch
        %4704 = sbr.rel (%p4702) target = $region56
      $region55: #{tpu_custom_call.1} parent=5 // pred_region
        %s4705 = ssub.s32 %s17, 2
        // Predicated region
        $region57: #{tpu_custom_call.1} parent=55 // pred_check
          %p4706 = pneg %p172
        $region58: #{tpu_custom_call.1} parent=55 // pred_check_branch
          %4708 = sbr.rel (%p4706) target = $region60
        $region59: #{tpu_custom_call.1} parent=55 // pred_region
          %s4709 = sand.u32 %s157, 1
          %s4710 = scalar_lea.sflag [#allocation5], %s4709
          %s4711 = sand.u32 %s157, 1
          %s4712 = smul.addr %s4711, 512
          %s4713 = scalar_lea.vmem [#allocation6], %s4712
          %4714 = dma.done %s4710, 8192
        $region60: #{tpu_custom_call.1} parent=55 // pred_fallthru
          _
      $region56: #{tpu_custom_call.1} parent=5 // pred_fallthru
        _
    $region6: #{tpu_custom_call.1} parent=1 // loop_footer
      %s21 = sadd.s32 1, %s17
    $region7: #{tpu_custom_call.1} parent=1 // loop_footer_branch
      %16 = sbr.rel target = $region3
    $region8: #{tpu_custom_call.1} parent=1 // loop_exit
      _
    %4715 = vsyncpa [#allocation4], 1
    %s4716 = scalar_lea.sflag [#allocation4], 1
    %4717 = vsyncpa %s4716, 1
    %4718 = vsyncpa [#allocation5], 1
    %s4719 = scalar_lea.sflag [#allocation5], 1
    %4720 = vsyncpa %s4719, 1

</llo_original>
